<compile_context>
chip_gen: v7x
topology: tpu7x:2x2x1
jax: 0.10.0
libtpu: 0.0.40
codegen_flags: <defaults>
</compile_context>

<pallas_src>
import functools

import jax
import jax.numpy as jnp
from jax.experimental import pallas as pl
from jax.experimental.pallas import tpu as pltpu

# ------------------------- model hyper-parameters ---------------------------
K = 32              # embedding dimension
HEADS = 4           # number of attention heads
NUM_LAYERS = 2      # transformer blocks
T = 8               # sequence length
B = 2               # batch size
NUM_OUTPUTS = 10    # output dimension
INPUT_LENGTH = 40   # max position-embedding length
OUT_PAD = 128       # lane-dense padding of the output projection
LN_EPS = 1e-5       # torch.nn.LayerNorm default eps

_VMEM_SPEC = pl.BlockSpec(memory_space=pltpu.MemorySpace.VMEM)


# ------------------------------ shared math ----------------------------------
def _layernorm(x, gamma, beta):
    mu = jnp.mean(x, axis=-1, keepdims=True)
    xc = x - mu
    var = jnp.mean(xc * xc, axis=-1, keepdims=True)
    inv = jax.lax.rsqrt(var + LN_EPS)
    return xc * inv * gamma + beta


# --------------------------------- kernel ------------------------------------
def fused_transformer_kernel(heads, num_layers,
                             x_ref, pos_ref, wqkv_ref, wu_ref, bu_ref,
                             g1_ref, be1_ref, w1_ref, bf1_ref,
                             w2_ref, bf2_ref, g2_ref, be2_ref,
                             wo_ref, bo_ref, o_ref):
    """Full forward: pos-add -> num_layers x TransformerBlock -> mean -> Linear."""
    b, t, k = x_ref.shape
    h = heads
    bt = b * t

    # position-embedding add (broadcast over batch), then flatten rows.
    x = x_ref[...] + pos_ref[...]                      # (B, T, K)
    xf = x.reshape(bt, k)                              # (B*T, K)

    for l in range(num_layers):                        # static unroll (2 layers)
        # ---- QKV projection, heads on a leading batch axis (no lane slicing) ----
        # wqkv_ref[l]: (3H, K, K), rows of xf broadcast to the 3H batch.
        xb = jnp.broadcast_to(xf, (3 * h, bt, k))      # (3H, B*T, K)
        qkv = jnp.einsum('nrk,nko->nro', xb, wqkv_ref[l],
                         preferred_element_type=jnp.float32)   # (3H, B*T, K)

        # leading-axis slices + tile-aligned reshape (B*T=16 splits at sublane 8)
        q = qkv[:h].reshape(h * b, t, k)               # (H*B, T, K)
        kk = qkv[h:2 * h].reshape(h * b, t, k)
        v = qkv[2 * h:].reshape(h * b, t, k)

        # ---- scores / softmax / AV batched over all (head, batch) pairs ----
        # 1/sqrt(K) is already folded into wq (pack_kernel_params).
        s = jnp.einsum('ntd,nsd->nts', q, kk,
                       preferred_element_type=jnp.float32)     # (H*B, T, T)
        e = jnp.exp(s)
        w = e / jnp.sum(e, axis=-1, keepdims=True)
        y = jnp.einsum('nts,nsd->ntd', w, v,
                       preferred_element_type=jnp.float32)     # (H*B, T, K)

        # ---- unify heads: contract over the head axis (no lane concat) ----
        y3 = y.reshape(h, bt, k)                       # (H, B*T, K)
        att = jnp.einsum('hrd,hdo->hro', y3, wu_ref[l],
                         preferred_element_type=jnp.float32)   # (H, B*T, K)
        att = jnp.sum(att, axis=0) + bu_ref[l]         # (B*T, K)

        # ---- residual + LayerNorm 1 ----
        x1 = _layernorm(xf + att, g1_ref[l], be1_ref[l])

        # ---- feed-forward K -> 4K -> K (lane-dense matmuls) ----
        hid = jnp.dot(x1, w1_ref[l], preferred_element_type=jnp.float32) + bf1_ref[l]
        hid = jnp.maximum(hid, 0.0)
        ff = jnp.dot(hid, w2_ref[l], preferred_element_type=jnp.float32) + bf2_ref[l]

        # ---- residual + LayerNorm 2 ----
        xf = _layernorm(x1 + ff, g2_ref[l], be2_ref[l])

    # ---- mean over time + output projection (lane-dense, padded to 128) ----
    xm = jnp.mean(xf.reshape(b, t, k), axis=1)         # (B, K)
    o_ref[...] = jnp.dot(xm, wo_ref[...],
                         preferred_element_type=jnp.float32) + bo_ref[...]


# ------------------------------- parameters -----------------------------------
def init_params(key, k=K, heads=HEADS, num_layers=NUM_LAYERS,
                input_length=INPUT_LENGTH, num_outputs=NUM_OUTPUTS):
    """Deterministic synthetic parameters in the natural (PyTorch-like) layout."""
    hk = heads * k
    params = {}
    key, sub = jax.random.split(key)
    params['pos_emb'] = jax.random.normal(sub, (input_length, k), jnp.float32) * 0.02
    # TODO(synk): input_embedding (nn.Embedding) exists in the module but is never
    # used by Transformer.forward (input is already a float (B,T,K) tensor).

    s_in = 1.0 / (k ** 0.5)
    wq, wk, wv, wu, w1, w2 = [], [], [], [], [], []
    for _ in range(num_layers):
        key, kq, kk_, kv, ku, k1, k2 = jax.random.split(key, 7)
        wq.append(jax.random.normal(kq, (k, hk), jnp.float32) * s_in)
        wk.append(jax.random.normal(kk_, (k, hk), jnp.float32) * s_in)
        wv.append(jax.random.normal(kv, (k, hk), jnp.float32) * s_in)
        wu.append(jax.random.normal(ku, (hk, k), jnp.float32) / (hk ** 0.5))
        w1.append(jax.random.normal(k1, (k, 4 * k), jnp.float32) * s_in)
        w2.append(jax.random.normal(k2, (4 * k, k), jnp.float32) / ((4 * k) ** 0.5))
    params['wq'] = jnp.stack(wq)       # (L, K, H*K)
    params['wk'] = jnp.stack(wk)
    params['wv'] = jnp.stack(wv)
    params['wu'] = jnp.stack(wu)       # (L, H*K, K)
    params['w1'] = jnp.stack(w1)       # (L, K, 4K)
    params['w2'] = jnp.stack(w2)       # (L, 4K, K)

    def vec(shape, scale=0.1, base=0.0):
        nonlocal key
        key, kr = jax.random.split(key)
        return base + scale * jax.random.normal(kr, shape, jnp.float32)

    params['bu'] = vec((num_layers, 1, k))
    params['g1'] = vec((num_layers, 1, k), base=1.0)
    params['be1'] = vec((num_layers, 1, k))
    params['bf1'] = vec((num_layers, 1, 4 * k))
    params['bf2'] = vec((num_layers, 1, k))
    params['g2'] = vec((num_layers, 1, k), base=1.0)
    params['be2'] = vec((num_layers, 1, k))

    key, ko = jax.random.split(key)
    params['w_out'] = jax.random.normal(ko, (k, num_outputs), jnp.float32) / (k ** 0.5)
    params['b_out'] = vec((1, num_outputs))
    return params


def pack_kernel_params(params, heads=HEADS, out_pad=OUT_PAD):
    """One-time host-side repacking into the kernel-friendly layouts."""
    num_layers, k, hk = params['wq'].shape
    num_outputs = params['w_out'].shape[1]
    scale = 1.0 / (k ** 0.5)

    def per_head(w):  # (L, K_in, H*K_out) -> (L, H, K_in, K_out)
        return w.reshape(num_layers, k, heads, k).transpose(0, 2, 1, 3)

    wqkv = jnp.concatenate([per_head(params['wq']) * scale,   # fold attention scale
                            per_head(params['wk']),
                            per_head(params['wv'])], axis=1)  # (L, 3H, K, K)
    wu = params['wu'].reshape(num_layers, heads, k, k)         # (L, H, K, K)

    wo = jnp.zeros((k, out_pad), jnp.float32).at[:, :num_outputs].set(params['w_out'])
    bo = jnp.zeros((1, out_pad), jnp.float32).at[:, :num_outputs].set(params['b_out'])

    return dict(pos_emb=params['pos_emb'], wqkv=wqkv, wu=wu,
                bu=params['bu'], g1=params['g1'], be1=params['be1'],
                w1=params['w1'], bf1=params['bf1'], w2=params['w2'],
                bf2=params['bf2'], g2=params['g2'], be2=params['be2'],
                w_out=wo, b_out=bo)


# -------------------------------- wrapper --------------------------------------
def transformer_forward(packed, x, heads=HEADS, num_outputs=NUM_OUTPUTS):
    """Pallas implementation of Transformer.forward (x is (B,T,K) or (T,K))."""
    should_squeeze = x.ndim == 2
    if should_squeeze:
        x = x[None]
    b, t, k = x.shape
    num_layers = int(packed['wqkv'].shape[0])
    out_pad = int(packed['w_out'].shape[1])
    hk = heads * k

    pos = packed['pos_emb'][:t][None]                  # (1, T, K)
    args = (x, pos, packed['wqkv'], packed['wu'], packed['bu'],
            packed['g1'], packed['be1'], packed['w1'], packed['bf1'],
            packed['w2'], packed['bf2'], packed['g2'], packed['be2'],
            packed['w_out'], packed['b_out'])

    # rough cost hints for XLA scheduling (advisory only)
    bt = b * t
    flops_layer = (2 * 3 * heads * bt * k * k          # QKV projection
                   + 2 * heads * b * t * t * k * 2     # scores + AV
                   + 2 * heads * bt * k * k            # unify_heads
                   + 2 * 2 * bt * k * 4 * k)           # FFN
    flops = num_layers * flops_layer + 2 * b * k * out_pad
    transcendentals = num_layers * (heads * b * t * t + 4 * bt)
    bytes_accessed = sum(int(a.size) * a.dtype.itemsize for a in args) \
        + b * out_pad * 4

    out = pl.pallas_call(
        functools.partial(fused_transformer_kernel, heads, num_layers),
        out_shape=jax.ShapeDtypeStruct((b, out_pad), jnp.float32),
        in_specs=[_VMEM_SPEC] * len(args),
        out_specs=_VMEM_SPEC,
        cost_estimate=pl.CostEstimate(flops=int(flops),
                                      transcendentals=int(transcendentals),
                                      bytes_accessed=int(bytes_accessed)),
    )(*args)

    out = out[:, :num_outputs]
    if should_squeeze:
        out = out[0]
    return out


# --------------------------- pure-JAX reference --------------------------------
def _ref_forward(params, x, heads=HEADS):
    squeeze = x.ndim == 2
    if squeeze:
        x = x[None]
    b, t, k = x.shape
    hk = heads * k
    num_layers = int(params['wq'].shape[0])
    x = x + params['pos_emb'][:t][None]
    for l in range(num_layers):
        q = (x @ params['wq'][l]).reshape(b, t, heads, k).transpose(0, 2, 1, 3)
        kk = (x @ params['wk'][l]).reshape(b, t, heads, k).transpose(0, 2, 1, 3)
        v = (x @ params['wv'][l]).reshape(b, t, heads, k).transpose(0, 2, 1, 3)
        s = jnp.einsum('bhtd,bhsd->bhts', q, kk) / (k ** 0.5)
        w = jax.nn.softmax(s, axis=-1)
        y = jnp.einsum('bhts,bhsd->bhtd', w, v)
        y = y.transpose(0, 2, 1, 3).reshape(b, t, hk)
        att = y @ params['wu'][l] + params['bu'][l]
        x1 = _layernorm(x + att, params['g1'][l], params['be1'][l])
        ff = (jnp.maximum(x1 @ params['w1'][l] + params['bf1'][l], 0.0)
              @ params['w2'][l] + params['bf2'][l])
        x = _layernorm(x1 + ff, params['g2'][l], params['be2'][l])
    out = jnp.mean(x, axis=1) @ params['w_out'] + params['b_out']
    return out[0] if squeeze else out


# ----------------------------------- main --------------------------------------
if __name__ == "__main__":
    key = jax.random.PRNGKey(0)
    key, kx, kp = jax.random.split(key, 3)

    # Transformer.forward never uses input_embedding -- the input is already a
    # (B, T, K) float tensor (or (T, K), which gets unsqueezed).
    x = jax.random.normal(kx, (B, T, K), jnp.float32)
    params = init_params(kp)
    packed = pack_kernel_params(params)          # one-time host-side repacking

    out = jax.block_until_ready(transformer_forward(packed, x))
    ref = _ref_forward(params, x)

    assert out.shape == (B, NUM_OUTPUTS), out.shape
    max_err = float(jnp.max(jnp.abs(out - ref)))
    assert jnp.allclose(out, ref, atol=1e-3, rtol=1e-3), max_err

    print("KERNEL_OK")
</pallas_src>

<mosaic_0001>
module attributes {stable_mosaic.version = 11 : i64} {
  func.func @fused_transformer_kernel(%arg0: memref<2x8x32xf32, #tpu.memory_space<vmem>>, %arg1: memref<1x8x32xf32, #tpu.memory_space<vmem>>, %arg2: memref<2x12x32x32xf32, #tpu.memory_space<vmem>>, %arg3: memref<2x4x32x32xf32, #tpu.memory_space<vmem>>, %arg4: memref<2x1x32xf32, #tpu.memory_space<vmem>>, %arg5: memref<2x1x32xf32, #tpu.memory_space<vmem>>, %arg6: memref<2x1x32xf32, #tpu.memory_space<vmem>>, %arg7: memref<2x32x128xf32, #tpu.memory_space<vmem>>, %arg8: memref<2x1x128xf32, #tpu.memory_space<vmem>>, %arg9: memref<2x128x32xf32, #tpu.memory_space<vmem>>, %arg10: memref<2x1x32xf32, #tpu.memory_space<vmem>>, %arg11: memref<2x1x32xf32, #tpu.memory_space<vmem>>, %arg12: memref<2x1x32xf32, #tpu.memory_space<vmem>>, %arg13: memref<32x128xf32, #tpu.memory_space<vmem>>, %arg14: memref<1x128xf32, #tpu.memory_space<vmem>>, %arg15: memref<2x128xf32, #tpu.memory_space<vmem>>) attributes {dimension_semantics = [], scalar_prefetch = 0 : i64, scratch_operands = 0 : i64, tpu.core_type = #tpu.core_type<tc>} {
    %c0 = arith.constant 0 : index
    %c0_0 = arith.constant 0 : index
    %c0_1 = arith.constant 0 : index
    %0 = vector.load %arg0[%c0, %c0_0, %c0_1] : memref<2x8x32xf32, #tpu.memory_space<vmem>>, vector<2x8x32xf32>
    %c0_2 = arith.constant 0 : index
    %c0_3 = arith.constant 0 : index
    %c0_4 = arith.constant 0 : index
    %1 = vector.load %arg1[%c0_2, %c0_3, %c0_4] : memref<1x8x32xf32, #tpu.memory_space<vmem>>, vector<1x8x32xf32>
    %2 = vector.broadcast %1 : vector<1x8x32xf32> to vector<2x8x32xf32>
    %3 = arith.addf %0, %2 : vector<2x8x32xf32>
    %4 = vector.shape_cast %3 : vector<2x8x32xf32> to vector<16x32xf32>
    %5 = vector.shape_cast %4 : vector<16x32xf32> to vector<1x16x32xf32>
    %6 = vector.broadcast %5 : vector<1x16x32xf32> to vector<12x16x32xf32>
    %c0_5 = arith.constant 0 : index
    %c0_6 = arith.constant 0 : index
    %c0_7 = arith.constant 0 : index
    %c0_8 = arith.constant 0 : index
    %7 = vector.load %arg2[%c0_5, %c0_6, %c0_7, %c0_8] : memref<2x12x32x32xf32, #tpu.memory_space<vmem>>, vector<1x12x32x32xf32>
    %8 = vector.shape_cast %7 : vector<1x12x32x32xf32> to vector<12x32x32xf32>
    "tpu.trace_start"() <{level = 10 : i32, message = "nrk,nko->nro"}> : () -> ()
    %cst = arith.constant dense<0.000000e+00> : vector<12x16x32xf32>
    %9 = tpu.matmul %6, %8, %cst {dimension_numbers = #tpu.dot_dimension_numbers<[2], [1], [1], [2], [0, 0, 0, 1, 1, 2], [0], [0]>} : vector<12x16x32xf32>, vector<12x32x32xf32>, vector<12x16x32xf32> -> vector<12x16x32xf32>
    "tpu.trace_stop"() : () -> ()
    %10 = vector.extract_strided_slice %9 {offsets = [0, 0, 0], sizes = [4, 16, 32], strides = [1, 1, 1]} : vector<12x16x32xf32> to vector<4x16x32xf32>
    %11 = vector.shape_cast %10 : vector<4x16x32xf32> to vector<8x8x32xf32>
    %12 = vector.extract_strided_slice %9 {offsets = [4, 0, 0], sizes = [4, 16, 32], strides = [1, 1, 1]} : vector<12x16x32xf32> to vector<4x16x32xf32>
    %13 = vector.shape_cast %12 : vector<4x16x32xf32> to vector<8x8x32xf32>
    %14 = vector.extract_strided_slice %9 {offsets = [8, 0, 0], sizes = [4, 16, 32], strides = [1, 1, 1]} : vector<12x16x32xf32> to vector<4x16x32xf32>
    %15 = vector.shape_cast %14 : vector<4x16x32xf32> to vector<8x8x32xf32>
    "tpu.trace_start"() <{level = 10 : i32, message = "ntd,nsd->nts"}> : () -> ()
    %cst_9 = arith.constant dense<0.000000e+00> : vector<8x8x8xf32>
    %16 = tpu.matmul %11, %13, %cst_9 {dimension_numbers = #tpu.dot_dimension_numbers<[2], [2], [1], [1], [0, 0, 0, 1, 1, 1], [0], [0]>} : vector<8x8x32xf32>, vector<8x8x32xf32>, vector<8x8x8xf32> -> vector<8x8x8xf32>
    "tpu.trace_stop"() : () -> ()
    %17 = math.exp %16 : vector<8x8x8xf32>
    %cst_10 = arith.constant dense<0.000000e+00> : vector<8x8xf32>
    %18 = vector.multi_reduction <add>, %17, %cst_10 [2] : vector<8x8x8xf32> to vector<8x8xf32>
    %19 = vector.shape_cast %18 : vector<8x8xf32> to vector<8x8x1xf32>
    %20 = vector.broadcast %19 : vector<8x8x1xf32> to vector<8x8x8xf32>
    %21 = arith.divf %17, %20 : vector<8x8x8xf32>
    "tpu.trace_start"() <{level = 10 : i32, message = "nts,nsd->ntd"}> : () -> ()
    %cst_11 = arith.constant dense<0.000000e+00> : vector<8x8x32xf32>
    %22 = tpu.matmul %21, %15, %cst_11 {dimension_numbers = #tpu.dot_dimension_numbers<[2], [1], [1], [2], [0, 0, 0, 1, 1, 2], [0], [0]>} : vector<8x8x8xf32>, vector<8x8x32xf32>, vector<8x8x32xf32> -> vector<8x8x32xf32>
    "tpu.trace_stop"() : () -> ()
    %23 = vector.shape_cast %22 : vector<8x8x32xf32> to vector<4x16x32xf32>
    %c0_12 = arith.constant 0 : index
    %c0_13 = arith.constant 0 : index
    %c0_14 = arith.constant 0 : index
    %c0_15 = arith.constant 0 : index
    %24 = vector.load %arg3[%c0_12, %c0_13, %c0_14, %c0_15] : memref<2x4x32x32xf32, #tpu.memory_space<vmem>>, vector<1x4x32x32xf32>
    %25 = vector.shape_cast %24 : vector<1x4x32x32xf32> to vector<4x32x32xf32>
    "tpu.trace_start"() <{level = 10 : i32, message = "hrd,hdo->hro"}> : () -> ()
    %cst_16 = arith.constant dense<0.000000e+00> : vector<4x16x32xf32>
    %26 = tpu.matmul %23, %25, %cst_16 {dimension_numbers = #tpu.dot_dimension_numbers<[2], [1], [1], [2], [0, 0, 0, 1, 1, 2], [0], [0]>} : vector<4x16x32xf32>, vector<4x32x32xf32>, vector<4x16x32xf32> -> vector<4x16x32xf32>
    "tpu.trace_stop"() : () -> ()
    %cst_17 = arith.constant dense<0.000000e+00> : vector<16x32xf32>
    %27 = vector.multi_reduction <add>, %26, %cst_17 [0] : vector<4x16x32xf32> to vector<16x32xf32>
    %c0_18 = arith.constant 0 : index
    %c0_19 = arith.constant 0 : index
    %c0_20 = arith.constant 0 : index
    %28 = vector.load %arg4[%c0_18, %c0_19, %c0_20] : memref<2x1x32xf32, #tpu.memory_space<vmem>>, vector<1x1x32xf32>
    %29 = vector.shape_cast %28 : vector<1x1x32xf32> to vector<1x32xf32>
    %30 = vector.broadcast %29 : vector<1x32xf32> to vector<16x32xf32>
    %31 = arith.addf %27, %30 : vector<16x32xf32>
    %32 = arith.addf %4, %31 : vector<16x32xf32>
    %c0_21 = arith.constant 0 : index
    %c0_22 = arith.constant 0 : index
    %c0_23 = arith.constant 0 : index
    %33 = vector.load %arg5[%c0_21, %c0_22, %c0_23] : memref<2x1x32xf32, #tpu.memory_space<vmem>>, vector<1x1x32xf32>
    %34 = vector.shape_cast %33 : vector<1x1x32xf32> to vector<1x32xf32>
    %c0_24 = arith.constant 0 : index
    %c0_25 = arith.constant 0 : index
    %c0_26 = arith.constant 0 : index
    %35 = vector.load %arg6[%c0_24, %c0_25, %c0_26] : memref<2x1x32xf32, #tpu.memory_space<vmem>>, vector<1x1x32xf32>
    %36 = vector.shape_cast %35 : vector<1x1x32xf32> to vector<1x32xf32>
    %cst_27 = arith.constant dense<0.000000e+00> : vector<16xf32>
    %37 = vector.multi_reduction <add>, %32, %cst_27 [1] : vector<16x32xf32> to vector<16xf32>
    %38 = vector.shape_cast %37 : vector<16xf32> to vector<16x1xf32>
    %cst_28 = arith.constant 3.200000e+01 : f32
    %39 = vector.broadcast %cst_28 : f32 to vector<16x1xf32>
    %40 = arith.divf %38, %39 : vector<16x1xf32>
    %41 = vector.broadcast %40 : vector<16x1xf32> to vector<16x32xf32>
    %42 = arith.subf %32, %41 : vector<16x32xf32>
    %43 = arith.mulf %42, %42 : vector<16x32xf32>
    %cst_29 = arith.constant dense<0.000000e+00> : vector<16xf32>
    %44 = vector.multi_reduction <add>, %43, %cst_29 [1] : vector<16x32xf32> to vector<16xf32>
    %45 = vector.shape_cast %44 : vector<16xf32> to vector<16x1xf32>
    %cst_30 = arith.constant 3.200000e+01 : f32
    %46 = vector.broadcast %cst_30 : f32 to vector<16x1xf32>
    %47 = arith.divf %45, %46 : vector<16x1xf32>
    %cst_31 = arith.constant 9.99999974E-6 : f32
    %48 = vector.broadcast %cst_31 : f32 to vector<16x1xf32>
    %49 = arith.addf %47, %48 : vector<16x1xf32>
    %50 = math.rsqrt %49 : vector<16x1xf32>
    %51 = vector.broadcast %50 : vector<16x1xf32> to vector<16x32xf32>
    %52 = arith.mulf %42, %51 : vector<16x32xf32>
    %53 = vector.broadcast %34 : vector<1x32xf32> to vector<16x32xf32>
    %54 = arith.mulf %52, %53 : vector<16x32xf32>
    %55 = vector.broadcast %36 : vector<1x32xf32> to vector<16x32xf32>
    %56 = arith.addf %54, %55 : vector<16x32xf32>
    %c0_32 = arith.constant 0 : index
    %c0_33 = arith.constant 0 : index
    %c0_34 = arith.constant 0 : index
    %57 = vector.load %arg7[%c0_32, %c0_33, %c0_34] : memref<2x32x128xf32, #tpu.memory_space<vmem>>, vector<1x32x128xf32>
    %58 = vector.shape_cast %57 : vector<1x32x128xf32> to vector<32x128xf32>
    %cst_35 = arith.constant dense<0.000000e+00> : vector<16x128xf32>
    %59 = tpu.matmul %56, %58, %cst_35 {dimension_numbers = #tpu.dot_dimension_numbers<[1], [0], [0], [1], [0, 0, 1, 1], [], []>} : vector<16x32xf32>, vector<32x128xf32>, vector<16x128xf32> -> vector<16x128xf32>
    %c0_36 = arith.constant 0 : index
    %c0_37 = arith.constant 0 : index
    %c0_38 = arith.constant 0 : index
    %60 = vector.load %arg8[%c0_36, %c0_37, %c0_38] : memref<2x1x128xf32, #tpu.memory_space<vmem>>, vector<1x1x128xf32>
    %61 = vector.shape_cast %60 : vector<1x1x128xf32> to vector<1x128xf32>
    %62 = vector.broadcast %61 : vector<1x128xf32> to vector<16x128xf32>
    %63 = arith.addf %59, %62 : vector<16x128xf32>
    %cst_39 = arith.constant 0.000000e+00 : f32
    %64 = vector.broadcast %cst_39 : f32 to vector<16x128xf32>
    %65 = arith.maximumf %63, %64 : vector<16x128xf32>
    %c0_40 = arith.constant 0 : index
    %c0_41 = arith.constant 0 : index
    %c0_42 = arith.constant 0 : index
    %66 = vector.load %arg9[%c0_40, %c0_41, %c0_42] : memref<2x128x32xf32, #tpu.memory_space<vmem>>, vector<1x128x32xf32>
    %67 = vector.shape_cast %66 : vector<1x128x32xf32> to vector<128x32xf32>
    %cst_43 = arith.constant dense<0.000000e+00> : vector<16x32xf32>
    %68 = tpu.matmul %65, %67, %cst_43 {dimension_numbers = #tpu.dot_dimension_numbers<[1], [0], [0], [1], [0, 0, 1, 1], [], []>} : vector<16x128xf32>, vector<128x32xf32>, vector<16x32xf32> -> vector<16x32xf32>
    %c0_44 = arith.constant 0 : index
    %c0_45 = arith.constant 0 : index
    %c0_46 = arith.constant 0 : index
    %69 = vector.load %arg10[%c0_44, %c0_45, %c0_46] : memref<2x1x32xf32, #tpu.memory_space<vmem>>, vector<1x1x32xf32>
    %70 = vector.shape_cast %69 : vector<1x1x32xf32> to vector<1x32xf32>
    %71 = vector.broadcast %70 : vector<1x32xf32> to vector<16x32xf32>
    %72 = arith.addf %68, %71 : vector<16x32xf32>
    %73 = arith.addf %56, %72 : vector<16x32xf32>
    %c0_47 = arith.constant 0 : index
    %c0_48 = arith.constant 0 : index
    %c0_49 = arith.constant 0 : index
    %74 = vector.load %arg11[%c0_47, %c0_48, %c0_49] : memref<2x1x32xf32, #tpu.memory_space<vmem>>, vector<1x1x32xf32>
    %75 = vector.shape_cast %74 : vector<1x1x32xf32> to vector<1x32xf32>
    %c0_50 = arith.constant 0 : index
    %c0_51 = arith.constant 0 : index
    %c0_52 = arith.constant 0 : index
    %76 = vector.load %arg12[%c0_50, %c0_51, %c0_52] : memref<2x1x32xf32, #tpu.memory_space<vmem>>, vector<1x1x32xf32>
    %77 = vector.shape_cast %76 : vector<1x1x32xf32> to vector<1x32xf32>
    %cst_53 = arith.constant dense<0.000000e+00> : vector<16xf32>
    %78 = vector.multi_reduction <add>, %73, %cst_53 [1] : vector<16x32xf32> to vector<16xf32>
    %79 = vector.shape_cast %78 : vector<16xf32> to vector<16x1xf32>
    %cst_54 = arith.constant 3.200000e+01 : f32
    %80 = vector.broadcast %cst_54 : f32 to vector<16x1xf32>
    %81 = arith.divf %79, %80 : vector<16x1xf32>
    %82 = vector.broadcast %81 : vector<16x1xf32> to vector<16x32xf32>
    %83 = arith.subf %73, %82 : vector<16x32xf32>
    %84 = arith.mulf %83, %83 : vector<16x32xf32>
    %cst_55 = arith.constant dense<0.000000e+00> : vector<16xf32>
    %85 = vector.multi_reduction <add>, %84, %cst_55 [1] : vector<16x32xf32> to vector<16xf32>
    %86 = vector.shape_cast %85 : vector<16xf32> to vector<16x1xf32>
    %cst_56 = arith.constant 3.200000e+01 : f32
    %87 = vector.broadcast %cst_56 : f32 to vector<16x1xf32>
    %88 = arith.divf %86, %87 : vector<16x1xf32>
    %cst_57 = arith.constant 9.99999974E-6 : f32
    %89 = vector.broadcast %cst_57 : f32 to vector<16x1xf32>
    %90 = arith.addf %88, %89 : vector<16x1xf32>
    %91 = math.rsqrt %90 : vector<16x1xf32>
    %92 = vector.broadcast %91 : vector<16x1xf32> to vector<16x32xf32>
    %93 = arith.mulf %83, %92 : vector<16x32xf32>
    %94 = vector.broadcast %75 : vector<1x32xf32> to vector<16x32xf32>
    %95 = arith.mulf %93, %94 : vector<16x32xf32>
    %96 = vector.broadcast %77 : vector<1x32xf32> to vector<16x32xf32>
    %97 = arith.addf %95, %96 : vector<16x32xf32>
    %98 = vector.shape_cast %97 : vector<16x32xf32> to vector<1x16x32xf32>
    %99 = vector.broadcast %98 : vector<1x16x32xf32> to vector<12x16x32xf32>
    %c1 = arith.constant 1 : index
    %c0_58 = arith.constant 0 : index
    %c0_59 = arith.constant 0 : index
    %c0_60 = arith.constant 0 : index
    %100 = vector.load %arg2[%c1, %c0_58, %c0_59, %c0_60] : memref<2x12x32x32xf32, #tpu.memory_space<vmem>>, vector<1x12x32x32xf32>
    %101 = vector.shape_cast %100 : vector<1x12x32x32xf32> to vector<12x32x32xf32>
    "tpu.trace_start"() <{level = 10 : i32, message = "nrk,nko->nro"}> : () -> ()
    %cst_61 = arith.constant dense<0.000000e+00> : vector<12x16x32xf32>
    %102 = tpu.matmul %99, %101, %cst_61 {dimension_numbers = #tpu.dot_dimension_numbers<[2], [1], [1], [2], [0, 0, 0, 1, 1, 2], [0], [0]>} : vector<12x16x32xf32>, vector<12x32x32xf32>, vector<12x16x32xf32> -> vector<12x16x32xf32>
    "tpu.trace_stop"() : () -> ()
    %103 = vector.extract_strided_slice %102 {offsets = [0, 0, 0], sizes = [4, 16, 32], strides = [1, 1, 1]} : vector<12x16x32xf32> to vector<4x16x32xf32>
    %104 = vector.shape_cast %103 : vector<4x16x32xf32> to vector<8x8x32xf32>
    %105 = vector.extract_strided_slice %102 {offsets = [4, 0, 0], sizes = [4, 16, 32], strides = [1, 1, 1]} : vector<12x16x32xf32> to vector<4x16x32xf32>
    %106 = vector.shape_cast %105 : vector<4x16x32xf32> to vector<8x8x32xf32>
    %107 = vector.extract_strided_slice %102 {offsets = [8, 0, 0], sizes = [4, 16, 32], strides = [1, 1, 1]} : vector<12x16x32xf32> to vector<4x16x32xf32>
    %108 = vector.shape_cast %107 : vector<4x16x32xf32> to vector<8x8x32xf32>
    "tpu.trace_start"() <{level = 10 : i32, message = "ntd,nsd->nts"}> : () -> ()
    %cst_62 = arith.constant dense<0.000000e+00> : vector<8x8x8xf32>
    %109 = tpu.matmul %104, %106, %cst_62 {dimension_numbers = #tpu.dot_dimension_numbers<[2], [2], [1], [1], [0, 0, 0, 1, 1, 1], [0], [0]>} : vector<8x8x32xf32>, vector<8x8x32xf32>, vector<8x8x8xf32> -> vector<8x8x8xf32>
    "tpu.trace_stop"() : () -> ()
    %110 = math.exp %109 : vector<8x8x8xf32>
    %cst_63 = arith.constant dense<0.000000e+00> : vector<8x8xf32>
    %111 = vector.multi_reduction <add>, %110, %cst_63 [2] : vector<8x8x8xf32> to vector<8x8xf32>
    %112 = vector.shape_cast %111 : vector<8x8xf32> to vector<8x8x1xf32>
    %113 = vector.broadcast %112 : vector<8x8x1xf32> to vector<8x8x8xf32>
    %114 = arith.divf %110, %113 : vector<8x8x8xf32>
    "tpu.trace_start"() <{level = 10 : i32, message = "nts,nsd->ntd"}> : () -> ()
    %cst_64 = arith.constant dense<0.000000e+00> : vector<8x8x32xf32>
    %115 = tpu.matmul %114, %108, %cst_64 {dimension_numbers = #tpu.dot_dimension_numbers<[2], [1], [1], [2], [0, 0, 0, 1, 1, 2], [0], [0]>} : vector<8x8x8xf32>, vector<8x8x32xf32>, vector<8x8x32xf32> -> vector<8x8x32xf32>
    "tpu.trace_stop"() : () -> ()
    %116 = vector.shape_cast %115 : vector<8x8x32xf32> to vector<4x16x32xf32>
    %c1_65 = arith.constant 1 : index
    %c0_66 = arith.constant 0 : index
    %c0_67 = arith.constant 0 : index
    %c0_68 = arith.constant 0 : index
    %117 = vector.load %arg3[%c1_65, %c0_66, %c0_67, %c0_68] : memref<2x4x32x32xf32, #tpu.memory_space<vmem>>, vector<1x4x32x32xf32>
    %118 = vector.shape_cast %117 : vector<1x4x32x32xf32> to vector<4x32x32xf32>
    "tpu.trace_start"() <{level = 10 : i32, message = "hrd,hdo->hro"}> : () -> ()
    %cst_69 = arith.constant dense<0.000000e+00> : vector<4x16x32xf32>
    %119 = tpu.matmul %116, %118, %cst_69 {dimension_numbers = #tpu.dot_dimension_numbers<[2], [1], [1], [2], [0, 0, 0, 1, 1, 2], [0], [0]>} : vector<4x16x32xf32>, vector<4x32x32xf32>, vector<4x16x32xf32> -> vector<4x16x32xf32>
    "tpu.trace_stop"() : () -> ()
    %cst_70 = arith.constant dense<0.000000e+00> : vector<16x32xf32>
    %120 = vector.multi_reduction <add>, %119, %cst_70 [0] : vector<4x16x32xf32> to vector<16x32xf32>
    %c1_71 = arith.constant 1 : index
    %c0_72 = arith.constant 0 : index
    %c0_73 = arith.constant 0 : index
    %121 = vector.load %arg4[%c1_71, %c0_72, %c0_73] : memref<2x1x32xf32, #tpu.memory_space<vmem>>, vector<1x1x32xf32>
    %122 = vector.shape_cast %121 : vector<1x1x32xf32> to vector<1x32xf32>
    %123 = vector.broadcast %122 : vector<1x32xf32> to vector<16x32xf32>
    %124 = arith.addf %120, %123 : vector<16x32xf32>
    %125 = arith.addf %97, %124 : vector<16x32xf32>
    %c1_74 = arith.constant 1 : index
    %c0_75 = arith.constant 0 : index
    %c0_76 = arith.constant 0 : index
    %126 = vector.load %arg5[%c1_74, %c0_75, %c0_76] : memref<2x1x32xf32, #tpu.memory_space<vmem>>, vector<1x1x32xf32>
    %127 = vector.shape_cast %126 : vector<1x1x32xf32> to vector<1x32xf32>
    %c1_77 = arith.constant 1 : index
    %c0_78 = arith.constant 0 : index
    %c0_79 = arith.constant 0 : index
    %128 = vector.load %arg6[%c1_77, %c0_78, %c0_79] : memref<2x1x32xf32, #tpu.memory_space<vmem>>, vector<1x1x32xf32>
    %129 = vector.shape_cast %128 : vector<1x1x32xf32> to vector<1x32xf32>
    %cst_80 = arith.constant dense<0.000000e+00> : vector<16xf32>
    %130 = vector.multi_reduction <add>, %125, %cst_80 [1] : vector<16x32xf32> to vector<16xf32>
    %131 = vector.shape_cast %130 : vector<16xf32> to vector<16x1xf32>
    %cst_81 = arith.constant 3.200000e+01 : f32
    %132 = vector.broadcast %cst_81 : f32 to vector<16x1xf32>
    %133 = arith.divf %131, %132 : vector<16x1xf32>
    %134 = vector.broadcast %133 : vector<16x1xf32> to vector<16x32xf32>
    %135 = arith.subf %125, %134 : vector<16x32xf32>
    %136 = arith.mulf %135, %135 : vector<16x32xf32>
    %cst_82 = arith.constant dense<0.000000e+00> : vector<16xf32>
    %137 = vector.multi_reduction <add>, %136, %cst_82 [1] : vector<16x32xf32> to vector<16xf32>
    %138 = vector.shape_cast %137 : vector<16xf32> to vector<16x1xf32>
    %cst_83 = arith.constant 3.200000e+01 : f32
    %139 = vector.broadcast %cst_83 : f32 to vector<16x1xf32>
    %140 = arith.divf %138, %139 : vector<16x1xf32>
    %cst_84 = arith.constant 9.99999974E-6 : f32
    %141 = vector.broadcast %cst_84 : f32 to vector<16x1xf32>
    %142 = arith.addf %140, %141 : vector<16x1xf32>
    %143 = math.rsqrt %142 : vector<16x1xf32>
    %144 = vector.broadcast %143 : vector<16x1xf32> to vector<16x32xf32>
    %145 = arith.mulf %135, %144 : vector<16x32xf32>
    %146 = vector.broadcast %127 : vector<1x32xf32> to vector<16x32xf32>
    %147 = arith.mulf %145, %146 : vector<16x32xf32>
    %148 = vector.broadcast %129 : vector<1x32xf32> to vector<16x32xf32>
    %149 = arith.addf %147, %148 : vector<16x32xf32>
    %c1_85 = arith.constant 1 : index
    %c0_86 = arith.constant 0 : index
    %c0_87 = arith.constant 0 : index
    %150 = vector.load %arg7[%c1_85, %c0_86, %c0_87] : memref<2x32x128xf32, #tpu.memory_space<vmem>>, vector<1x32x128xf32>
    %151 = vector.shape_cast %150 : vector<1x32x128xf32> to vector<32x128xf32>
    %cst_88 = arith.constant dense<0.000000e+00> : vector<16x128xf32>
    %152 = tpu.matmul %149, %151, %cst_88 {dimension_numbers = #tpu.dot_dimension_numbers<[1], [0], [0], [1], [0, 0, 1, 1], [], []>} : vector<16x32xf32>, vector<32x128xf32>, vector<16x128xf32> -> vector<16x128xf32>
    %c1_89 = arith.constant 1 : index
    %c0_90 = arith.constant 0 : index
    %c0_91 = arith.constant 0 : index
    %153 = vector.load %arg8[%c1_89, %c0_90, %c0_91] : memref<2x1x128xf32, #tpu.memory_space<vmem>>, vector<1x1x128xf32>
    %154 = vector.shape_cast %153 : vector<1x1x128xf32> to vector<1x128xf32>
    %155 = vector.broadcast %154 : vector<1x128xf32> to vector<16x128xf32>
    %156 = arith.addf %152, %155 : vector<16x128xf32>
    %cst_92 = arith.constant 0.000000e+00 : f32
    %157 = vector.broadcast %cst_92 : f32 to vector<16x128xf32>
    %158 = arith.maximumf %156, %157 : vector<16x128xf32>
    %c1_93 = arith.constant 1 : index
    %c0_94 = arith.constant 0 : index
    %c0_95 = arith.constant 0 : index
    %159 = vector.load %arg9[%c1_93, %c0_94, %c0_95] : memref<2x128x32xf32, #tpu.memory_space<vmem>>, vector<1x128x32xf32>
    %160 = vector.shape_cast %159 : vector<1x128x32xf32> to vector<128x32xf32>
    %cst_96 = arith.constant dense<0.000000e+00> : vector<16x32xf32>
    %161 = tpu.matmul %158, %160, %cst_96 {dimension_numbers = #tpu.dot_dimension_numbers<[1], [0], [0], [1], [0, 0, 1, 1], [], []>} : vector<16x128xf32>, vector<128x32xf32>, vector<16x32xf32> -> vector<16x32xf32>
    %c1_97 = arith.constant 1 : index
    %c0_98 = arith.constant 0 : index
    %c0_99 = arith.constant 0 : index
    %162 = vector.load %arg10[%c1_97, %c0_98, %c0_99] : memref<2x1x32xf32, #tpu.memory_space<vmem>>, vector<1x1x32xf32>
    %163 = vector.shape_cast %162 : vector<1x1x32xf32> to vector<1x32xf32>
    %164 = vector.broadcast %163 : vector<1x32xf32> to vector<16x32xf32>
    %165 = arith.addf %161, %164 : vector<16x32xf32>
    %166 = arith.addf %149, %165 : vector<16x32xf32>
    %c1_100 = arith.constant 1 : index
    %c0_101 = arith.constant 0 : index
    %c0_102 = arith.constant 0 : index
    %167 = vector.load %arg11[%c1_100, %c0_101, %c0_102] : memref<2x1x32xf32, #tpu.memory_space<vmem>>, vector<1x1x32xf32>
    %168 = vector.shape_cast %167 : vector<1x1x32xf32> to vector<1x32xf32>
    %c1_103 = arith.constant 1 : index
    %c0_104 = arith.constant 0 : index
    %c0_105 = arith.constant 0 : index
    %169 = vector.load %arg12[%c1_103, %c0_104, %c0_105] : memref<2x1x32xf32, #tpu.memory_space<vmem>>, vector<1x1x32xf32>
    %170 = vector.shape_cast %169 : vector<1x1x32xf32> to vector<1x32xf32>
    %cst_106 = arith.constant dense<0.000000e+00> : vector<16xf32>
    %171 = vector.multi_reduction <add>, %166, %cst_106 [1] : vector<16x32xf32> to vector<16xf32>
    %172 = vector.shape_cast %171 : vector<16xf32> to vector<16x1xf32>
    %cst_107 = arith.constant 3.200000e+01 : f32
    %173 = vector.broadcast %cst_107 : f32 to vector<16x1xf32>
    %174 = arith.divf %172, %173 : vector<16x1xf32>
    %175 = vector.broadcast %174 : vector<16x1xf32> to vector<16x32xf32>
    %176 = arith.subf %166, %175 : vector<16x32xf32>
    %177 = arith.mulf %176, %176 : vector<16x32xf32>
    %cst_108 = arith.constant dense<0.000000e+00> : vector<16xf32>
    %178 = vector.multi_reduction <add>, %177, %cst_108 [1] : vector<16x32xf32> to vector<16xf32>
    %179 = vector.shape_cast %178 : vector<16xf32> to vector<16x1xf32>
    %cst_109 = arith.constant 3.200000e+01 : f32
    %180 = vector.broadcast %cst_109 : f32 to vector<16x1xf32>
    %181 = arith.divf %179, %180 : vector<16x1xf32>
    %cst_110 = arith.constant 9.99999974E-6 : f32
    %182 = vector.broadcast %cst_110 : f32 to vector<16x1xf32>
    %183 = arith.addf %181, %182 : vector<16x1xf32>
    %184 = math.rsqrt %183 : vector<16x1xf32>
    %185 = vector.broadcast %184 : vector<16x1xf32> to vector<16x32xf32>
    %186 = arith.mulf %176, %185 : vector<16x32xf32>
    %187 = vector.broadcast %168 : vector<1x32xf32> to vector<16x32xf32>
    %188 = arith.mulf %186, %187 : vector<16x32xf32>
    %189 = vector.broadcast %170 : vector<1x32xf32> to vector<16x32xf32>
    %190 = arith.addf %188, %189 : vector<16x32xf32>
    %191 = vector.shape_cast %190 : vector<16x32xf32> to vector<2x8x32xf32>
    %cst_111 = arith.constant dense<0.000000e+00> : vector<2x32xf32>
    %192 = vector.multi_reduction <add>, %191, %cst_111 [1] : vector<2x8x32xf32> to vector<2x32xf32>
    %cst_112 = arith.constant 8.000000e+00 : f32
    %193 = vector.broadcast %cst_112 : f32 to vector<2x32xf32>
    %194 = arith.divf %192, %193 : vector<2x32xf32>
    %c0_113 = arith.constant 0 : index
    %c0_114 = arith.constant 0 : index
    %195 = vector.load %arg13[%c0_113, %c0_114] : memref<32x128xf32, #tpu.memory_space<vmem>>, vector<32x128xf32>
    %cst_115 = arith.constant dense<0.000000e+00> : vector<2x128xf32>
    %196 = tpu.matmul %194, %195, %cst_115 {dimension_numbers = #tpu.dot_dimension_numbers<[1], [0], [0], [1], [0, 0, 1, 1], [], []>} : vector<2x32xf32>, vector<32x128xf32>, vector<2x128xf32> -> vector<2x128xf32>
    %c0_116 = arith.constant 0 : index
    %c0_117 = arith.constant 0 : index
    %197 = vector.load %arg14[%c0_116, %c0_117] : memref<1x128xf32, #tpu.memory_space<vmem>>, vector<1x128xf32>
    %198 = vector.broadcast %197 : vector<1x128xf32> to vector<2x128xf32>
    %199 = arith.addf %196, %198 : vector<2x128xf32>
    %c0_118 = arith.constant 0 : index
    %c0_119 = arith.constant 0 : index
    %200 = vector.load %arg15[%c0_118, %c0_119] : memref<2x128xf32, #tpu.memory_space<vmem>>, vector<2x128xf32>
    tpu.vector_store %arg15[%c0_118, %c0_119], %199 {strides = array<i32>} : memref<2x128xf32, #tpu.memory_space<vmem>>, vector<2x128xf32>,
    return
  }
}

</mosaic_0001>

<llo_original>
// kernel: tpu_custom_call.1
$region0: #{tpu_custom_call.1}
  #allocation0 [shape = 'u32[]', space=smem, size = 0x4, offset = 0x4, fixed_abs, tag = 'smem constant byte address 0x4 - core index']
  #allocation1 [shape = 'u32[144,128]{1,0:T(1,128)}', space=vmem, size = 0x12000, scoped, tag = 'internal scratch']
  %s0 = inlined_call_operand.hbm [shape: f32[2,8,32], index: 0, kind: input, shape index: {}]
  %s1 = inlined_call_operand.hbm [shape: f32[1,8,32], index: 1, kind: input, shape index: {}]
  %s2 = inlined_call_operand.hbm [shape: f32[2,12,32,32], index: 2, kind: input, shape index: {}]
  %s3 = inlined_call_operand.vmem [shape: f32[2,4,32,32], index: 3, kind: input, shape index: {}]
  %s4 = inlined_call_operand.vmem [shape: f32[2,1,32], index: 4, kind: input, shape index: {}]
  %s5 = inlined_call_operand.hbm [shape: f32[2,1,32], index: 5, kind: input, shape index: {}]
  %s6 = inlined_call_operand.hbm [shape: f32[2,1,32], index: 6, kind: input, shape index: {}]
  %s7 = inlined_call_operand.vmem [shape: f32[2,32,128], index: 7, kind: input, shape index: {}]
  %s8 = inlined_call_operand.hbm [shape: f32[2,1,128], index: 8, kind: input, shape index: {}]
  %s9 = inlined_call_operand.vmem [shape: f32[2,128,32], index: 9, kind: input, shape index: {}]
  %s10 = inlined_call_operand.vmem [shape: f32[2,1,32], index: 10, kind: input, shape index: {}]
  %s11 = inlined_call_operand.vmem [shape: f32[2,1,32], index: 11, kind: input, shape index: {}]
  %s12 = inlined_call_operand.vmem [shape: f32[2,1,32], index: 12, kind: input, shape index: {}]
  %s13 = inlined_call_operand.vmem [shape: f32[32,128], index: 13, kind: input, shape index: {}]
  %s14 = inlined_call_operand.vmem [shape: f32[1,128], index: 14, kind: input, shape index: {}]
  %s15 = inlined_call_operand.hbm [shape: f32[2,128], index: 15, kind: output, shape index: {}]
  %s16 = sld [smem:[#allocation0]]
  $region94: #{tpu_custom_call.1} parent=0
    _
  %s18 = ssub.s32 1, %s16
  %s19 = scalar_select 0, %s18, %s16
  $region1: #{tpu_custom_call.1} parent=0
    #allocation2 [shape = 'u8[8192]{0}', space=vmem, size = 0x2000, scoped, tag = 'input window, operand 0, single buffered']
    #allocation3 [shape = 's32[1]{0}', space=sflag, size = 0x4, scoped, tag = 'scoped memory for tpu_custom_call.1']
    #allocation4 [shape = 's32[1]{0}', space=sflag, size = 0x4, scoped, tag = 'scoped memory for tpu_custom_call.1']
    #allocation5 [shape = 'u8[4096]{0}', space=vmem, size = 0x1000, scoped, tag = 'input window, operand 1, single buffered']
    #allocation6 [shape = 's32[1]{0}', space=sflag, size = 0x4, scoped, tag = 'scoped memory for tpu_custom_call.1']
    #allocation7 [shape = 'u8[393216]{0}', space=vmem, size = 0x60000, scoped, tag = 'input window, operand 2, single buffered']
    #allocation8 [shape = 'u8[1024]{0}', space=vmem, size = 0x400, scoped, tag = 'input window, operand 5, single buffered']
    #allocation9 [shape = 's32[1]{0}', space=sflag, size = 0x4, scoped, tag = 'scoped memory for tpu_custom_call.1']
    #allocation10 [shape = 'u8[1024]{0}', space=vmem, size = 0x400, scoped, tag = 'input window, operand 6, single buffered']
    #allocation11 [shape = 'u8[1024]{0}', space=vmem, size = 0x400, scoped, tag = 'input window, operand 8, single buffered']
    #allocation12 [shape = 's32[1]{0}', space=sflag, size = 0x4, scoped, tag = 'scoped memory for tpu_custom_call.1']
    #allocation13 [shape = 'u8[1024]{0}', space=vmem, size = 0x400, scoped, tag = 'output window, operand 0, single buffered']
    %20 = vsyncpa [#allocation3], 0
    %21 = vsyncpa [#allocation6], 0
    %22 = vsyncpa [#allocation9], 0
    %23 = vsyncpa [#allocation12], 0
    %24 = vsyncpa [#allocation4], 0
    // Predicated region
    $region2: #{tpu_custom_call.1} parent=1 // pred_check
      _
    $region3: #{tpu_custom_call.1} parent=1 // pred_check_branch
      %26 = sbr.rel (0) target = $region5
    $region4: #{tpu_custom_call.1} parent=1 // pred_region
      %s28 = ssub.s32 256, 256
      %29 = vsyncadd [#allocation3], %s28
      %s30 = sshll.u32 [#allocation2], 4
      %s31 = int_to_ptr.vmem [resolvable:$true] %s30
      %36 = dma.hbm_to_vmem [thread:$0]  %s0, 256, %s31, [#allocation3], 128, 128, 8
    $region5: #{tpu_custom_call.1} parent=1 // pred_fallthru
      _
    // Predicated region
    $region6: #{tpu_custom_call.1} parent=1 // pred_check
      _
    $region7: #{tpu_custom_call.1} parent=1 // pred_check_branch
      %38 = sbr.rel (0) target = $region9
    $region8: #{tpu_custom_call.1} parent=1 // pred_region
      %s40 = ssub.s32 128, 128
      %41 = vsyncadd [#allocation6], %s40
      %s43 = sshll.u32 [#allocation5], 4
      %s44 = int_to_ptr.vmem [resolvable:$true] %s43
      %46 = dma.hbm_to_vmem [thread:$0]  %s1, 128, %s44, [#allocation6]
    $region9: #{tpu_custom_call.1} parent=1 // pred_fallthru
      _
    // Predicated region
    $region10: #{tpu_custom_call.1} parent=1 // pred_check
      _
    $region11: #{tpu_custom_call.1} parent=1 // pred_check_branch
      %48 = sbr.rel (0) target = $region13
    $region12: #{tpu_custom_call.1} parent=1 // pred_region
      %s50 = ssub.s32 12288, 12288
      %51 = vsyncadd [#allocation6], %s50
      %s52 = sshll.u32 [#allocation7], 4
      %s53 = int_to_ptr.vmem [resolvable:$true] %s52
      %58 = dma.hbm_to_vmem [thread:$0]  %s2, 12288, %s53, [#allocation6], 128, 128, 8
    $region13: #{tpu_custom_call.1} parent=1 // pred_fallthru
      _
    // Predicated region
    $region14: #{tpu_custom_call.1} parent=1 // pred_check
      _
    $region15: #{tpu_custom_call.1} parent=1 // pred_check_branch
      %60 = sbr.rel (0) target = $region17
    $region16: #{tpu_custom_call.1} parent=1 // pred_region
      _
    $region17: #{tpu_custom_call.1} parent=1 // pred_fallthru
      _
    // Predicated region
    $region18: #{tpu_custom_call.1} parent=1 // pred_check
      _
    $region19: #{tpu_custom_call.1} parent=1 // pred_check_branch
      %62 = sbr.rel (0) target = $region21
    $region20: #{tpu_custom_call.1} parent=1 // pred_region
      _
    $region21: #{tpu_custom_call.1} parent=1 // pred_fallthru
      _
    // Predicated region
    $region22: #{tpu_custom_call.1} parent=1 // pred_check
      _
    $region23: #{tpu_custom_call.1} parent=1 // pred_check_branch
      %64 = sbr.rel (0) target = $region25
    $region24: #{tpu_custom_call.1} parent=1 // pred_region
      %s66 = ssub.s32 32, 32
      %67 = vsyncadd [#allocation9], %s66
      %s68 = sshll.u32 [#allocation8], 4
      %s69 = int_to_ptr.vmem [resolvable:$true] %s68
      %74 = dma.hbm_to_vmem [thread:$0]  %s5, 32, %s69, [#allocation9], 16, 16, 1
    $region25: #{tpu_custom_call.1} parent=1 // pred_fallthru
      _
    // Predicated region
    $region26: #{tpu_custom_call.1} parent=1 // pred_check
      _
    $region27: #{tpu_custom_call.1} parent=1 // pred_check_branch
      %76 = sbr.rel (0) target = $region29
    $region28: #{tpu_custom_call.1} parent=1 // pred_region
      %s78 = ssub.s32 32, 32
      %79 = vsyncadd [#allocation9], %s78
      %s80 = sshll.u32 [#allocation10], 4
      %s81 = int_to_ptr.vmem [resolvable:$true] %s80
      %86 = dma.hbm_to_vmem [thread:$0]  %s6, 32, %s81, [#allocation9], 16, 16, 1
    $region29: #{tpu_custom_call.1} parent=1 // pred_fallthru
      _
    // Predicated region
    $region30: #{tpu_custom_call.1} parent=1 // pred_check
      _
    $region31: #{tpu_custom_call.1} parent=1 // pred_check_branch
      %88 = sbr.rel (0) target = $region33
    $region32: #{tpu_custom_call.1} parent=1 // pred_region
      _
    $region33: #{tpu_custom_call.1} parent=1 // pred_fallthru
      _
    // Predicated region
    $region34: #{tpu_custom_call.1} parent=1 // pred_check
      _
    $region35: #{tpu_custom_call.1} parent=1 // pred_check_branch
      %90 = sbr.rel (0) target = $region37
    $region36: #{tpu_custom_call.1} parent=1 // pred_region
      %s92 = ssub.s32 32, 32
      %93 = vsyncadd [#allocation12], %s92
      %s94 = sshll.u32 [#allocation11], 4
      %s95 = int_to_ptr.vmem [resolvable:$true] %s94
      %100 = dma.hbm_to_vmem [thread:$0]  %s8, 32, %s95, [#allocation12], 16, 16, 1
    $region37: #{tpu_custom_call.1} parent=1 // pred_fallthru
      _
    // Predicated region
    $region38: #{tpu_custom_call.1} parent=1 // pred_check
      _
    $region39: #{tpu_custom_call.1} parent=1 // pred_check_branch
      %102 = sbr.rel (0) target = $region41
    $region40: #{tpu_custom_call.1} parent=1 // pred_region
      _
    $region41: #{tpu_custom_call.1} parent=1 // pred_fallthru
      _
    // Predicated region
    $region42: #{tpu_custom_call.1} parent=1 // pred_check
      _
    $region43: #{tpu_custom_call.1} parent=1 // pred_check_branch
      %104 = sbr.rel (0) target = $region45
    $region44: #{tpu_custom_call.1} parent=1 // pred_region
      _
    $region45: #{tpu_custom_call.1} parent=1 // pred_fallthru
      _
    // Predicated region
    $region46: #{tpu_custom_call.1} parent=1 // pred_check
      _
    $region47: #{tpu_custom_call.1} parent=1 // pred_check_branch
      %106 = sbr.rel (0) target = $region49
    $region48: #{tpu_custom_call.1} parent=1 // pred_region
      _
    $region49: #{tpu_custom_call.1} parent=1 // pred_fallthru
      _
    // Predicated region
    $region50: #{tpu_custom_call.1} parent=1 // pred_check
      _
    $region51: #{tpu_custom_call.1} parent=1 // pred_check_branch
      %108 = sbr.rel (0) target = $region53
    $region52: #{tpu_custom_call.1} parent=1 // pred_region
      _
    $region53: #{tpu_custom_call.1} parent=1 // pred_fallthru
      _
    // Predicated region
    $region54: #{tpu_custom_call.1} parent=1 // pred_check
      _
    $region55: #{tpu_custom_call.1} parent=1 // pred_check_branch
      %110 = sbr.rel (0) target = $region57
    $region56: #{tpu_custom_call.1} parent=1 // pred_region
      _
    $region57: #{tpu_custom_call.1} parent=1 // pred_fallthru
      _
    // Predicated region
    $region58: #{tpu_custom_call.1} parent=1 // pred_check
      _
    $region59: #{tpu_custom_call.1} parent=1 // pred_check_branch
      %112 = sbr.rel (0) target = $region61
    $region60: #{tpu_custom_call.1} parent=1 // pred_region
      _
    $region61: #{tpu_custom_call.1} parent=1 // pred_fallthru
      _
    // Predicated region
    $region62: #{tpu_custom_call.1} parent=1 // pred_check
      _
    $region63: #{tpu_custom_call.1} parent=1 // pred_check_branch
      %114 = sbr.rel (0) target = $region65
    $region64: #{tpu_custom_call.1} parent=1 // pred_region
      %115 = dma.done [#allocation3], 256
    $region65: #{tpu_custom_call.1} parent=1 // pred_fallthru
      _
    // Predicated region
    $region66: #{tpu_custom_call.1} parent=1 // pred_check
      _
    $region67: #{tpu_custom_call.1} parent=1 // pred_check_branch
      %117 = sbr.rel (0) target = $region69
    $region68: #{tpu_custom_call.1} parent=1 // pred_region
      %118 = dma.done [#allocation6], 128
    $region69: #{tpu_custom_call.1} parent=1 // pred_fallthru
      _
    // Predicated region
    $region70: #{tpu_custom_call.1} parent=1 // pred_check
      _
    $region71: #{tpu_custom_call.1} parent=1 // pred_check_branch
      %120 = sbr.rel (0) target = $region73
    $region72: #{tpu_custom_call.1} parent=1 // pred_region
      %121 = dma.done [#allocation6], 12288
    $region73: #{tpu_custom_call.1} parent=1 // pred_fallthru
      _
    // Predicated region
    $region74: #{tpu_custom_call.1} parent=1 // pred_check
      _
    $region75: #{tpu_custom_call.1} parent=1 // pred_check_branch
      %123 = sbr.rel (0) target = $region77
    $region76: #{tpu_custom_call.1} parent=1 // pred_region
      %124 = dma.done [#allocation9], 32
    $region77: #{tpu_custom_call.1} parent=1 // pred_fallthru
      _
    // Predicated region
    $region78: #{tpu_custom_call.1} parent=1 // pred_check
      _
    $region79: #{tpu_custom_call.1} parent=1 // pred_check_branch
      %126 = sbr.rel (0) target = $region81
    $region80: #{tpu_custom_call.1} parent=1 // pred_region
      %127 = dma.done [#allocation9], 32
    $region81: #{tpu_custom_call.1} parent=1 // pred_fallthru
      _
    // Predicated region
    $region82: #{tpu_custom_call.1} parent=1 // pred_check
      _
    $region83: #{tpu_custom_call.1} parent=1 // pred_check_branch
      %129 = sbr.rel (0) target = $region85
    $region84: #{tpu_custom_call.1} parent=1 // pred_region
      %130 = dma.done [#allocation12], 32
    $region85: #{tpu_custom_call.1} parent=1 // pred_fallthru
      _
    %v131 = vld [vmem:[#allocation2] sm:$0xff]
    %v132 = vld [vmem:[#allocation2 + $0x8] sm:$0xff]
    %v133 = vld [vmem:[#allocation5] sm:$0xff]
    %v134 = vadd.f32 %v131, %v133
    %v135 = vadd.f32 %v132, %v133
    %v136 = vld [vmem:[#allocation7] sm:$0xff]
    %v137 = vld [vmem:[#allocation7 + $0x8] sm:$0xff]
    %v138 = vld [vmem:[#allocation7 + $0x10] sm:$0xff]
    %v139 = vld [vmem:[#allocation7 + $0x18] sm:$0xff]
    %v140 = vld [vmem:[#allocation7 + $0x20] sm:$0xff]
    %v141 = vld [vmem:[#allocation7 + $0x28] sm:$0xff]
    %v142 = vld [vmem:[#allocation7 + $0x30] sm:$0xff]
    %v143 = vld [vmem:[#allocation7 + $0x38] sm:$0xff]
    %v144 = vld [vmem:[#allocation7 + $0x40] sm:$0xff]
    %v145 = vld [vmem:[#allocation7 + $0x48] sm:$0xff]
    %v146 = vld [vmem:[#allocation7 + $0x50] sm:$0xff]
    %v147 = vld [vmem:[#allocation7 + $0x58] sm:$0xff]
    %v148 = vld [vmem:[#allocation7 + $0x60] sm:$0xff]
    %v149 = vld [vmem:[#allocation7 + $0x68] sm:$0xff]
    %v150 = vld [vmem:[#allocation7 + $0x70] sm:$0xff]
    %v151 = vld [vmem:[#allocation7 + $0x78] sm:$0xff]
    %v152 = vld [vmem:[#allocation7 + $0x80] sm:$0xff]
    %v153 = vld [vmem:[#allocation7 + $0x88] sm:$0xff]
    %v154 = vld [vmem:[#allocation7 + $0x90] sm:$0xff]
    %v155 = vld [vmem:[#allocation7 + $0x98] sm:$0xff]
    %v156 = vld [vmem:[#allocation7 + $0xa0] sm:$0xff]
    %v157 = vld [vmem:[#allocation7 + $0xa8] sm:$0xff]
    %v158 = vld [vmem:[#allocation7 + $0xb0] sm:$0xff]
    %v159 = vld [vmem:[#allocation7 + $0xb8] sm:$0xff]
    %v160 = vld [vmem:[#allocation7 + $0xc0] sm:$0xff]
    %v161 = vld [vmem:[#allocation7 + $0xc8] sm:$0xff]
    %v162 = vld [vmem:[#allocation7 + $0xd0] sm:$0xff]
    %v163 = vld [vmem:[#allocation7 + $0xd8] sm:$0xff]
    %v164 = vld [vmem:[#allocation7 + $0xe0] sm:$0xff]
    %v165 = vld [vmem:[#allocation7 + $0xe8] sm:$0xff]
    %v166 = vld [vmem:[#allocation7 + $0xf0] sm:$0xff]
    %v167 = vld [vmem:[#allocation7 + $0xf8] sm:$0xff]
    %v168 = vld [vmem:[#allocation7 + $0x100] sm:$0xff]
    %v169 = vld [vmem:[#allocation7 + $0x108] sm:$0xff]
    %v170 = vld [vmem:[#allocation7 + $0x110] sm:$0xff]
    %v171 = vld [vmem:[#allocation7 + $0x118] sm:$0xff]
    %v172 = vld [vmem:[#allocation7 + $0x120] sm:$0xff]
    %v173 = vld [vmem:[#allocation7 + $0x128] sm:$0xff]
    %v174 = vld [vmem:[#allocation7 + $0x130] sm:$0xff]
    %v175 = vld [vmem:[#allocation7 + $0x138] sm:$0xff]
    %v176 = vld [vmem:[#allocation7 + $0x140] sm:$0xff]
    %v177 = vld [vmem:[#allocation7 + $0x148] sm:$0xff]
    %v178 = vld [vmem:[#allocation7 + $0x150] sm:$0xff]
    %v179 = vld [vmem:[#allocation7 + $0x158] sm:$0xff]
    %v180 = vld [vmem:[#allocation7 + $0x160] sm:$0xff]
    %v181 = vld [vmem:[#allocation7 + $0x168] sm:$0xff]
    %v182 = vld [vmem:[#allocation7 + $0x170] sm:$0xff]
    %v183 = vld [vmem:[#allocation7 + $0x178] sm:$0xff]
    %vm184 = vcmask 261120
    %v186 = vsel %vm184, %v134, 0
    %v189 = vsel %vm184, %v135, 0
    %191 = vmatprep.subr.mxu0 0.0
    %192 = vmatpush1.msra.mxu0 %v136
    %193 = vmatprep.subr.mxu0 0.0
    %194 = vmatpush1.msra.mxu0 %v137
    %195 = vmatprep.subr.mxu0 0.0
    %196 = vmatpush1.msra.mxu0 %v138
    %197 = vmatprep.subr.mxu0 0.0
    %198 = vmatpush1.msra.mxu0 %v139
    %199 = vmatprep.subr.mxu0 0.0
    %200 = vmatpush1.msra.mxu0 0.0
    %201 = vmatprep.subr.mxu0 0.0
    %202 = vmatpush1.msra.mxu0 0.0
    %203 = vmatprep.subr.mxu0 0.0
    %204 = vmatpush1.msra.mxu0 0.0
    %205 = vmatprep.subr.mxu0 0.0
    %206 = vmatpush1.msra.mxu0 0.0
    %207 = vmatprep.subr.mxu0 0.0
    %208 = vmatpush1.msra.mxu0 0.0
    %209 = vmatprep.subr.mxu0 0.0
    %210 = vmatpush1.msra.mxu0 0.0
    %211 = vmatprep.subr.mxu0 0.0
    %212 = vmatpush1.msra.mxu0 0.0
    %213 = vmatprep.subr.mxu0 0.0
    %214 = vmatpush1.msra.mxu0 0.0
    %215 = vmatprep.subr.mxu0 0.0
    %216 = vmatpush1.msra.mxu0 0.0
    %217 = vmatprep.subr.mxu0 0.0
    %218 = vmatpush1.msra.mxu0 0.0
    %219 = vmatprep.subr.mxu0 0.0
    %220 = vmatpush1.msra.mxu0 0.0
    %221 = vmatprep.subr.mxu0 0.0
    %222 = vmatpush1.msra.mxu0 0.0
    %223 = vmatprep.subr.mxu0 0.0
    %224 = vmatpush1.msra.mxu0 0.0
    %225 = vmatprep.subr.mxu0 0.0
    %226 = vmatpush1.msra.mxu0 0.0
    %227 = vmatprep.subr.mxu0 0.0
    %228 = vmatpush1.msra.mxu0 0.0
    %229 = vmatprep.subr.mxu0 0.0
    %230 = vmatpush1.msra.mxu0 0.0
    %231 = vmatprep.subr.mxu0 0.0
    %232 = vmatpush1.msra.mxu0 0.0
    %233 = vmatprep.subr.mxu0 0.0
    %234 = vmatpush1.msra.mxu0 0.0
    %235 = vmatprep.subr.mxu0 0.0
    %236 = vmatpush1.msra.mxu0 0.0
    %237 = vmatprep.subr.mxu0 0.0
    %238 = vmatpush1.msra.mxu0 0.0
    %239 = vmatprep.subr.mxu0 0.0
    %240 = vmatpush1.msra.mxu0 0.0
    %241 = vmatprep.subr.mxu0 0.0
    %242 = vmatpush1.msra.mxu0 0.0
    %243 = vmatprep.subr.mxu0 0.0
    %244 = vmatpush1.msra.mxu0 0.0
    %245 = vmatprep.subr.mxu0 0.0
    %246 = vmatpush1.msra.mxu0 0.0
    %247 = vmatprep.subr.mxu0 0.0
    %248 = vmatpush1.msra.mxu0 0.0
    %249 = vmatprep.subr.mxu0 0.0
    %250 = vmatpush1.msra.mxu0 0.0
    %251 = vmatprep.subr.mxu0 0.0
    %252 = vmatpush1.msra.mxu0 0.0
    %253 = vmatprep.subr.mxu0 0.0
    %254 = vmatpush1.msra.mxu0 0.0
    %255 = vmatprep.mubr.f32.mxu0 0.0
    %256 = vmatmul.mubr.f32.gmra.mrb[0].mxu0 %v186
    %v257 = vpop.f32.mrb[0].mxu0
    %v258 = vadd.f32 0.0, %v257
    %v259 = vpop.f32.mrb[0].mxu0
    %260 = vmatprep.mubr.f32.mxu0 0.0
    %261 = vmatmul.mubr.f32.gmra.mrb[0].mxu0 %v189
    %v262 = vpop.f32.mrb[0].mxu0
    %v263 = vadd.f32 0.0, %v262
    %v264 = vpop.f32.mrb[0].mxu0
    %265 = vdwg.mxu0
    %266 = vmatprep.subr.mxu0 0.0
    %267 = vmatpush1.msra.mxu0 %v140
    %268 = vmatprep.subr.mxu0 0.0
    %269 = vmatpush1.msra.mxu0 %v141
    %270 = vmatprep.subr.mxu0 0.0
    %271 = vmatpush1.msra.mxu0 %v142
    %272 = vmatprep.subr.mxu0 0.0
    %273 = vmatpush1.msra.mxu0 %v143
    %274 = vmatprep.subr.mxu0 0.0
    %275 = vmatpush1.msra.mxu0 0.0
    %276 = vmatprep.subr.mxu0 0.0
    %277 = vmatpush1.msra.mxu0 0.0
    %278 = vmatprep.subr.mxu0 0.0
    %279 = vmatpush1.msra.mxu0 0.0
    %280 = vmatprep.subr.mxu0 0.0
    %281 = vmatpush1.msra.mxu0 0.0
    %282 = vmatprep.subr.mxu0 0.0
    %283 = vmatpush1.msra.mxu0 0.0
    %284 = vmatprep.subr.mxu0 0.0
    %285 = vmatpush1.msra.mxu0 0.0
    %286 = vmatprep.subr.mxu0 0.0
    %287 = vmatpush1.msra.mxu0 0.0
    %288 = vmatprep.subr.mxu0 0.0
    %289 = vmatpush1.msra.mxu0 0.0
    %290 = vmatprep.subr.mxu0 0.0
    %291 = vmatpush1.msra.mxu0 0.0
    %292 = vmatprep.subr.mxu0 0.0
    %293 = vmatpush1.msra.mxu0 0.0
    %294 = vmatprep.subr.mxu0 0.0
    %295 = vmatpush1.msra.mxu0 0.0
    %296 = vmatprep.subr.mxu0 0.0
    %297 = vmatpush1.msra.mxu0 0.0
    %298 = vmatprep.subr.mxu0 0.0
    %299 = vmatpush1.msra.mxu0 0.0
    %300 = vmatprep.subr.mxu0 0.0
    %301 = vmatpush1.msra.mxu0 0.0
    %302 = vmatprep.subr.mxu0 0.0
    %303 = vmatpush1.msra.mxu0 0.0
    %304 = vmatprep.subr.mxu0 0.0
    %305 = vmatpush1.msra.mxu0 0.0
    %306 = vmatprep.subr.mxu0 0.0
    %307 = vmatpush1.msra.mxu0 0.0
    %308 = vmatprep.subr.mxu0 0.0
    %309 = vmatpush1.msra.mxu0 0.0
    %310 = vmatprep.subr.mxu0 0.0
    %311 = vmatpush1.msra.mxu0 0.0
    %312 = vmatprep.subr.mxu0 0.0
    %313 = vmatpush1.msra.mxu0 0.0
    %314 = vmatprep.subr.mxu0 0.0
    %315 = vmatpush1.msra.mxu0 0.0
    %316 = vmatprep.subr.mxu0 0.0
    %317 = vmatpush1.msra.mxu0 0.0
    %318 = vmatprep.subr.mxu0 0.0
    %319 = vmatpush1.msra.mxu0 0.0
    %320 = vmatprep.subr.mxu0 0.0
    %321 = vmatpush1.msra.mxu0 0.0
    %322 = vmatprep.subr.mxu0 0.0
    %323 = vmatpush1.msra.mxu0 0.0
    %324 = vmatprep.subr.mxu0 0.0
    %325 = vmatpush1.msra.mxu0 0.0
    %326 = vmatprep.subr.mxu0 0.0
    %327 = vmatpush1.msra.mxu0 0.0
    %328 = vmatprep.subr.mxu0 0.0
    %329 = vmatpush1.msra.mxu0 0.0
    %330 = vmatprep.mubr.f32.mxu0 0.0
    %331 = vmatmul.mubr.f32.gmra.mrb[0].mxu0 %v186
    %v332 = vpop.f32.mrb[0].mxu0
    %v333 = vadd.f32 0.0, %v332
    %v334 = vpop.f32.mrb[0].mxu0
    %335 = vmatprep.mubr.f32.mxu0 0.0
    %336 = vmatmul.mubr.f32.gmra.mrb[0].mxu0 %v189
    %v337 = vpop.f32.mrb[0].mxu0
    %v338 = vadd.f32 0.0, %v337
    %v339 = vpop.f32.mrb[0].mxu0
    %340 = vdwg.mxu0
    %341 = vmatprep.subr.mxu0 0.0
    %342 = vmatpush1.msra.mxu0 %v144
    %343 = vmatprep.subr.mxu0 0.0
    %344 = vmatpush1.msra.mxu0 %v145
    %345 = vmatprep.subr.mxu0 0.0
    %346 = vmatpush1.msra.mxu0 %v146
    %347 = vmatprep.subr.mxu0 0.0
    %348 = vmatpush1.msra.mxu0 %v147
    %349 = vmatprep.subr.mxu0 0.0
    %350 = vmatpush1.msra.mxu0 0.0
    %351 = vmatprep.subr.mxu0 0.0
    %352 = vmatpush1.msra.mxu0 0.0
    %353 = vmatprep.subr.mxu0 0.0
    %354 = vmatpush1.msra.mxu0 0.0
    %355 = vmatprep.subr.mxu0 0.0
    %356 = vmatpush1.msra.mxu0 0.0
    %357 = vmatprep.subr.mxu0 0.0
    %358 = vmatpush1.msra.mxu0 0.0
    %359 = vmatprep.subr.mxu0 0.0
    %360 = vmatpush1.msra.mxu0 0.0
    %361 = vmatprep.subr.mxu0 0.0
    %362 = vmatpush1.msra.mxu0 0.0
    %363 = vmatprep.subr.mxu0 0.0
    %364 = vmatpush1.msra.mxu0 0.0
    %365 = vmatprep.subr.mxu0 0.0
    %366 = vmatpush1.msra.mxu0 0.0
    %367 = vmatprep.subr.mxu0 0.0
    %368 = vmatpush1.msra.mxu0 0.0
    %369 = vmatprep.subr.mxu0 0.0
    %370 = vmatpush1.msra.mxu0 0.0
    %371 = vmatprep.subr.mxu0 0.0
    %372 = vmatpush1.msra.mxu0 0.0
    %373 = vmatprep.subr.mxu0 0.0
    %374 = vmatpush1.msra.mxu0 0.0
    %375 = vmatprep.subr.mxu0 0.0
    %376 = vmatpush1.msra.mxu0 0.0
    %377 = vmatprep.subr.mxu0 0.0
    %378 = vmatpush1.msra.mxu0 0.0
    %379 = vmatprep.subr.mxu0 0.0
    %380 = vmatpush1.msra.mxu0 0.0
    %381 = vmatprep.subr.mxu0 0.0
    %382 = vmatpush1.msra.mxu0 0.0
    %383 = vmatprep.subr.mxu0 0.0
    %384 = vmatpush1.msra.mxu0 0.0
    %385 = vmatprep.subr.mxu0 0.0
    %386 = vmatpush1.msra.mxu0 0.0
    %387 = vmatprep.subr.mxu0 0.0
    %388 = vmatpush1.msra.mxu0 0.0
    %389 = vmatprep.subr.mxu0 0.0
    %390 = vmatpush1.msra.mxu0 0.0
    %391 = vmatprep.subr.mxu0 0.0
    %392 = vmatpush1.msra.mxu0 0.0
    %393 = vmatprep.subr.mxu0 0.0
    %394 = vmatpush1.msra.mxu0 0.0
    %395 = vmatprep.subr.mxu0 0.0
    %396 = vmatpush1.msra.mxu0 0.0
    %397 = vmatprep.subr.mxu0 0.0
    %398 = vmatpush1.msra.mxu0 0.0
    %399 = vmatprep.subr.mxu0 0.0
    %400 = vmatpush1.msra.mxu0 0.0
    %401 = vmatprep.subr.mxu0 0.0
    %402 = vmatpush1.msra.mxu0 0.0
    %403 = vmatprep.subr.mxu0 0.0
    %404 = vmatpush1.msra.mxu0 0.0
    %405 = vmatprep.mubr.f32.mxu0 0.0
    %406 = vmatmul.mubr.f32.gmra.mrb[0].mxu0 %v186
    %v407 = vpop.f32.mrb[0].mxu0
    %v408 = vadd.f32 0.0, %v407
    %v409 = vpop.f32.mrb[0].mxu0
    %410 = vmatprep.mubr.f32.mxu0 0.0
    %411 = vmatmul.mubr.f32.gmra.mrb[0].mxu0 %v189
    %v412 = vpop.f32.mrb[0].mxu0
    %v413 = vadd.f32 0.0, %v412
    %v414 = vpop.f32.mrb[0].mxu0
    %415 = vdwg.mxu0
    %416 = vmatprep.subr.mxu0 0.0
    %417 = vmatpush1.msra.mxu0 %v148
    %418 = vmatprep.subr.mxu0 0.0
    %419 = vmatpush1.msra.mxu0 %v149
    %420 = vmatprep.subr.mxu0 0.0
    %421 = vmatpush1.msra.mxu0 %v150
    %422 = vmatprep.subr.mxu0 0.0
    %423 = vmatpush1.msra.mxu0 %v151
    %424 = vmatprep.subr.mxu0 0.0
    %425 = vmatpush1.msra.mxu0 0.0
    %426 = vmatprep.subr.mxu0 0.0
    %427 = vmatpush1.msra.mxu0 0.0
    %428 = vmatprep.subr.mxu0 0.0
    %429 = vmatpush1.msra.mxu0 0.0
    %430 = vmatprep.subr.mxu0 0.0
    %431 = vmatpush1.msra.mxu0 0.0
    %432 = vmatprep.subr.mxu0 0.0
    %433 = vmatpush1.msra.mxu0 0.0
    %434 = vmatprep.subr.mxu0 0.0
    %435 = vmatpush1.msra.mxu0 0.0
    %436 = vmatprep.subr.mxu0 0.0
    %437 = vmatpush1.msra.mxu0 0.0
    %438 = vmatprep.subr.mxu0 0.0
    %439 = vmatpush1.msra.mxu0 0.0
    %440 = vmatprep.subr.mxu0 0.0
    %441 = vmatpush1.msra.mxu0 0.0
    %442 = vmatprep.subr.mxu0 0.0
    %443 = vmatpush1.msra.mxu0 0.0
    %444 = vmatprep.subr.mxu0 0.0
    %445 = vmatpush1.msra.mxu0 0.0
    %446 = vmatprep.subr.mxu0 0.0
    %447 = vmatpush1.msra.mxu0 0.0
    %448 = vmatprep.subr.mxu0 0.0
    %449 = vmatpush1.msra.mxu0 0.0
    %450 = vmatprep.subr.mxu0 0.0
    %451 = vmatpush1.msra.mxu0 0.0
    %452 = vmatprep.subr.mxu0 0.0
    %453 = vmatpush1.msra.mxu0 0.0
    %454 = vmatprep.subr.mxu0 0.0
    %455 = vmatpush1.msra.mxu0 0.0
    %456 = vmatprep.subr.mxu0 0.0
    %457 = vmatpush1.msra.mxu0 0.0
    %458 = vmatprep.subr.mxu0 0.0
    %459 = vmatpush1.msra.mxu0 0.0
    %460 = vmatprep.subr.mxu0 0.0
    %461 = vmatpush1.msra.mxu0 0.0
    %462 = vmatprep.subr.mxu0 0.0
    %463 = vmatpush1.msra.mxu0 0.0
    %464 = vmatprep.subr.mxu0 0.0
    %465 = vmatpush1.msra.mxu0 0.0
    %466 = vmatprep.subr.mxu0 0.0
    %467 = vmatpush1.msra.mxu0 0.0
    %468 = vmatprep.subr.mxu0 0.0
    %469 = vmatpush1.msra.mxu0 0.0
    %470 = vmatprep.subr.mxu0 0.0
    %471 = vmatpush1.msra.mxu0 0.0
    %472 = vmatprep.subr.mxu0 0.0
    %473 = vmatpush1.msra.mxu0 0.0
    %474 = vmatprep.subr.mxu0 0.0
    %475 = vmatpush1.msra.mxu0 0.0
    %476 = vmatprep.subr.mxu0 0.0
    %477 = vmatpush1.msra.mxu0 0.0
    %478 = vmatprep.subr.mxu0 0.0
    %479 = vmatpush1.msra.mxu0 0.0
    %480 = vmatprep.mubr.f32.mxu0 0.0
    %481 = vmatmul.mubr.f32.gmra.mrb[0].mxu0 %v186
    %v482 = vpop.f32.mrb[0].mxu0
    %v483 = vadd.f32 0.0, %v482
    %v484 = vpop.f32.mrb[0].mxu0
    %485 = vmatprep.mubr.f32.mxu0 0.0
    %486 = vmatmul.mubr.f32.gmra.mrb[0].mxu0 %v189
    %v487 = vpop.f32.mrb[0].mxu0
    %v488 = vadd.f32 0.0, %v487
    %v489 = vpop.f32.mrb[0].mxu0
    %490 = vdwg.mxu0
    %491 = vmatprep.subr.mxu0 0.0
    %492 = vmatpush1.msra.mxu0 %v152
    %493 = vmatprep.subr.mxu0 0.0
    %494 = vmatpush1.msra.mxu0 %v153
    %495 = vmatprep.subr.mxu0 0.0
    %496 = vmatpush1.msra.mxu0 %v154
    %497 = vmatprep.subr.mxu0 0.0
    %498 = vmatpush1.msra.mxu0 %v155
    %499 = vmatprep.subr.mxu0 0.0
    %500 = vmatpush1.msra.mxu0 0.0
    %501 = vmatprep.subr.mxu0 0.0
    %502 = vmatpush1.msra.mxu0 0.0
    %503 = vmatprep.subr.mxu0 0.0
    %504 = vmatpush1.msra.mxu0 0.0
    %505 = vmatprep.subr.mxu0 0.0
    %506 = vmatpush1.msra.mxu0 0.0
    %507 = vmatprep.subr.mxu0 0.0
    %508 = vmatpush1.msra.mxu0 0.0
    %509 = vmatprep.subr.mxu0 0.0
    %510 = vmatpush1.msra.mxu0 0.0
    %511 = vmatprep.subr.mxu0 0.0
    %512 = vmatpush1.msra.mxu0 0.0
    %513 = vmatprep.subr.mxu0 0.0
    %514 = vmatpush1.msra.mxu0 0.0
    %515 = vmatprep.subr.mxu0 0.0
    %516 = vmatpush1.msra.mxu0 0.0
    %517 = vmatprep.subr.mxu0 0.0
    %518 = vmatpush1.msra.mxu0 0.0
    %519 = vmatprep.subr.mxu0 0.0
    %520 = vmatpush1.msra.mxu0 0.0
    %521 = vmatprep.subr.mxu0 0.0
    %522 = vmatpush1.msra.mxu0 0.0
    %523 = vmatprep.subr.mxu0 0.0
    %524 = vmatpush1.msra.mxu0 0.0
    %525 = vmatprep.subr.mxu0 0.0
    %526 = vmatpush1.msra.mxu0 0.0
    %527 = vmatprep.subr.mxu0 0.0
    %528 = vmatpush1.msra.mxu0 0.0
    %529 = vmatprep.subr.mxu0 0.0
    %530 = vmatpush1.msra.mxu0 0.0
    %531 = vmatprep.subr.mxu0 0.0
    %532 = vmatpush1.msra.mxu0 0.0
    %533 = vmatprep.subr.mxu0 0.0
    %534 = vmatpush1.msra.mxu0 0.0
    %535 = vmatprep.subr.mxu0 0.0
    %536 = vmatpush1.msra.mxu0 0.0
    %537 = vmatprep.subr.mxu0 0.0
    %538 = vmatpush1.msra.mxu0 0.0
    %539 = vmatprep.subr.mxu0 0.0
    %540 = vmatpush1.msra.mxu0 0.0
    %541 = vmatprep.subr.mxu0 0.0
    %542 = vmatpush1.msra.mxu0 0.0
    %543 = vmatprep.subr.mxu0 0.0
    %544 = vmatpush1.msra.mxu0 0.0
    %545 = vmatprep.subr.mxu0 0.0
    %546 = vmatpush1.msra.mxu0 0.0
    %547 = vmatprep.subr.mxu0 0.0
    %548 = vmatpush1.msra.mxu0 0.0
    %549 = vmatprep.subr.mxu0 0.0
    %550 = vmatpush1.msra.mxu0 0.0
    %551 = vmatprep.subr.mxu0 0.0
    %552 = vmatpush1.msra.mxu0 0.0
    %553 = vmatprep.subr.mxu0 0.0
    %554 = vmatpush1.msra.mxu0 0.0
    %555 = vmatprep.mubr.f32.mxu0 0.0
    %556 = vmatmul.mubr.f32.gmra.mrb[0].mxu0 %v186
    %v557 = vpop.f32.mrb[0].mxu0
    %v558 = vadd.f32 0.0, %v557
    %v559 = vpop.f32.mrb[0].mxu0
    %560 = vmatprep.mubr.f32.mxu0 0.0
    %561 = vmatmul.mubr.f32.gmra.mrb[0].mxu0 %v189
    %v562 = vpop.f32.mrb[0].mxu0
    %v563 = vadd.f32 0.0, %v562
    %v564 = vpop.f32.mrb[0].mxu0
    %565 = vdwg.mxu0
    %566 = vmatprep.subr.mxu0 0.0
    %567 = vmatpush1.msra.mxu0 %v156
    %568 = vmatprep.subr.mxu0 0.0
    %569 = vmatpush1.msra.mxu0 %v157
    %570 = vmatprep.subr.mxu0 0.0
    %571 = vmatpush1.msra.mxu0 %v158
    %572 = vmatprep.subr.mxu0 0.0
    %573 = vmatpush1.msra.mxu0 %v159
    %574 = vmatprep.subr.mxu0 0.0
    %575 = vmatpush1.msra.mxu0 0.0
    %576 = vmatprep.subr.mxu0 0.0
    %577 = vmatpush1.msra.mxu0 0.0
    %578 = vmatprep.subr.mxu0 0.0
    %579 = vmatpush1.msra.mxu0 0.0
    %580 = vmatprep.subr.mxu0 0.0
    %581 = vmatpush1.msra.mxu0 0.0
    %582 = vmatprep.subr.mxu0 0.0
    %583 = vmatpush1.msra.mxu0 0.0
    %584 = vmatprep.subr.mxu0 0.0
    %585 = vmatpush1.msra.mxu0 0.0
    %586 = vmatprep.subr.mxu0 0.0
    %587 = vmatpush1.msra.mxu0 0.0
    %588 = vmatprep.subr.mxu0 0.0
    %589 = vmatpush1.msra.mxu0 0.0
    %590 = vmatprep.subr.mxu0 0.0
    %591 = vmatpush1.msra.mxu0 0.0
    %592 = vmatprep.subr.mxu0 0.0
    %593 = vmatpush1.msra.mxu0 0.0
    %594 = vmatprep.subr.mxu0 0.0
    %595 = vmatpush1.msra.mxu0 0.0
    %596 = vmatprep.subr.mxu0 0.0
    %597 = vmatpush1.msra.mxu0 0.0
    %598 = vmatprep.subr.mxu0 0.0
    %599 = vmatpush1.msra.mxu0 0.0
    %600 = vmatprep.subr.mxu0 0.0
    %601 = vmatpush1.msra.mxu0 0.0
    %602 = vmatprep.subr.mxu0 0.0
    %603 = vmatpush1.msra.mxu0 0.0
    %604 = vmatprep.subr.mxu0 0.0
    %605 = vmatpush1.msra.mxu0 0.0
    %606 = vmatprep.subr.mxu0 0.0
    %607 = vmatpush1.msra.mxu0 0.0
    %608 = vmatprep.subr.mxu0 0.0
    %609 = vmatpush1.msra.mxu0 0.0
    %610 = vmatprep.subr.mxu0 0.0
    %611 = vmatpush1.msra.mxu0 0.0
    %612 = vmatprep.subr.mxu0 0.0
    %613 = vmatpush1.msra.mxu0 0.0
    %614 = vmatprep.subr.mxu0 0.0
    %615 = vmatpush1.msra.mxu0 0.0
    %616 = vmatprep.subr.mxu0 0.0
    %617 = vmatpush1.msra.mxu0 0.0
    %618 = vmatprep.subr.mxu0 0.0
    %619 = vmatpush1.msra.mxu0 0.0
    %620 = vmatprep.subr.mxu0 0.0
    %621 = vmatpush1.msra.mxu0 0.0
    %622 = vmatprep.subr.mxu0 0.0
    %623 = vmatpush1.msra.mxu0 0.0
    %624 = vmatprep.subr.mxu0 0.0
    %625 = vmatpush1.msra.mxu0 0.0
    %626 = vmatprep.subr.mxu0 0.0
    %627 = vmatpush1.msra.mxu0 0.0
    %628 = vmatprep.subr.mxu0 0.0
    %629 = vmatpush1.msra.mxu0 0.0
    %630 = vmatprep.mubr.f32.mxu0 0.0
    %631 = vmatmul.mubr.f32.gmra.mrb[0].mxu0 %v186
    %v632 = vpop.f32.mrb[0].mxu0
    %v633 = vadd.f32 0.0, %v632
    %v634 = vpop.f32.mrb[0].mxu0
    %635 = vmatprep.mubr.f32.mxu0 0.0
    %636 = vmatmul.mubr.f32.gmra.mrb[0].mxu0 %v189
    %v637 = vpop.f32.mrb[0].mxu0
    %v638 = vadd.f32 0.0, %v637
    %v639 = vpop.f32.mrb[0].mxu0
    %640 = vdwg.mxu0
    %641 = vmatprep.subr.mxu0 0.0
    %642 = vmatpush1.msra.mxu0 %v160
    %643 = vmatprep.subr.mxu0 0.0
    %644 = vmatpush1.msra.mxu0 %v161
    %645 = vmatprep.subr.mxu0 0.0
    %646 = vmatpush1.msra.mxu0 %v162
    %647 = vmatprep.subr.mxu0 0.0
    %648 = vmatpush1.msra.mxu0 %v163
    %649 = vmatprep.subr.mxu0 0.0
    %650 = vmatpush1.msra.mxu0 0.0
    %651 = vmatprep.subr.mxu0 0.0
    %652 = vmatpush1.msra.mxu0 0.0
    %653 = vmatprep.subr.mxu0 0.0
    %654 = vmatpush1.msra.mxu0 0.0
    %655 = vmatprep.subr.mxu0 0.0
    %656 = vmatpush1.msra.mxu0 0.0
    %657 = vmatprep.subr.mxu0 0.0
    %658 = vmatpush1.msra.mxu0 0.0
    %659 = vmatprep.subr.mxu0 0.0
    %660 = vmatpush1.msra.mxu0 0.0
    %661 = vmatprep.subr.mxu0 0.0
    %662 = vmatpush1.msra.mxu0 0.0
    %663 = vmatprep.subr.mxu0 0.0
    %664 = vmatpush1.msra.mxu0 0.0
    %665 = vmatprep.subr.mxu0 0.0
    %666 = vmatpush1.msra.mxu0 0.0
    %667 = vmatprep.subr.mxu0 0.0
    %668 = vmatpush1.msra.mxu0 0.0
    %669 = vmatprep.subr.mxu0 0.0
    %670 = vmatpush1.msra.mxu0 0.0
    %671 = vmatprep.subr.mxu0 0.0
    %672 = vmatpush1.msra.mxu0 0.0
    %673 = vmatprep.subr.mxu0 0.0
    %674 = vmatpush1.msra.mxu0 0.0
    %675 = vmatprep.subr.mxu0 0.0
    %676 = vmatpush1.msra.mxu0 0.0
    %677 = vmatprep.subr.mxu0 0.0
    %678 = vmatpush1.msra.mxu0 0.0
    %679 = vmatprep.subr.mxu0 0.0
    %680 = vmatpush1.msra.mxu0 0.0
    %681 = vmatprep.subr.mxu0 0.0
    %682 = vmatpush1.msra.mxu0 0.0
    %683 = vmatprep.subr.mxu0 0.0
    %684 = vmatpush1.msra.mxu0 0.0
    %685 = vmatprep.subr.mxu0 0.0
    %686 = vmatpush1.msra.mxu0 0.0
    %687 = vmatprep.subr.mxu0 0.0
    %688 = vmatpush1.msra.mxu0 0.0
    %689 = vmatprep.subr.mxu0 0.0
    %690 = vmatpush1.msra.mxu0 0.0
    %691 = vmatprep.subr.mxu0 0.0
    %692 = vmatpush1.msra.mxu0 0.0
    %693 = vmatprep.subr.mxu0 0.0
    %694 = vmatpush1.msra.mxu0 0.0
    %695 = vmatprep.subr.mxu0 0.0
    %696 = vmatpush1.msra.mxu0 0.0
    %697 = vmatprep.subr.mxu0 0.0
    %698 = vmatpush1.msra.mxu0 0.0
    %699 = vmatprep.subr.mxu0 0.0
    %700 = vmatpush1.msra.mxu0 0.0
    %701 = vmatprep.subr.mxu0 0.0
    %702 = vmatpush1.msra.mxu0 0.0
    %703 = vmatprep.subr.mxu0 0.0
    %704 = vmatpush1.msra.mxu0 0.0
    %705 = vmatprep.mubr.f32.mxu0 0.0
    %706 = vmatmul.mubr.f32.gmra.mrb[0].mxu0 %v186
    %v707 = vpop.f32.mrb[0].mxu0
    %v708 = vadd.f32 0.0, %v707
    %v709 = vpop.f32.mrb[0].mxu0
    %710 = vmatprep.mubr.f32.mxu0 0.0
    %711 = vmatmul.mubr.f32.gmra.mrb[0].mxu0 %v189
    %v712 = vpop.f32.mrb[0].mxu0
    %v713 = vadd.f32 0.0, %v712
    %v714 = vpop.f32.mrb[0].mxu0
    %715 = vdwg.mxu0
    %716 = vmatprep.subr.mxu0 0.0
    %717 = vmatpush1.msra.mxu0 %v164
    %718 = vmatprep.subr.mxu0 0.0
    %719 = vmatpush1.msra.mxu0 %v165
    %720 = vmatprep.subr.mxu0 0.0
    %721 = vmatpush1.msra.mxu0 %v166
    %722 = vmatprep.subr.mxu0 0.0
    %723 = vmatpush1.msra.mxu0 %v167
    %724 = vmatprep.subr.mxu0 0.0
    %725 = vmatpush1.msra.mxu0 0.0
    %726 = vmatprep.subr.mxu0 0.0
    %727 = vmatpush1.msra.mxu0 0.0
    %728 = vmatprep.subr.mxu0 0.0
    %729 = vmatpush1.msra.mxu0 0.0
    %730 = vmatprep.subr.mxu0 0.0
    %731 = vmatpush1.msra.mxu0 0.0
    %732 = vmatprep.subr.mxu0 0.0
    %733 = vmatpush1.msra.mxu0 0.0
    %734 = vmatprep.subr.mxu0 0.0
    %735 = vmatpush1.msra.mxu0 0.0
    %736 = vmatprep.subr.mxu0 0.0
    %737 = vmatpush1.msra.mxu0 0.0
    %738 = vmatprep.subr.mxu0 0.0
    %739 = vmatpush1.msra.mxu0 0.0
    %740 = vmatprep.subr.mxu0 0.0
    %741 = vmatpush1.msra.mxu0 0.0
    %742 = vmatprep.subr.mxu0 0.0
    %743 = vmatpush1.msra.mxu0 0.0
    %744 = vmatprep.subr.mxu0 0.0
    %745 = vmatpush1.msra.mxu0 0.0
    %746 = vmatprep.subr.mxu0 0.0
    %747 = vmatpush1.msra.mxu0 0.0
    %748 = vmatprep.subr.mxu0 0.0
    %749 = vmatpush1.msra.mxu0 0.0
    %750 = vmatprep.subr.mxu0 0.0
    %751 = vmatpush1.msra.mxu0 0.0
    %752 = vmatprep.subr.mxu0 0.0
    %753 = vmatpush1.msra.mxu0 0.0
    %754 = vmatprep.subr.mxu0 0.0
    %755 = vmatpush1.msra.mxu0 0.0
    %756 = vmatprep.subr.mxu0 0.0
    %757 = vmatpush1.msra.mxu0 0.0
    %758 = vmatprep.subr.mxu0 0.0
    %759 = vmatpush1.msra.mxu0 0.0
    %760 = vmatprep.subr.mxu0 0.0
    %761 = vmatpush1.msra.mxu0 0.0
    %762 = vmatprep.subr.mxu0 0.0
    %763 = vmatpush1.msra.mxu0 0.0
    %764 = vmatprep.subr.mxu0 0.0
    %765 = vmatpush1.msra.mxu0 0.0
    %766 = vmatprep.subr.mxu0 0.0
    %767 = vmatpush1.msra.mxu0 0.0
    %768 = vmatprep.subr.mxu0 0.0
    %769 = vmatpush1.msra.mxu0 0.0
    %770 = vmatprep.subr.mxu0 0.0
    %771 = vmatpush1.msra.mxu0 0.0
    %772 = vmatprep.subr.mxu0 0.0
    %773 = vmatpush1.msra.mxu0 0.0
    %774 = vmatprep.subr.mxu0 0.0
    %775 = vmatpush1.msra.mxu0 0.0
    %776 = vmatprep.subr.mxu0 0.0
    %777 = vmatpush1.msra.mxu0 0.0
    %778 = vmatprep.subr.mxu0 0.0
    %779 = vmatpush1.msra.mxu0 0.0
    %780 = vmatprep.mubr.f32.mxu0 0.0
    %781 = vmatmul.mubr.f32.gmra.mrb[0].mxu0 %v186
    %v782 = vpop.f32.mrb[0].mxu0
    %v783 = vadd.f32 0.0, %v782
    %v784 = vpop.f32.mrb[0].mxu0
    %785 = vmatprep.mubr.f32.mxu0 0.0
    %786 = vmatmul.mubr.f32.gmra.mrb[0].mxu0 %v189
    %v787 = vpop.f32.mrb[0].mxu0
    %v788 = vadd.f32 0.0, %v787
    %v789 = vpop.f32.mrb[0].mxu0
    %790 = vdwg.mxu0
    %791 = vmatprep.subr.mxu0 0.0
    %792 = vmatpush1.msra.mxu0 %v168
    %793 = vmatprep.subr.mxu0 0.0
    %794 = vmatpush1.msra.mxu0 %v169
    %795 = vmatprep.subr.mxu0 0.0
    %796 = vmatpush1.msra.mxu0 %v170
    %797 = vmatprep.subr.mxu0 0.0
    %798 = vmatpush1.msra.mxu0 %v171
    %799 = vmatprep.subr.mxu0 0.0
    %800 = vmatpush1.msra.mxu0 0.0
    %801 = vmatprep.subr.mxu0 0.0
    %802 = vmatpush1.msra.mxu0 0.0
    %803 = vmatprep.subr.mxu0 0.0
    %804 = vmatpush1.msra.mxu0 0.0
    %805 = vmatprep.subr.mxu0 0.0
    %806 = vmatpush1.msra.mxu0 0.0
    %807 = vmatprep.subr.mxu0 0.0
    %808 = vmatpush1.msra.mxu0 0.0
    %809 = vmatprep.subr.mxu0 0.0
    %810 = vmatpush1.msra.mxu0 0.0
    %811 = vmatprep.subr.mxu0 0.0
    %812 = vmatpush1.msra.mxu0 0.0
    %813 = vmatprep.subr.mxu0 0.0
    %814 = vmatpush1.msra.mxu0 0.0
    %815 = vmatprep.subr.mxu0 0.0
    %816 = vmatpush1.msra.mxu0 0.0
    %817 = vmatprep.subr.mxu0 0.0
    %818 = vmatpush1.msra.mxu0 0.0
    %819 = vmatprep.subr.mxu0 0.0
    %820 = vmatpush1.msra.mxu0 0.0
    %821 = vmatprep.subr.mxu0 0.0
    %822 = vmatpush1.msra.mxu0 0.0
    %823 = vmatprep.subr.mxu0 0.0
    %824 = vmatpush1.msra.mxu0 0.0
    %825 = vmatprep.subr.mxu0 0.0
    %826 = vmatpush1.msra.mxu0 0.0
    %827 = vmatprep.subr.mxu0 0.0
    %828 = vmatpush1.msra.mxu0 0.0
    %829 = vmatprep.subr.mxu0 0.0
    %830 = vmatpush1.msra.mxu0 0.0
    %831 = vmatprep.subr.mxu0 0.0
    %832 = vmatpush1.msra.mxu0 0.0
    %833 = vmatprep.subr.mxu0 0.0
    %834 = vmatpush1.msra.mxu0 0.0
    %835 = vmatprep.subr.mxu0 0.0
    %836 = vmatpush1.msra.mxu0 0.0
    %837 = vmatprep.subr.mxu0 0.0
    %838 = vmatpush1.msra.mxu0 0.0
    %839 = vmatprep.subr.mxu0 0.0
    %840 = vmatpush1.msra.mxu0 0.0
    %841 = vmatprep.subr.mxu0 0.0
    %842 = vmatpush1.msra.mxu0 0.0
    %843 = vmatprep.subr.mxu0 0.0
    %844 = vmatpush1.msra.mxu0 0.0
    %845 = vmatprep.subr.mxu0 0.0
    %846 = vmatpush1.msra.mxu0 0.0
    %847 = vmatprep.subr.mxu0 0.0
    %848 = vmatpush1.msra.mxu0 0.0
    %849 = vmatprep.subr.mxu0 0.0
    %850 = vmatpush1.msra.mxu0 0.0
    %851 = vmatprep.subr.mxu0 0.0
    %852 = vmatpush1.msra.mxu0 0.0
    %853 = vmatprep.subr.mxu0 0.0
    %854 = vmatpush1.msra.mxu0 0.0
    %855 = vmatprep.mubr.f32.mxu0 0.0
    %856 = vmatmul.mubr.f32.gmra.mrb[0].mxu0 %v186
    %v857 = vpop.f32.mrb[0].mxu0
    %v858 = vadd.f32 0.0, %v857
    %v859 = vpop.f32.mrb[0].mxu0
    %860 = vmatprep.mubr.f32.mxu0 0.0
    %861 = vmatmul.mubr.f32.gmra.mrb[0].mxu0 %v189
    %v862 = vpop.f32.mrb[0].mxu0
    %v863 = vadd.f32 0.0, %v862
    %v864 = vpop.f32.mrb[0].mxu0
    %865 = vdwg.mxu0
    %866 = vmatprep.subr.mxu0 0.0
    %867 = vmatpush1.msra.mxu0 %v172
    %868 = vmatprep.subr.mxu0 0.0
    %869 = vmatpush1.msra.mxu0 %v173
    %870 = vmatprep.subr.mxu0 0.0
    %871 = vmatpush1.msra.mxu0 %v174
    %872 = vmatprep.subr.mxu0 0.0
    %873 = vmatpush1.msra.mxu0 %v175
    %874 = vmatprep.subr.mxu0 0.0
    %875 = vmatpush1.msra.mxu0 0.0
    %876 = vmatprep.subr.mxu0 0.0
    %877 = vmatpush1.msra.mxu0 0.0
    %878 = vmatprep.subr.mxu0 0.0
    %879 = vmatpush1.msra.mxu0 0.0
    %880 = vmatprep.subr.mxu0 0.0
    %881 = vmatpush1.msra.mxu0 0.0
    %882 = vmatprep.subr.mxu0 0.0
    %883 = vmatpush1.msra.mxu0 0.0
    %884 = vmatprep.subr.mxu0 0.0
    %885 = vmatpush1.msra.mxu0 0.0
    %886 = vmatprep.subr.mxu0 0.0
    %887 = vmatpush1.msra.mxu0 0.0
    %888 = vmatprep.subr.mxu0 0.0
    %889 = vmatpush1.msra.mxu0 0.0
    %890 = vmatprep.subr.mxu0 0.0
    %891 = vmatpush1.msra.mxu0 0.0
    %892 = vmatprep.subr.mxu0 0.0
    %893 = vmatpush1.msra.mxu0 0.0
    %894 = vmatprep.subr.mxu0 0.0
    %895 = vmatpush1.msra.mxu0 0.0
    %896 = vmatprep.subr.mxu0 0.0
    %897 = vmatpush1.msra.mxu0 0.0
    %898 = vmatprep.subr.mxu0 0.0
    %899 = vmatpush1.msra.mxu0 0.0
    %900 = vmatprep.subr.mxu0 0.0
    %901 = vmatpush1.msra.mxu0 0.0
    %902 = vmatprep.subr.mxu0 0.0
    %903 = vmatpush1.msra.mxu0 0.0
    %904 = vmatprep.subr.mxu0 0.0
    %905 = vmatpush1.msra.mxu0 0.0
    %906 = vmatprep.subr.mxu0 0.0
    %907 = vmatpush1.msra.mxu0 0.0
    %908 = vmatprep.subr.mxu0 0.0
    %909 = vmatpush1.msra.mxu0 0.0
    %910 = vmatprep.subr.mxu0 0.0
    %911 = vmatpush1.msra.mxu0 0.0
    %912 = vmatprep.subr.mxu0 0.0
    %913 = vmatpush1.msra.mxu0 0.0
    %914 = vmatprep.subr.mxu0 0.0
    %915 = vmatpush1.msra.mxu0 0.0
    %916 = vmatprep.subr.mxu0 0.0
    %917 = vmatpush1.msra.mxu0 0.0
    %918 = vmatprep.subr.mxu0 0.0
    %919 = vmatpush1.msra.mxu0 0.0
    %920 = vmatprep.subr.mxu0 0.0
    %921 = vmatpush1.msra.mxu0 0.0
    %922 = vmatprep.subr.mxu0 0.0
    %923 = vmatpush1.msra.mxu0 0.0
    %924 = vmatprep.subr.mxu0 0.0
    %925 = vmatpush1.msra.mxu0 0.0
    %926 = vmatprep.subr.mxu0 0.0
    %927 = vmatpush1.msra.mxu0 0.0
    %928 = vmatprep.subr.mxu0 0.0
    %929 = vmatpush1.msra.mxu0 0.0
    %930 = vmatprep.mubr.f32.mxu0 0.0
    %931 = vmatmul.mubr.f32.gmra.mrb[0].mxu0 %v186
    %v932 = vpop.f32.mrb[0].mxu0
    %v933 = vadd.f32 0.0, %v932
    %v934 = vpop.f32.mrb[0].mxu0
    %935 = vmatprep.mubr.f32.mxu0 0.0
    %936 = vmatmul.mubr.f32.gmra.mrb[0].mxu0 %v189
    %v937 = vpop.f32.mrb[0].mxu0
    %v938 = vadd.f32 0.0, %v937
    %v939 = vpop.f32.mrb[0].mxu0
    %940 = vdwg.mxu0
    %941 = vmatprep.subr.mxu0 0.0
    %942 = vmatpush1.msra.mxu0 %v176
    %943 = vmatprep.subr.mxu0 0.0
    %944 = vmatpush1.msra.mxu0 %v177
    %945 = vmatprep.subr.mxu0 0.0
    %946 = vmatpush1.msra.mxu0 %v178
    %947 = vmatprep.subr.mxu0 0.0
    %948 = vmatpush1.msra.mxu0 %v179
    %949 = vmatprep.subr.mxu0 0.0
    %950 = vmatpush1.msra.mxu0 0.0
    %951 = vmatprep.subr.mxu0 0.0
    %952 = vmatpush1.msra.mxu0 0.0
    %953 = vmatprep.subr.mxu0 0.0
    %954 = vmatpush1.msra.mxu0 0.0
    %955 = vmatprep.subr.mxu0 0.0
    %956 = vmatpush1.msra.mxu0 0.0
    %957 = vmatprep.subr.mxu0 0.0
    %958 = vmatpush1.msra.mxu0 0.0
    %959 = vmatprep.subr.mxu0 0.0
    %960 = vmatpush1.msra.mxu0 0.0
    %961 = vmatprep.subr.mxu0 0.0
    %962 = vmatpush1.msra.mxu0 0.0
    %963 = vmatprep.subr.mxu0 0.0
    %964 = vmatpush1.msra.mxu0 0.0
    %965 = vmatprep.subr.mxu0 0.0
    %966 = vmatpush1.msra.mxu0 0.0
    %967 = vmatprep.subr.mxu0 0.0
    %968 = vmatpush1.msra.mxu0 0.0
    %969 = vmatprep.subr.mxu0 0.0
    %970 = vmatpush1.msra.mxu0 0.0
    %971 = vmatprep.subr.mxu0 0.0
    %972 = vmatpush1.msra.mxu0 0.0
    %973 = vmatprep.subr.mxu0 0.0
    %974 = vmatpush1.msra.mxu0 0.0
    %975 = vmatprep.subr.mxu0 0.0
    %976 = vmatpush1.msra.mxu0 0.0
    %977 = vmatprep.subr.mxu0 0.0
    %978 = vmatpush1.msra.mxu0 0.0
    %979 = vmatprep.subr.mxu0 0.0
    %980 = vmatpush1.msra.mxu0 0.0
    %981 = vmatprep.subr.mxu0 0.0
    %982 = vmatpush1.msra.mxu0 0.0
    %983 = vmatprep.subr.mxu0 0.0
    %984 = vmatpush1.msra.mxu0 0.0
    %985 = vmatprep.subr.mxu0 0.0
    %986 = vmatpush1.msra.mxu0 0.0
    %987 = vmatprep.subr.mxu0 0.0
    %988 = vmatpush1.msra.mxu0 0.0
    %989 = vmatprep.subr.mxu0 0.0
    %990 = vmatpush1.msra.mxu0 0.0
    %991 = vmatprep.subr.mxu0 0.0
    %992 = vmatpush1.msra.mxu0 0.0
    %993 = vmatprep.subr.mxu0 0.0
    %994 = vmatpush1.msra.mxu0 0.0
    %995 = vmatprep.subr.mxu0 0.0
    %996 = vmatpush1.msra.mxu0 0.0
    %997 = vmatprep.subr.mxu0 0.0
    %998 = vmatpush1.msra.mxu0 0.0
    %999 = vmatprep.subr.mxu0 0.0
    %1000 = vmatpush1.msra.mxu0 0.0
    %1001 = vmatprep.subr.mxu0 0.0
    %1002 = vmatpush1.msra.mxu0 0.0
    %1003 = vmatprep.subr.mxu0 0.0
    %1004 = vmatpush1.msra.mxu0 0.0
    %1005 = vmatprep.mubr.f32.mxu0 0.0
    %1006 = vmatmul.mubr.f32.gmra.mrb[0].mxu0 %v186
    %v1007 = vpop.f32.mrb[0].mxu0
    %v1008 = vadd.f32 0.0, %v1007
    %v1009 = vpop.f32.mrb[0].mxu0
    %1010 = vmatprep.mubr.f32.mxu0 0.0
    %1011 = vmatmul.mubr.f32.gmra.mrb[0].mxu0 %v189
    %v1012 = vpop.f32.mrb[0].mxu0
    %v1013 = vadd.f32 0.0, %v1012
    %v1014 = vpop.f32.mrb[0].mxu0
    %1015 = vdwg.mxu0
    %1016 = vmatprep.subr.mxu0 0.0
    %1017 = vmatpush1.msra.mxu0 %v180
    %1018 = vmatprep.subr.mxu0 0.0
    %1019 = vmatpush1.msra.mxu0 %v181
    %1020 = vmatprep.subr.mxu0 0.0
    %1021 = vmatpush1.msra.mxu0 %v182
    %1022 = vmatprep.subr.mxu0 0.0
    %1023 = vmatpush1.msra.mxu0 %v183
    %1024 = vmatprep.subr.mxu0 0.0
    %1025 = vmatpush1.msra.mxu0 0.0
    %1026 = vmatprep.subr.mxu0 0.0
    %1027 = vmatpush1.msra.mxu0 0.0
    %1028 = vmatprep.subr.mxu0 0.0
    %1029 = vmatpush1.msra.mxu0 0.0
    %1030 = vmatprep.subr.mxu0 0.0
    %1031 = vmatpush1.msra.mxu0 0.0
    %1032 = vmatprep.subr.mxu0 0.0
    %1033 = vmatpush1.msra.mxu0 0.0
    %1034 = vmatprep.subr.mxu0 0.0
    %1035 = vmatpush1.msra.mxu0 0.0
    %1036 = vmatprep.subr.mxu0 0.0
    %1037 = vmatpush1.msra.mxu0 0.0
    %1038 = vmatprep.subr.mxu0 0.0
    %1039 = vmatpush1.msra.mxu0 0.0
    %1040 = vmatprep.subr.mxu0 0.0
    %1041 = vmatpush1.msra.mxu0 0.0
    %1042 = vmatprep.subr.mxu0 0.0
    %1043 = vmatpush1.msra.mxu0 0.0
    %1044 = vmatprep.subr.mxu0 0.0
    %1045 = vmatpush1.msra.mxu0 0.0
    %1046 = vmatprep.subr.mxu0 0.0
    %1047 = vmatpush1.msra.mxu0 0.0
    %1048 = vmatprep.subr.mxu0 0.0
    %1049 = vmatpush1.msra.mxu0 0.0
    %1050 = vmatprep.subr.mxu0 0.0
    %1051 = vmatpush1.msra.mxu0 0.0
    %1052 = vmatprep.subr.mxu0 0.0
    %1053 = vmatpush1.msra.mxu0 0.0
    %1054 = vmatprep.subr.mxu0 0.0
    %1055 = vmatpush1.msra.mxu0 0.0
    %1056 = vmatprep.subr.mxu0 0.0
    %1057 = vmatpush1.msra.mxu0 0.0
    %1058 = vmatprep.subr.mxu0 0.0
    %1059 = vmatpush1.msra.mxu0 0.0
    %1060 = vmatprep.subr.mxu0 0.0
    %1061 = vmatpush1.msra.mxu0 0.0
    %1062 = vmatprep.subr.mxu0 0.0
    %1063 = vmatpush1.msra.mxu0 0.0
    %1064 = vmatprep.subr.mxu0 0.0
    %1065 = vmatpush1.msra.mxu0 0.0
    %1066 = vmatprep.subr.mxu0 0.0
    %1067 = vmatpush1.msra.mxu0 0.0
    %1068 = vmatprep.subr.mxu0 0.0
    %1069 = vmatpush1.msra.mxu0 0.0
    %1070 = vmatprep.subr.mxu0 0.0
    %1071 = vmatpush1.msra.mxu0 0.0
    %1072 = vmatprep.subr.mxu0 0.0
    %1073 = vmatpush1.msra.mxu0 0.0
    %1074 = vmatprep.subr.mxu0 0.0
    %1075 = vmatpush1.msra.mxu0 0.0
    %1076 = vmatprep.subr.mxu0 0.0
    %1077 = vmatpush1.msra.mxu0 0.0
    %1078 = vmatprep.subr.mxu0 0.0
    %1079 = vmatpush1.msra.mxu0 0.0
    %1080 = vmatprep.mubr.f32.mxu0 0.0
    %1081 = vmatmul.mubr.f32.gmra.mrb[0].mxu0 %v186
    %v1082 = vpop.f32.mrb[0].mxu0
    %v1083 = vadd.f32 0.0, %v1082
    %v1084 = vpop.f32.mrb[0].mxu0
    %1085 = vmatprep.mubr.f32.mxu0 0.0
    %1086 = vmatmul.mubr.f32.gmra.mrb[0].mxu0 %v189
    %v1087 = vpop.f32.mrb[0].mxu0
    %v1088 = vadd.f32 0.0, %v1087
    %v1089 = vpop.f32.mrb[0].mxu0
    %1090 = vdwg.mxu0
    %v1092 = vsel %vm184, %v258, 0
    %v1095 = vsel %vm184, %v558, 0
    %1097 = vmatprep.subr.mxu0 0.0
    %1098 = vmatpush1.xpose.msra.mxu0 %v1095
    %1099 = vmatprep.subr.mxu0 0.0
    %1100 = vmatpush1.xpose.msra.mxu0 0.0
    %1101 = vmatprep.subr.mxu0 0.0
    %1102 = vmatpush1.xpose.msra.mxu0 0.0
    %1103 = vmatprep.subr.mxu0 0.0
    %1104 = vmatpush1.xpose.msra.mxu0 0.0
    %1105 = vmatprep.subr.mxu0 0.0
    %1106 = vmatpush1.xpose.msra.mxu0 0.0
    %1107 = vmatprep.subr.mxu0 0.0
    %1108 = vmatpush1.xpose.msra.mxu0 0.0
    %1109 = vmatprep.subr.mxu0 0.0
    %1110 = vmatpush1.xpose.msra.mxu0 0.0
    %1111 = vmatprep.subr.mxu0 0.0
    %1112 = vmatpush1.xpose.msra.mxu0 0.0
    %1113 = vmatprep.subr.mxu0 0.0
    %1114 = vmatpush1.xpose.msra.mxu0 0.0
    %1115 = vmatprep.subr.mxu0 0.0
    %1116 = vmatpush1.xpose.msra.mxu0 0.0
    %1117 = vmatprep.subr.mxu0 0.0
    %1118 = vmatpush1.xpose.msra.mxu0 0.0
    %1119 = vmatprep.subr.mxu0 0.0
    %1120 = vmatpush1.xpose.msra.mxu0 0.0
    %1121 = vmatprep.subr.mxu0 0.0
    %1122 = vmatpush1.xpose.msra.mxu0 0.0
    %1123 = vmatprep.subr.mxu0 0.0
    %1124 = vmatpush1.xpose.msra.mxu0 0.0
    %1125 = vmatprep.subr.mxu0 0.0
    %1126 = vmatpush1.xpose.msra.mxu0 0.0
    %1127 = vmatprep.subr.mxu0 0.0
    %1128 = vmatpush1.xpose.msra.mxu0 0.0
    %1129 = vmatprep.subr.mxu0 0.0
    %1130 = vmatpush1.xpose.msra.mxu0 0.0
    %1131 = vmatprep.subr.mxu0 0.0
    %1132 = vmatpush1.xpose.msra.mxu0 0.0
    %1133 = vmatprep.subr.mxu0 0.0
    %1134 = vmatpush1.xpose.msra.mxu0 0.0
    %1135 = vmatprep.subr.mxu0 0.0
    %1136 = vmatpush1.xpose.msra.mxu0 0.0
    %1137 = vmatprep.subr.mxu0 0.0
    %1138 = vmatpush1.xpose.msra.mxu0 0.0
    %1139 = vmatprep.subr.mxu0 0.0
    %1140 = vmatpush1.xpose.msra.mxu0 0.0
    %1141 = vmatprep.subr.mxu0 0.0
    %1142 = vmatpush1.xpose.msra.mxu0 0.0
    %1143 = vmatprep.subr.mxu0 0.0
    %1144 = vmatpush1.xpose.msra.mxu0 0.0
    %1145 = vmatprep.subr.mxu0 0.0
    %1146 = vmatpush1.xpose.msra.mxu0 0.0
    %1147 = vmatprep.subr.mxu0 0.0
    %1148 = vmatpush1.xpose.msra.mxu0 0.0
    %1149 = vmatprep.subr.mxu0 0.0
    %1150 = vmatpush1.xpose.msra.mxu0 0.0
    %1151 = vmatprep.subr.mxu0 0.0
    %1152 = vmatpush1.xpose.msra.mxu0 0.0
    %1153 = vmatprep.subr.mxu0 0.0
    %1154 = vmatpush1.xpose.msra.mxu0 0.0
    %1155 = vmatprep.subr.mxu0 0.0
    %1156 = vmatpush1.xpose.msra.mxu0 0.0
    %1157 = vmatprep.subr.mxu0 0.0
    %1158 = vmatpush1.xpose.msra.mxu0 0.0
    %1159 = vmatprep.subr.mxu0 0.0
    %1160 = vmatpush1.xpose.msra.mxu0 0.0
    %1161 = vmatprep.mubr.f32.mxu0 0.0
    %1162 = vmatmul.mubr.f32.gmra.mrb[0].mxu0 %v1092
    %v1163 = vpop.f32.mrb[0].mxu0
    %v1164 = vadd.f32 0.0, %v1163
    %v1165 = vpop.f32.mrb[0].mxu0
    %1166 = vdwg.mxu0
    %v1168 = vsel %vm184, %v263, 0
    %v1171 = vsel %vm184, %v563, 0
    %1173 = vmatprep.subr.mxu0 0.0
    %1174 = vmatpush1.xpose.msra.mxu0 %v1171
    %1175 = vmatprep.subr.mxu0 0.0
    %1176 = vmatpush1.xpose.msra.mxu0 0.0
    %1177 = vmatprep.subr.mxu0 0.0
    %1178 = vmatpush1.xpose.msra.mxu0 0.0
    %1179 = vmatprep.subr.mxu0 0.0
    %1180 = vmatpush1.xpose.msra.mxu0 0.0
    %1181 = vmatprep.subr.mxu0 0.0
    %1182 = vmatpush1.xpose.msra.mxu0 0.0
    %1183 = vmatprep.subr.mxu0 0.0
    %1184 = vmatpush1.xpose.msra.mxu0 0.0
    %1185 = vmatprep.subr.mxu0 0.0
    %1186 = vmatpush1.xpose.msra.mxu0 0.0
    %1187 = vmatprep.subr.mxu0 0.0
    %1188 = vmatpush1.xpose.msra.mxu0 0.0
    %1189 = vmatprep.subr.mxu0 0.0
    %1190 = vmatpush1.xpose.msra.mxu0 0.0
    %1191 = vmatprep.subr.mxu0 0.0
    %1192 = vmatpush1.xpose.msra.mxu0 0.0
    %1193 = vmatprep.subr.mxu0 0.0
    %1194 = vmatpush1.xpose.msra.mxu0 0.0
    %1195 = vmatprep.subr.mxu0 0.0
    %1196 = vmatpush1.xpose.msra.mxu0 0.0
    %1197 = vmatprep.subr.mxu0 0.0
    %1198 = vmatpush1.xpose.msra.mxu0 0.0
    %1199 = vmatprep.subr.mxu0 0.0
    %1200 = vmatpush1.xpose.msra.mxu0 0.0
    %1201 = vmatprep.subr.mxu0 0.0
    %1202 = vmatpush1.xpose.msra.mxu0 0.0
    %1203 = vmatprep.subr.mxu0 0.0
    %1204 = vmatpush1.xpose.msra.mxu0 0.0
    %1205 = vmatprep.subr.mxu0 0.0
    %1206 = vmatpush1.xpose.msra.mxu0 0.0
    %1207 = vmatprep.subr.mxu0 0.0
    %1208 = vmatpush1.xpose.msra.mxu0 0.0
    %1209 = vmatprep.subr.mxu0 0.0
    %1210 = vmatpush1.xpose.msra.mxu0 0.0
    %1211 = vmatprep.subr.mxu0 0.0
    %1212 = vmatpush1.xpose.msra.mxu0 0.0
    %1213 = vmatprep.subr.mxu0 0.0
    %1214 = vmatpush1.xpose.msra.mxu0 0.0
    %1215 = vmatprep.subr.mxu0 0.0
    %1216 = vmatpush1.xpose.msra.mxu0 0.0
    %1217 = vmatprep.subr.mxu0 0.0
    %1218 = vmatpush1.xpose.msra.mxu0 0.0
    %1219 = vmatprep.subr.mxu0 0.0
    %1220 = vmatpush1.xpose.msra.mxu0 0.0
    %1221 = vmatprep.subr.mxu0 0.0
    %1222 = vmatpush1.xpose.msra.mxu0 0.0
    %1223 = vmatprep.subr.mxu0 0.0
    %1224 = vmatpush1.xpose.msra.mxu0 0.0
    %1225 = vmatprep.subr.mxu0 0.0
    %1226 = vmatpush1.xpose.msra.mxu0 0.0
    %1227 = vmatprep.subr.mxu0 0.0
    %1228 = vmatpush1.xpose.msra.mxu0 0.0
    %1229 = vmatprep.subr.mxu0 0.0
    %1230 = vmatpush1.xpose.msra.mxu0 0.0
    %1231 = vmatprep.subr.mxu0 0.0
    %1232 = vmatpush1.xpose.msra.mxu0 0.0
    %1233 = vmatprep.subr.mxu0 0.0
    %1234 = vmatpush1.xpose.msra.mxu0 0.0
    %1235 = vmatprep.subr.mxu0 0.0
    %1236 = vmatpush1.xpose.msra.mxu0 0.0
    %1237 = vmatprep.mubr.f32.mxu0 0.0
    %1238 = vmatmul.mubr.f32.gmra.mrb[0].mxu0 %v1168
    %v1239 = vpop.f32.mrb[0].mxu0
    %v1240 = vadd.f32 0.0, %v1239
    %v1241 = vpop.f32.mrb[0].mxu0
    %1242 = vdwg.mxu0
    %v1244 = vsel %vm184, %v333, 0
    %v1247 = vsel %vm184, %v633, 0
    %1249 = vmatprep.subr.mxu0 0.0
    %1250 = vmatpush1.xpose.msra.mxu0 %v1247
    %1251 = vmatprep.subr.mxu0 0.0
    %1252 = vmatpush1.xpose.msra.mxu0 0.0
    %1253 = vmatprep.subr.mxu0 0.0
    %1254 = vmatpush1.xpose.msra.mxu0 0.0
    %1255 = vmatprep.subr.mxu0 0.0
    %1256 = vmatpush1.xpose.msra.mxu0 0.0
    %1257 = vmatprep.subr.mxu0 0.0
    %1258 = vmatpush1.xpose.msra.mxu0 0.0
    %1259 = vmatprep.subr.mxu0 0.0
    %1260 = vmatpush1.xpose.msra.mxu0 0.0
    %1261 = vmatprep.subr.mxu0 0.0
    %1262 = vmatpush1.xpose.msra.mxu0 0.0
    %1263 = vmatprep.subr.mxu0 0.0
    %1264 = vmatpush1.xpose.msra.mxu0 0.0
    %1265 = vmatprep.subr.mxu0 0.0
    %1266 = vmatpush1.xpose.msra.mxu0 0.0
    %1267 = vmatprep.subr.mxu0 0.0
    %1268 = vmatpush1.xpose.msra.mxu0 0.0
    %1269 = vmatprep.subr.mxu0 0.0
    %1270 = vmatpush1.xpose.msra.mxu0 0.0
    %1271 = vmatprep.subr.mxu0 0.0
    %1272 = vmatpush1.xpose.msra.mxu0 0.0
    %1273 = vmatprep.subr.mxu0 0.0
    %1274 = vmatpush1.xpose.msra.mxu0 0.0
    %1275 = vmatprep.subr.mxu0 0.0
    %1276 = vmatpush1.xpose.msra.mxu0 0.0
    %1277 = vmatprep.subr.mxu0 0.0
    %1278 = vmatpush1.xpose.msra.mxu0 0.0
    %1279 = vmatprep.subr.mxu0 0.0
    %1280 = vmatpush1.xpose.msra.mxu0 0.0
    %1281 = vmatprep.subr.mxu0 0.0
    %1282 = vmatpush1.xpose.msra.mxu0 0.0
    %1283 = vmatprep.subr.mxu0 0.0
    %1284 = vmatpush1.xpose.msra.mxu0 0.0
    %1285 = vmatprep.subr.mxu0 0.0
    %1286 = vmatpush1.xpose.msra.mxu0 0.0
    %1287 = vmatprep.subr.mxu0 0.0
    %1288 = vmatpush1.xpose.msra.mxu0 0.0
    %1289 = vmatprep.subr.mxu0 0.0
    %1290 = vmatpush1.xpose.msra.mxu0 0.0
    %1291 = vmatprep.subr.mxu0 0.0
    %1292 = vmatpush1.xpose.msra.mxu0 0.0
    %1293 = vmatprep.subr.mxu0 0.0
    %1294 = vmatpush1.xpose.msra.mxu0 0.0
    %1295 = vmatprep.subr.mxu0 0.0
    %1296 = vmatpush1.xpose.msra.mxu0 0.0
    %1297 = vmatprep.subr.mxu0 0.0
    %1298 = vmatpush1.xpose.msra.mxu0 0.0
    %1299 = vmatprep.subr.mxu0 0.0
    %1300 = vmatpush1.xpose.msra.mxu0 0.0
    %1301 = vmatprep.subr.mxu0 0.0
    %1302 = vmatpush1.xpose.msra.mxu0 0.0
    %1303 = vmatprep.subr.mxu0 0.0
    %1304 = vmatpush1.xpose.msra.mxu0 0.0
    %1305 = vmatprep.subr.mxu0 0.0
    %1306 = vmatpush1.xpose.msra.mxu0 0.0
    %1307 = vmatprep.subr.mxu0 0.0
    %1308 = vmatpush1.xpose.msra.mxu0 0.0
    %1309 = vmatprep.subr.mxu0 0.0
    %1310 = vmatpush1.xpose.msra.mxu0 0.0
    %1311 = vmatprep.subr.mxu0 0.0
    %1312 = vmatpush1.xpose.msra.mxu0 0.0
    %1313 = vmatprep.mubr.f32.mxu0 0.0
    %1314 = vmatmul.mubr.f32.gmra.mrb[0].mxu0 %v1244
    %v1315 = vpop.f32.mrb[0].mxu0
    %v1316 = vadd.f32 0.0, %v1315
    %v1317 = vpop.f32.mrb[0].mxu0
    %1318 = vdwg.mxu0
    %v1320 = vsel %vm184, %v338, 0
    %v1323 = vsel %vm184, %v638, 0
    %1325 = vmatprep.subr.mxu0 0.0
    %1326 = vmatpush1.xpose.msra.mxu0 %v1323
    %1327 = vmatprep.subr.mxu0 0.0
    %1328 = vmatpush1.xpose.msra.mxu0 0.0
    %1329 = vmatprep.subr.mxu0 0.0
    %1330 = vmatpush1.xpose.msra.mxu0 0.0
    %1331 = vmatprep.subr.mxu0 0.0
    %1332 = vmatpush1.xpose.msra.mxu0 0.0
    %1333 = vmatprep.subr.mxu0 0.0
    %1334 = vmatpush1.xpose.msra.mxu0 0.0
    %1335 = vmatprep.subr.mxu0 0.0
    %1336 = vmatpush1.xpose.msra.mxu0 0.0
    %1337 = vmatprep.subr.mxu0 0.0
    %1338 = vmatpush1.xpose.msra.mxu0 0.0
    %1339 = vmatprep.subr.mxu0 0.0
    %1340 = vmatpush1.xpose.msra.mxu0 0.0
    %1341 = vmatprep.subr.mxu0 0.0
    %1342 = vmatpush1.xpose.msra.mxu0 0.0
    %1343 = vmatprep.subr.mxu0 0.0
    %1344 = vmatpush1.xpose.msra.mxu0 0.0
    %1345 = vmatprep.subr.mxu0 0.0
    %1346 = vmatpush1.xpose.msra.mxu0 0.0
    %1347 = vmatprep.subr.mxu0 0.0
    %1348 = vmatpush1.xpose.msra.mxu0 0.0
    %1349 = vmatprep.subr.mxu0 0.0
    %1350 = vmatpush1.xpose.msra.mxu0 0.0
    %1351 = vmatprep.subr.mxu0 0.0
    %1352 = vmatpush1.xpose.msra.mxu0 0.0
    %1353 = vmatprep.subr.mxu0 0.0
    %1354 = vmatpush1.xpose.msra.mxu0 0.0
    %1355 = vmatprep.subr.mxu0 0.0
    %1356 = vmatpush1.xpose.msra.mxu0 0.0
    %1357 = vmatprep.subr.mxu0 0.0
    %1358 = vmatpush1.xpose.msra.mxu0 0.0
    %1359 = vmatprep.subr.mxu0 0.0
    %1360 = vmatpush1.xpose.msra.mxu0 0.0
    %1361 = vmatprep.subr.mxu0 0.0
    %1362 = vmatpush1.xpose.msra.mxu0 0.0
    %1363 = vmatprep.subr.mxu0 0.0
    %1364 = vmatpush1.xpose.msra.mxu0 0.0
    %1365 = vmatprep.subr.mxu0 0.0
    %1366 = vmatpush1.xpose.msra.mxu0 0.0
    %1367 = vmatprep.subr.mxu0 0.0
    %1368 = vmatpush1.xpose.msra.mxu0 0.0
    %1369 = vmatprep.subr.mxu0 0.0
    %1370 = vmatpush1.xpose.msra.mxu0 0.0
    %1371 = vmatprep.subr.mxu0 0.0
    %1372 = vmatpush1.xpose.msra.mxu0 0.0
    %1373 = vmatprep.subr.mxu0 0.0
    %1374 = vmatpush1.xpose.msra.mxu0 0.0
    %1375 = vmatprep.subr.mxu0 0.0
    %1376 = vmatpush1.xpose.msra.mxu0 0.0
    %1377 = vmatprep.subr.mxu0 0.0
    %1378 = vmatpush1.xpose.msra.mxu0 0.0
    %1379 = vmatprep.subr.mxu0 0.0
    %1380 = vmatpush1.xpose.msra.mxu0 0.0
    %1381 = vmatprep.subr.mxu0 0.0
    %1382 = vmatpush1.xpose.msra.mxu0 0.0
    %1383 = vmatprep.subr.mxu0 0.0
    %1384 = vmatpush1.xpose.msra.mxu0 0.0
    %1385 = vmatprep.subr.mxu0 0.0
    %1386 = vmatpush1.xpose.msra.mxu0 0.0
    %1387 = vmatprep.subr.mxu0 0.0
    %1388 = vmatpush1.xpose.msra.mxu0 0.0
    %1389 = vmatprep.mubr.f32.mxu0 0.0
    %1390 = vmatmul.mubr.f32.gmra.mrb[0].mxu0 %v1320
    %v1391 = vpop.f32.mrb[0].mxu0
    %v1392 = vadd.f32 0.0, %v1391
    %v1393 = vpop.f32.mrb[0].mxu0
    %1394 = vdwg.mxu0
    %v1396 = vsel %vm184, %v408, 0
    %v1399 = vsel %vm184, %v708, 0
    %1401 = vmatprep.subr.mxu0 0.0
    %1402 = vmatpush1.xpose.msra.mxu0 %v1399
    %1403 = vmatprep.subr.mxu0 0.0
    %1404 = vmatpush1.xpose.msra.mxu0 0.0
    %1405 = vmatprep.subr.mxu0 0.0
    %1406 = vmatpush1.xpose.msra.mxu0 0.0
    %1407 = vmatprep.subr.mxu0 0.0
    %1408 = vmatpush1.xpose.msra.mxu0 0.0
    %1409 = vmatprep.subr.mxu0 0.0
    %1410 = vmatpush1.xpose.msra.mxu0 0.0
    %1411 = vmatprep.subr.mxu0 0.0
    %1412 = vmatpush1.xpose.msra.mxu0 0.0
    %1413 = vmatprep.subr.mxu0 0.0
    %1414 = vmatpush1.xpose.msra.mxu0 0.0
    %1415 = vmatprep.subr.mxu0 0.0
    %1416 = vmatpush1.xpose.msra.mxu0 0.0
    %1417 = vmatprep.subr.mxu0 0.0
    %1418 = vmatpush1.xpose.msra.mxu0 0.0
    %1419 = vmatprep.subr.mxu0 0.0
    %1420 = vmatpush1.xpose.msra.mxu0 0.0
    %1421 = vmatprep.subr.mxu0 0.0
    %1422 = vmatpush1.xpose.msra.mxu0 0.0
    %1423 = vmatprep.subr.mxu0 0.0
    %1424 = vmatpush1.xpose.msra.mxu0 0.0
    %1425 = vmatprep.subr.mxu0 0.0
    %1426 = vmatpush1.xpose.msra.mxu0 0.0
    %1427 = vmatprep.subr.mxu0 0.0
    %1428 = vmatpush1.xpose.msra.mxu0 0.0
    %1429 = vmatprep.subr.mxu0 0.0
    %1430 = vmatpush1.xpose.msra.mxu0 0.0
    %1431 = vmatprep.subr.mxu0 0.0
    %1432 = vmatpush1.xpose.msra.mxu0 0.0
    %1433 = vmatprep.subr.mxu0 0.0
    %1434 = vmatpush1.xpose.msra.mxu0 0.0
    %1435 = vmatprep.subr.mxu0 0.0
    %1436 = vmatpush1.xpose.msra.mxu0 0.0
    %1437 = vmatprep.subr.mxu0 0.0
    %1438 = vmatpush1.xpose.msra.mxu0 0.0
    %1439 = vmatprep.subr.mxu0 0.0
    %1440 = vmatpush1.xpose.msra.mxu0 0.0
    %1441 = vmatprep.subr.mxu0 0.0
    %1442 = vmatpush1.xpose.msra.mxu0 0.0
    %1443 = vmatprep.subr.mxu0 0.0
    %1444 = vmatpush1.xpose.msra.mxu0 0.0
    %1445 = vmatprep.subr.mxu0 0.0
    %1446 = vmatpush1.xpose.msra.mxu0 0.0
    %1447 = vmatprep.subr.mxu0 0.0
    %1448 = vmatpush1.xpose.msra.mxu0 0.0
    %1449 = vmatprep.subr.mxu0 0.0
    %1450 = vmatpush1.xpose.msra.mxu0 0.0
    %1451 = vmatprep.subr.mxu0 0.0
    %1452 = vmatpush1.xpose.msra.mxu0 0.0
    %1453 = vmatprep.subr.mxu0 0.0
    %1454 = vmatpush1.xpose.msra.mxu0 0.0
    %1455 = vmatprep.subr.mxu0 0.0
    %1456 = vmatpush1.xpose.msra.mxu0 0.0
    %1457 = vmatprep.subr.mxu0 0.0
    %1458 = vmatpush1.xpose.msra.mxu0 0.0
    %1459 = vmatprep.subr.mxu0 0.0
    %1460 = vmatpush1.xpose.msra.mxu0 0.0
    %1461 = vmatprep.subr.mxu0 0.0
    %1462 = vmatpush1.xpose.msra.mxu0 0.0
    %1463 = vmatprep.subr.mxu0 0.0
    %1464 = vmatpush1.xpose.msra.mxu0 0.0
    %1465 = vmatprep.mubr.f32.mxu0 0.0
    %1466 = vmatmul.mubr.f32.gmra.mrb[0].mxu0 %v1396
    %v1467 = vpop.f32.mrb[0].mxu0
    %v1468 = vadd.f32 0.0, %v1467
    %v1469 = vpop.f32.mrb[0].mxu0
    %1470 = vdwg.mxu0
    %v1472 = vsel %vm184, %v413, 0
    %v1475 = vsel %vm184, %v713, 0
    %1477 = vmatprep.subr.mxu0 0.0
    %1478 = vmatpush1.xpose.msra.mxu0 %v1475
    %1479 = vmatprep.subr.mxu0 0.0
    %1480 = vmatpush1.xpose.msra.mxu0 0.0
    %1481 = vmatprep.subr.mxu0 0.0
    %1482 = vmatpush1.xpose.msra.mxu0 0.0
    %1483 = vmatprep.subr.mxu0 0.0
    %1484 = vmatpush1.xpose.msra.mxu0 0.0
    %1485 = vmatprep.subr.mxu0 0.0
    %1486 = vmatpush1.xpose.msra.mxu0 0.0
    %1487 = vmatprep.subr.mxu0 0.0
    %1488 = vmatpush1.xpose.msra.mxu0 0.0
    %1489 = vmatprep.subr.mxu0 0.0
    %1490 = vmatpush1.xpose.msra.mxu0 0.0
    %1491 = vmatprep.subr.mxu0 0.0
    %1492 = vmatpush1.xpose.msra.mxu0 0.0
    %1493 = vmatprep.subr.mxu0 0.0
    %1494 = vmatpush1.xpose.msra.mxu0 0.0
    %1495 = vmatprep.subr.mxu0 0.0
    %1496 = vmatpush1.xpose.msra.mxu0 0.0
    %1497 = vmatprep.subr.mxu0 0.0
    %1498 = vmatpush1.xpose.msra.mxu0 0.0
    %1499 = vmatprep.subr.mxu0 0.0
    %1500 = vmatpush1.xpose.msra.mxu0 0.0
    %1501 = vmatprep.subr.mxu0 0.0
    %1502 = vmatpush1.xpose.msra.mxu0 0.0
    %1503 = vmatprep.subr.mxu0 0.0
    %1504 = vmatpush1.xpose.msra.mxu0 0.0
    %1505 = vmatprep.subr.mxu0 0.0
    %1506 = vmatpush1.xpose.msra.mxu0 0.0
    %1507 = vmatprep.subr.mxu0 0.0
    %1508 = vmatpush1.xpose.msra.mxu0 0.0
    %1509 = vmatprep.subr.mxu0 0.0
    %1510 = vmatpush1.xpose.msra.mxu0 0.0
    %1511 = vmatprep.subr.mxu0 0.0
    %1512 = vmatpush1.xpose.msra.mxu0 0.0
    %1513 = vmatprep.subr.mxu0 0.0
    %1514 = vmatpush1.xpose.msra.mxu0 0.0
    %1515 = vmatprep.subr.mxu0 0.0
    %1516 = vmatpush1.xpose.msra.mxu0 0.0
    %1517 = vmatprep.subr.mxu0 0.0
    %1518 = vmatpush1.xpose.msra.mxu0 0.0
    %1519 = vmatprep.subr.mxu0 0.0
    %1520 = vmatpush1.xpose.msra.mxu0 0.0
    %1521 = vmatprep.subr.mxu0 0.0
    %1522 = vmatpush1.xpose.msra.mxu0 0.0
    %1523 = vmatprep.subr.mxu0 0.0
    %1524 = vmatpush1.xpose.msra.mxu0 0.0
    %1525 = vmatprep.subr.mxu0 0.0
    %1526 = vmatpush1.xpose.msra.mxu0 0.0
    %1527 = vmatprep.subr.mxu0 0.0
    %1528 = vmatpush1.xpose.msra.mxu0 0.0
    %1529 = vmatprep.subr.mxu0 0.0
    %1530 = vmatpush1.xpose.msra.mxu0 0.0
    %1531 = vmatprep.subr.mxu0 0.0
    %1532 = vmatpush1.xpose.msra.mxu0 0.0
    %1533 = vmatprep.subr.mxu0 0.0
    %1534 = vmatpush1.xpose.msra.mxu0 0.0
    %1535 = vmatprep.subr.mxu0 0.0
    %1536 = vmatpush1.xpose.msra.mxu0 0.0
    %1537 = vmatprep.subr.mxu0 0.0
    %1538 = vmatpush1.xpose.msra.mxu0 0.0
    %1539 = vmatprep.subr.mxu0 0.0
    %1540 = vmatpush1.xpose.msra.mxu0 0.0
    %1541 = vmatprep.mubr.f32.mxu0 0.0
    %1542 = vmatmul.mubr.f32.gmra.mrb[0].mxu0 %v1472
    %v1543 = vpop.f32.mrb[0].mxu0
    %v1544 = vadd.f32 0.0, %v1543
    %v1545 = vpop.f32.mrb[0].mxu0
    %1546 = vdwg.mxu0
    %v1548 = vsel %vm184, %v483, 0
    %v1551 = vsel %vm184, %v783, 0
    %1553 = vmatprep.subr.mxu0 0.0
    %1554 = vmatpush1.xpose.msra.mxu0 %v1551
    %1555 = vmatprep.subr.mxu0 0.0
    %1556 = vmatpush1.xpose.msra.mxu0 0.0
    %1557 = vmatprep.subr.mxu0 0.0
    %1558 = vmatpush1.xpose.msra.mxu0 0.0
    %1559 = vmatprep.subr.mxu0 0.0
    %1560 = vmatpush1.xpose.msra.mxu0 0.0
    %1561 = vmatprep.subr.mxu0 0.0
    %1562 = vmatpush1.xpose.msra.mxu0 0.0
    %1563 = vmatprep.subr.mxu0 0.0
    %1564 = vmatpush1.xpose.msra.mxu0 0.0
    %1565 = vmatprep.subr.mxu0 0.0
    %1566 = vmatpush1.xpose.msra.mxu0 0.0
    %1567 = vmatprep.subr.mxu0 0.0
    %1568 = vmatpush1.xpose.msra.mxu0 0.0
    %1569 = vmatprep.subr.mxu0 0.0
    %1570 = vmatpush1.xpose.msra.mxu0 0.0
    %1571 = vmatprep.subr.mxu0 0.0
    %1572 = vmatpush1.xpose.msra.mxu0 0.0
    %1573 = vmatprep.subr.mxu0 0.0
    %1574 = vmatpush1.xpose.msra.mxu0 0.0
    %1575 = vmatprep.subr.mxu0 0.0
    %1576 = vmatpush1.xpose.msra.mxu0 0.0
    %1577 = vmatprep.subr.mxu0 0.0
    %1578 = vmatpush1.xpose.msra.mxu0 0.0
    %1579 = vmatprep.subr.mxu0 0.0
    %1580 = vmatpush1.xpose.msra.mxu0 0.0
    %1581 = vmatprep.subr.mxu0 0.0
    %1582 = vmatpush1.xpose.msra.mxu0 0.0
    %1583 = vmatprep.subr.mxu0 0.0
    %1584 = vmatpush1.xpose.msra.mxu0 0.0
    %1585 = vmatprep.subr.mxu0 0.0
    %1586 = vmatpush1.xpose.msra.mxu0 0.0
    %1587 = vmatprep.subr.mxu0 0.0
    %1588 = vmatpush1.xpose.msra.mxu0 0.0
    %1589 = vmatprep.subr.mxu0 0.0
    %1590 = vmatpush1.xpose.msra.mxu0 0.0
    %1591 = vmatprep.subr.mxu0 0.0
    %1592 = vmatpush1.xpose.msra.mxu0 0.0
    %1593 = vmatprep.subr.mxu0 0.0
    %1594 = vmatpush1.xpose.msra.mxu0 0.0
    %1595 = vmatprep.subr.mxu0 0.0
    %1596 = vmatpush1.xpose.msra.mxu0 0.0
    %1597 = vmatprep.subr.mxu0 0.0
    %1598 = vmatpush1.xpose.msra.mxu0 0.0
    %1599 = vmatprep.subr.mxu0 0.0
    %1600 = vmatpush1.xpose.msra.mxu0 0.0
    %1601 = vmatprep.subr.mxu0 0.0
    %1602 = vmatpush1.xpose.msra.mxu0 0.0
    %1603 = vmatprep.subr.mxu0 0.0
    %1604 = vmatpush1.xpose.msra.mxu0 0.0
    %1605 = vmatprep.subr.mxu0 0.0
    %1606 = vmatpush1.xpose.msra.mxu0 0.0
    %1607 = vmatprep.subr.mxu0 0.0
    %1608 = vmatpush1.xpose.msra.mxu0 0.0
    %1609 = vmatprep.subr.mxu0 0.0
    %1610 = vmatpush1.xpose.msra.mxu0 0.0
    %1611 = vmatprep.subr.mxu0 0.0
    %1612 = vmatpush1.xpose.msra.mxu0 0.0
    %1613 = vmatprep.subr.mxu0 0.0
    %1614 = vmatpush1.xpose.msra.mxu0 0.0
    %1615 = vmatprep.subr.mxu0 0.0
    %1616 = vmatpush1.xpose.msra.mxu0 0.0
    %1617 = vmatprep.mubr.f32.mxu0 0.0
    %1618 = vmatmul.mubr.f32.gmra.mrb[0].mxu0 %v1548
    %v1619 = vpop.f32.mrb[0].mxu0
    %v1620 = vadd.f32 0.0, %v1619
    %v1621 = vpop.f32.mrb[0].mxu0
    %1622 = vdwg.mxu0
    %v1624 = vsel %vm184, %v488, 0
    %v1627 = vsel %vm184, %v788, 0
    %1629 = vmatprep.subr.mxu0 0.0
    %1630 = vmatpush1.xpose.msra.mxu0 %v1627
    %1631 = vmatprep.subr.mxu0 0.0
    %1632 = vmatpush1.xpose.msra.mxu0 0.0
    %1633 = vmatprep.subr.mxu0 0.0
    %1634 = vmatpush1.xpose.msra.mxu0 0.0
    %1635 = vmatprep.subr.mxu0 0.0
    %1636 = vmatpush1.xpose.msra.mxu0 0.0
    %1637 = vmatprep.subr.mxu0 0.0
    %1638 = vmatpush1.xpose.msra.mxu0 0.0
    %1639 = vmatprep.subr.mxu0 0.0
    %1640 = vmatpush1.xpose.msra.mxu0 0.0
    %1641 = vmatprep.subr.mxu0 0.0
    %1642 = vmatpush1.xpose.msra.mxu0 0.0
    %1643 = vmatprep.subr.mxu0 0.0
    %1644 = vmatpush1.xpose.msra.mxu0 0.0
    %1645 = vmatprep.subr.mxu0 0.0
    %1646 = vmatpush1.xpose.msra.mxu0 0.0
    %1647 = vmatprep.subr.mxu0 0.0
    %1648 = vmatpush1.xpose.msra.mxu0 0.0
    %1649 = vmatprep.subr.mxu0 0.0
    %1650 = vmatpush1.xpose.msra.mxu0 0.0
    %1651 = vmatprep.subr.mxu0 0.0
    %1652 = vmatpush1.xpose.msra.mxu0 0.0
    %1653 = vmatprep.subr.mxu0 0.0
    %1654 = vmatpush1.xpose.msra.mxu0 0.0
    %1655 = vmatprep.subr.mxu0 0.0
    %1656 = vmatpush1.xpose.msra.mxu0 0.0
    %1657 = vmatprep.subr.mxu0 0.0
    %1658 = vmatpush1.xpose.msra.mxu0 0.0
    %1659 = vmatprep.subr.mxu0 0.0
    %1660 = vmatpush1.xpose.msra.mxu0 0.0
    %1661 = vmatprep.subr.mxu0 0.0
    %1662 = vmatpush1.xpose.msra.mxu0 0.0
    %1663 = vmatprep.subr.mxu0 0.0
    %1664 = vmatpush1.xpose.msra.mxu0 0.0
    %1665 = vmatprep.subr.mxu0 0.0
    %1666 = vmatpush1.xpose.msra.mxu0 0.0
    %1667 = vmatprep.subr.mxu0 0.0
    %1668 = vmatpush1.xpose.msra.mxu0 0.0
    %1669 = vmatprep.subr.mxu0 0.0
    %1670 = vmatpush1.xpose.msra.mxu0 0.0
    %1671 = vmatprep.subr.mxu0 0.0
    %1672 = vmatpush1.xpose.msra.mxu0 0.0
    %1673 = vmatprep.subr.mxu0 0.0
    %1674 = vmatpush1.xpose.msra.mxu0 0.0
    %1675 = vmatprep.subr.mxu0 0.0
    %1676 = vmatpush1.xpose.msra.mxu0 0.0
    %1677 = vmatprep.subr.mxu0 0.0
    %1678 = vmatpush1.xpose.msra.mxu0 0.0
    %1679 = vmatprep.subr.mxu0 0.0
    %1680 = vmatpush1.xpose.msra.mxu0 0.0
    %1681 = vmatprep.subr.mxu0 0.0
    %1682 = vmatpush1.xpose.msra.mxu0 0.0
    %1683 = vmatprep.subr.mxu0 0.0
    %1684 = vmatpush1.xpose.msra.mxu0 0.0
    %1685 = vmatprep.subr.mxu0 0.0
    %1686 = vmatpush1.xpose.msra.mxu0 0.0
    %1687 = vmatprep.subr.mxu0 0.0
    %1688 = vmatpush1.xpose.msra.mxu0 0.0
    %1689 = vmatprep.subr.mxu0 0.0
    %1690 = vmatpush1.xpose.msra.mxu0 0.0
    %1691 = vmatprep.subr.mxu0 0.0
    %1692 = vmatpush1.xpose.msra.mxu0 0.0
    %1693 = vmatprep.mubr.f32.mxu0 0.0
    %1694 = vmatmul.mubr.f32.gmra.mrb[0].mxu0 %v1624
    %v1695 = vpop.f32.mrb[0].mxu0
    %v1696 = vadd.f32 0.0, %v1695
    %v1697 = vpop.f32.mrb[0].mxu0
    %1698 = vdwg.mxu0
    %v1699 = vmul.f32 %v1164, 1.442695
    %v1700 = vpow.pop %v1699
    %v1701 = vmul.f32 %v1240, 1.442695
    %v1702 = vpow.pop %v1701
    %v1703 = vmul.f32 %v1316, 1.442695
    %v1704 = vpow.pop %v1703
    %v1705 = vmul.f32 %v1392, 1.442695
    %v1706 = vpow.pop %v1705
    %v1707 = vmul.f32 %v1468, 1.442695
    %v1708 = vpow.pop %v1707
    %v1709 = vmul.f32 %v1544, 1.442695
    %v1710 = vpow.pop %v1709
    %v1711 = vmul.f32 %v1620, 1.442695
    %v1712 = vpow.pop %v1711
    %v1713 = vmul.f32 %v1696, 1.442695
    %v1714 = vpow.pop %v1713
    %vm1715 = vcmask 64512
    %v1716 = vsel %vm1715, %v1700, 0.0
    %1717 = vadd.xlane.f32.xlu0 %v1716
    %v1718 = vpop.xlane.xlu0 %1717
    %v1719 = vsel %vm1715, %v1702, 0.0
    %1720 = vadd.xlane.f32.xlu0 %v1719
    %v1721 = vpop.xlane.xlu0 %1720
    %v1722 = vsel %vm1715, %v1704, 0.0
    %1723 = vadd.xlane.f32.xlu0 %v1722
    %v1724 = vpop.xlane.xlu0 %1723
    %v1725 = vsel %vm1715, %v1706, 0.0
    %1726 = vadd.xlane.f32.xlu0 %v1725
    %v1727 = vpop.xlane.xlu0 %1726
    %v1728 = vsel %vm1715, %v1708, 0.0
    %1729 = vadd.xlane.f32.xlu0 %v1728
    %v1730 = vpop.xlane.xlu0 %1729
    %v1731 = vsel %vm1715, %v1710, 0.0
    %1732 = vadd.xlane.f32.xlu0 %v1731
    %v1733 = vpop.xlane.xlu0 %1732
    %v1734 = vsel %vm1715, %v1712, 0.0
    %1735 = vadd.xlane.f32.xlu0 %v1734
    %v1736 = vpop.xlane.xlu0 %1735
    %v1737 = vsel %vm1715, %v1714, 0.0
    %1738 = vadd.xlane.f32.xlu0 %v1737
    %v1739 = vpop.xlane.xlu0 %1738
    %v1740 = vrcp.pop %v1718
    %v1741 = vmul.f32 %v1700, %v1740
    %v1742 = vrcp.pop %v1721
    %v1743 = vmul.f32 %v1702, %v1742
    %v1744 = vrcp.pop %v1724
    %v1745 = vmul.f32 %v1704, %v1744
    %v1746 = vrcp.pop %v1727
    %v1747 = vmul.f32 %v1706, %v1746
    %v1748 = vrcp.pop %v1730
    %v1749 = vmul.f32 %v1708, %v1748
    %v1750 = vrcp.pop %v1733
    %v1751 = vmul.f32 %v1710, %v1750
    %v1752 = vrcp.pop %v1736
    %v1753 = vmul.f32 %v1712, %v1752
    %v1754 = vrcp.pop %v1739
    %v1755 = vmul.f32 %v1714, %v1754
    %v1757 = vsel %vm1715, %v1741, 0
    %1759 = vmatprep.subr.mxu0 0.0
    %1760 = vmatpush1.msra.mxu0 %v858
    %1761 = vmatprep.subr.mxu0 0.0
    %1762 = vmatpush1.msra.mxu0 0.0
    %1763 = vmatprep.subr.mxu0 0.0
    %1764 = vmatpush1.msra.mxu0 0.0
    %1765 = vmatprep.subr.mxu0 0.0
    %1766 = vmatpush1.msra.mxu0 0.0
    %1767 = vmatprep.subr.mxu0 0.0
    %1768 = vmatpush1.msra.mxu0 0.0
    %1769 = vmatprep.subr.mxu0 0.0
    %1770 = vmatpush1.msra.mxu0 0.0
    %1771 = vmatprep.subr.mxu0 0.0
    %1772 = vmatpush1.msra.mxu0 0.0
    %1773 = vmatprep.subr.mxu0 0.0
    %1774 = vmatpush1.msra.mxu0 0.0
    %1775 = vmatprep.subr.mxu0 0.0
    %1776 = vmatpush1.msra.mxu0 0.0
    %1777 = vmatprep.subr.mxu0 0.0
    %1778 = vmatpush1.msra.mxu0 0.0
    %1779 = vmatprep.subr.mxu0 0.0
    %1780 = vmatpush1.msra.mxu0 0.0
    %1781 = vmatprep.subr.mxu0 0.0
    %1782 = vmatpush1.msra.mxu0 0.0
    %1783 = vmatprep.subr.mxu0 0.0
    %1784 = vmatpush1.msra.mxu0 0.0
    %1785 = vmatprep.subr.mxu0 0.0
    %1786 = vmatpush1.msra.mxu0 0.0
    %1787 = vmatprep.subr.mxu0 0.0
    %1788 = vmatpush1.msra.mxu0 0.0
    %1789 = vmatprep.subr.mxu0 0.0
    %1790 = vmatpush1.msra.mxu0 0.0
    %1791 = vmatprep.subr.mxu0 0.0
    %1792 = vmatpush1.msra.mxu0 0.0
    %1793 = vmatprep.subr.mxu0 0.0
    %1794 = vmatpush1.msra.mxu0 0.0
    %1795 = vmatprep.subr.mxu0 0.0
    %1796 = vmatpush1.msra.mxu0 0.0
    %1797 = vmatprep.subr.mxu0 0.0
    %1798 = vmatpush1.msra.mxu0 0.0
    %1799 = vmatprep.subr.mxu0 0.0
    %1800 = vmatpush1.msra.mxu0 0.0
    %1801 = vmatprep.subr.mxu0 0.0
    %1802 = vmatpush1.msra.mxu0 0.0
    %1803 = vmatprep.subr.mxu0 0.0
    %1804 = vmatpush1.msra.mxu0 0.0
    %1805 = vmatprep.subr.mxu0 0.0
    %1806 = vmatpush1.msra.mxu0 0.0
    %1807 = vmatprep.subr.mxu0 0.0
    %1808 = vmatpush1.msra.mxu0 0.0
    %1809 = vmatprep.subr.mxu0 0.0
    %1810 = vmatpush1.msra.mxu0 0.0
    %1811 = vmatprep.subr.mxu0 0.0
    %1812 = vmatpush1.msra.mxu0 0.0
    %1813 = vmatprep.subr.mxu0 0.0
    %1814 = vmatpush1.msra.mxu0 0.0
    %1815 = vmatprep.subr.mxu0 0.0
    %1816 = vmatpush1.msra.mxu0 0.0
    %1817 = vmatprep.subr.mxu0 0.0
    %1818 = vmatpush1.msra.mxu0 0.0
    %1819 = vmatprep.subr.mxu0 0.0
    %1820 = vmatpush1.msra.mxu0 0.0
    %1821 = vmatprep.subr.mxu0 0.0
    %1822 = vmatpush1.msra.mxu0 0.0
    %1823 = vmatprep.mubr.f32.mxu0 0.0
    %1824 = vmatmul.mubr.f32.gmra.mrb[0].mxu0 %v1757
    %v1825 = vpop.f32.mrb[0].mxu0
    %v1826 = vadd.f32 0.0, %v1825
    %v1827 = vpop.f32.mrb[0].mxu0
    %1828 = vdwg.mxu0
    %v1830 = vsel %vm1715, %v1743, 0
    %1832 = vmatprep.subr.mxu0 0.0
    %1833 = vmatpush1.msra.mxu0 %v863
    %1834 = vmatprep.subr.mxu0 0.0
    %1835 = vmatpush1.msra.mxu0 0.0
    %1836 = vmatprep.subr.mxu0 0.0
    %1837 = vmatpush1.msra.mxu0 0.0
    %1838 = vmatprep.subr.mxu0 0.0
    %1839 = vmatpush1.msra.mxu0 0.0
    %1840 = vmatprep.subr.mxu0 0.0
    %1841 = vmatpush1.msra.mxu0 0.0
    %1842 = vmatprep.subr.mxu0 0.0
    %1843 = vmatpush1.msra.mxu0 0.0
    %1844 = vmatprep.subr.mxu0 0.0
    %1845 = vmatpush1.msra.mxu0 0.0
    %1846 = vmatprep.subr.mxu0 0.0
    %1847 = vmatpush1.msra.mxu0 0.0
    %1848 = vmatprep.subr.mxu0 0.0
    %1849 = vmatpush1.msra.mxu0 0.0
    %1850 = vmatprep.subr.mxu0 0.0
    %1851 = vmatpush1.msra.mxu0 0.0
    %1852 = vmatprep.subr.mxu0 0.0
    %1853 = vmatpush1.msra.mxu0 0.0
    %1854 = vmatprep.subr.mxu0 0.0
    %1855 = vmatpush1.msra.mxu0 0.0
    %1856 = vmatprep.subr.mxu0 0.0
    %1857 = vmatpush1.msra.mxu0 0.0
    %1858 = vmatprep.subr.mxu0 0.0
    %1859 = vmatpush1.msra.mxu0 0.0
    %1860 = vmatprep.subr.mxu0 0.0
    %1861 = vmatpush1.msra.mxu0 0.0
    %1862 = vmatprep.subr.mxu0 0.0
    %1863 = vmatpush1.msra.mxu0 0.0
    %1864 = vmatprep.subr.mxu0 0.0
    %1865 = vmatpush1.msra.mxu0 0.0
    %1866 = vmatprep.subr.mxu0 0.0
    %1867 = vmatpush1.msra.mxu0 0.0
    %1868 = vmatprep.subr.mxu0 0.0
    %1869 = vmatpush1.msra.mxu0 0.0
    %1870 = vmatprep.subr.mxu0 0.0
    %1871 = vmatpush1.msra.mxu0 0.0
    %1872 = vmatprep.subr.mxu0 0.0
    %1873 = vmatpush1.msra.mxu0 0.0
    %1874 = vmatprep.subr.mxu0 0.0
    %1875 = vmatpush1.msra.mxu0 0.0
    %1876 = vmatprep.subr.mxu0 0.0
    %1877 = vmatpush1.msra.mxu0 0.0
    %1878 = vmatprep.subr.mxu0 0.0
    %1879 = vmatpush1.msra.mxu0 0.0
    %1880 = vmatprep.subr.mxu0 0.0
    %1881 = vmatpush1.msra.mxu0 0.0
    %1882 = vmatprep.subr.mxu0 0.0
    %1883 = vmatpush1.msra.mxu0 0.0
    %1884 = vmatprep.subr.mxu0 0.0
    %1885 = vmatpush1.msra.mxu0 0.0
    %1886 = vmatprep.subr.mxu0 0.0
    %1887 = vmatpush1.msra.mxu0 0.0
    %1888 = vmatprep.subr.mxu0 0.0
    %1889 = vmatpush1.msra.mxu0 0.0
    %1890 = vmatprep.subr.mxu0 0.0
    %1891 = vmatpush1.msra.mxu0 0.0
    %1892 = vmatprep.subr.mxu0 0.0
    %1893 = vmatpush1.msra.mxu0 0.0
    %1894 = vmatprep.subr.mxu0 0.0
    %1895 = vmatpush1.msra.mxu0 0.0
    %1896 = vmatprep.mubr.f32.mxu0 0.0
    %1897 = vmatmul.mubr.f32.gmra.mrb[0].mxu0 %v1830
    %v1898 = vpop.f32.mrb[0].mxu0
    %v1899 = vadd.f32 0.0, %v1898
    %v1900 = vpop.f32.mrb[0].mxu0
    %1901 = vdwg.mxu0
    %v1903 = vsel %vm1715, %v1745, 0
    %1905 = vmatprep.subr.mxu0 0.0
    %1906 = vmatpush1.msra.mxu0 %v933
    %1907 = vmatprep.subr.mxu0 0.0
    %1908 = vmatpush1.msra.mxu0 0.0
    %1909 = vmatprep.subr.mxu0 0.0
    %1910 = vmatpush1.msra.mxu0 0.0
    %1911 = vmatprep.subr.mxu0 0.0
    %1912 = vmatpush1.msra.mxu0 0.0
    %1913 = vmatprep.subr.mxu0 0.0
    %1914 = vmatpush1.msra.mxu0 0.0
    %1915 = vmatprep.subr.mxu0 0.0
    %1916 = vmatpush1.msra.mxu0 0.0
    %1917 = vmatprep.subr.mxu0 0.0
    %1918 = vmatpush1.msra.mxu0 0.0
    %1919 = vmatprep.subr.mxu0 0.0
    %1920 = vmatpush1.msra.mxu0 0.0
    %1921 = vmatprep.subr.mxu0 0.0
    %1922 = vmatpush1.msra.mxu0 0.0
    %1923 = vmatprep.subr.mxu0 0.0
    %1924 = vmatpush1.msra.mxu0 0.0
    %1925 = vmatprep.subr.mxu0 0.0
    %1926 = vmatpush1.msra.mxu0 0.0
    %1927 = vmatprep.subr.mxu0 0.0
    %1928 = vmatpush1.msra.mxu0 0.0
    %1929 = vmatprep.subr.mxu0 0.0
    %1930 = vmatpush1.msra.mxu0 0.0
    %1931 = vmatprep.subr.mxu0 0.0
    %1932 = vmatpush1.msra.mxu0 0.0
    %1933 = vmatprep.subr.mxu0 0.0
    %1934 = vmatpush1.msra.mxu0 0.0
    %1935 = vmatprep.subr.mxu0 0.0
    %1936 = vmatpush1.msra.mxu0 0.0
    %1937 = vmatprep.subr.mxu0 0.0
    %1938 = vmatpush1.msra.mxu0 0.0
    %1939 = vmatprep.subr.mxu0 0.0
    %1940 = vmatpush1.msra.mxu0 0.0
    %1941 = vmatprep.subr.mxu0 0.0
    %1942 = vmatpush1.msra.mxu0 0.0
    %1943 = vmatprep.subr.mxu0 0.0
    %1944 = vmatpush1.msra.mxu0 0.0
    %1945 = vmatprep.subr.mxu0 0.0
    %1946 = vmatpush1.msra.mxu0 0.0
    %1947 = vmatprep.subr.mxu0 0.0
    %1948 = vmatpush1.msra.mxu0 0.0
    %1949 = vmatprep.subr.mxu0 0.0
    %1950 = vmatpush1.msra.mxu0 0.0
    %1951 = vmatprep.subr.mxu0 0.0
    %1952 = vmatpush1.msra.mxu0 0.0
    %1953 = vmatprep.subr.mxu0 0.0
    %1954 = vmatpush1.msra.mxu0 0.0
    %1955 = vmatprep.subr.mxu0 0.0
    %1956 = vmatpush1.msra.mxu0 0.0
    %1957 = vmatprep.subr.mxu0 0.0
    %1958 = vmatpush1.msra.mxu0 0.0
    %1959 = vmatprep.subr.mxu0 0.0
    %1960 = vmatpush1.msra.mxu0 0.0
    %1961 = vmatprep.subr.mxu0 0.0
    %1962 = vmatpush1.msra.mxu0 0.0
    %1963 = vmatprep.subr.mxu0 0.0
    %1964 = vmatpush1.msra.mxu0 0.0
    %1965 = vmatprep.subr.mxu0 0.0
    %1966 = vmatpush1.msra.mxu0 0.0
    %1967 = vmatprep.subr.mxu0 0.0
    %1968 = vmatpush1.msra.mxu0 0.0
    %1969 = vmatprep.mubr.f32.mxu0 0.0
    %1970 = vmatmul.mubr.f32.gmra.mrb[0].mxu0 %v1903
    %v1971 = vpop.f32.mrb[0].mxu0
    %v1972 = vadd.f32 0.0, %v1971
    %v1973 = vpop.f32.mrb[0].mxu0
    %1974 = vdwg.mxu0
    %v1976 = vsel %vm1715, %v1747, 0
    %1978 = vmatprep.subr.mxu0 0.0
    %1979 = vmatpush1.msra.mxu0 %v938
    %1980 = vmatprep.subr.mxu0 0.0
    %1981 = vmatpush1.msra.mxu0 0.0
    %1982 = vmatprep.subr.mxu0 0.0
    %1983 = vmatpush1.msra.mxu0 0.0
    %1984 = vmatprep.subr.mxu0 0.0
    %1985 = vmatpush1.msra.mxu0 0.0
    %1986 = vmatprep.subr.mxu0 0.0
    %1987 = vmatpush1.msra.mxu0 0.0
    %1988 = vmatprep.subr.mxu0 0.0
    %1989 = vmatpush1.msra.mxu0 0.0
    %1990 = vmatprep.subr.mxu0 0.0
    %1991 = vmatpush1.msra.mxu0 0.0
    %1992 = vmatprep.subr.mxu0 0.0
    %1993 = vmatpush1.msra.mxu0 0.0
    %1994 = vmatprep.subr.mxu0 0.0
    %1995 = vmatpush1.msra.mxu0 0.0
    %1996 = vmatprep.subr.mxu0 0.0
    %1997 = vmatpush1.msra.mxu0 0.0
    %1998 = vmatprep.subr.mxu0 0.0
    %1999 = vmatpush1.msra.mxu0 0.0
    %2000 = vmatprep.subr.mxu0 0.0
    %2001 = vmatpush1.msra.mxu0 0.0
    %2002 = vmatprep.subr.mxu0 0.0
    %2003 = vmatpush1.msra.mxu0 0.0
    %2004 = vmatprep.subr.mxu0 0.0
    %2005 = vmatpush1.msra.mxu0 0.0
    %2006 = vmatprep.subr.mxu0 0.0
    %2007 = vmatpush1.msra.mxu0 0.0
    %2008 = vmatprep.subr.mxu0 0.0
    %2009 = vmatpush1.msra.mxu0 0.0
    %2010 = vmatprep.subr.mxu0 0.0
    %2011 = vmatpush1.msra.mxu0 0.0
    %2012 = vmatprep.subr.mxu0 0.0
    %2013 = vmatpush1.msra.mxu0 0.0
    %2014 = vmatprep.subr.mxu0 0.0
    %2015 = vmatpush1.msra.mxu0 0.0
    %2016 = vmatprep.subr.mxu0 0.0
    %2017 = vmatpush1.msra.mxu0 0.0
    %2018 = vmatprep.subr.mxu0 0.0
    %2019 = vmatpush1.msra.mxu0 0.0
    %2020 = vmatprep.subr.mxu0 0.0
    %2021 = vmatpush1.msra.mxu0 0.0
    %2022 = vmatprep.subr.mxu0 0.0
    %2023 = vmatpush1.msra.mxu0 0.0
    %2024 = vmatprep.subr.mxu0 0.0
    %2025 = vmatpush1.msra.mxu0 0.0
    %2026 = vmatprep.subr.mxu0 0.0
    %2027 = vmatpush1.msra.mxu0 0.0
    %2028 = vmatprep.subr.mxu0 0.0
    %2029 = vmatpush1.msra.mxu0 0.0
    %2030 = vmatprep.subr.mxu0 0.0
    %2031 = vmatpush1.msra.mxu0 0.0
    %2032 = vmatprep.subr.mxu0 0.0
    %2033 = vmatpush1.msra.mxu0 0.0
    %2034 = vmatprep.subr.mxu0 0.0
    %2035 = vmatpush1.msra.mxu0 0.0
    %2036 = vmatprep.subr.mxu0 0.0
    %2037 = vmatpush1.msra.mxu0 0.0
    %2038 = vmatprep.subr.mxu0 0.0
    %2039 = vmatpush1.msra.mxu0 0.0
    %2040 = vmatprep.subr.mxu0 0.0
    %2041 = vmatpush1.msra.mxu0 0.0
    %2042 = vmatprep.mubr.f32.mxu0 0.0
    %2043 = vmatmul.mubr.f32.gmra.mrb[0].mxu0 %v1976
    %v2044 = vpop.f32.mrb[0].mxu0
    %v2045 = vadd.f32 0.0, %v2044
    %v2046 = vpop.f32.mrb[0].mxu0
    %2047 = vdwg.mxu0
    %v2049 = vsel %vm1715, %v1749, 0
    %2051 = vmatprep.subr.mxu0 0.0
    %2052 = vmatpush1.msra.mxu0 %v1008
    %2053 = vmatprep.subr.mxu0 0.0
    %2054 = vmatpush1.msra.mxu0 0.0
    %2055 = vmatprep.subr.mxu0 0.0
    %2056 = vmatpush1.msra.mxu0 0.0
    %2057 = vmatprep.subr.mxu0 0.0
    %2058 = vmatpush1.msra.mxu0 0.0
    %2059 = vmatprep.subr.mxu0 0.0
    %2060 = vmatpush1.msra.mxu0 0.0
    %2061 = vmatprep.subr.mxu0 0.0
    %2062 = vmatpush1.msra.mxu0 0.0
    %2063 = vmatprep.subr.mxu0 0.0
    %2064 = vmatpush1.msra.mxu0 0.0
    %2065 = vmatprep.subr.mxu0 0.0
    %2066 = vmatpush1.msra.mxu0 0.0
    %2067 = vmatprep.subr.mxu0 0.0
    %2068 = vmatpush1.msra.mxu0 0.0
    %2069 = vmatprep.subr.mxu0 0.0
    %2070 = vmatpush1.msra.mxu0 0.0
    %2071 = vmatprep.subr.mxu0 0.0
    %2072 = vmatpush1.msra.mxu0 0.0
    %2073 = vmatprep.subr.mxu0 0.0
    %2074 = vmatpush1.msra.mxu0 0.0
    %2075 = vmatprep.subr.mxu0 0.0
    %2076 = vmatpush1.msra.mxu0 0.0
    %2077 = vmatprep.subr.mxu0 0.0
    %2078 = vmatpush1.msra.mxu0 0.0
    %2079 = vmatprep.subr.mxu0 0.0
    %2080 = vmatpush1.msra.mxu0 0.0
    %2081 = vmatprep.subr.mxu0 0.0
    %2082 = vmatpush1.msra.mxu0 0.0
    %2083 = vmatprep.subr.mxu0 0.0
    %2084 = vmatpush1.msra.mxu0 0.0
    %2085 = vmatprep.subr.mxu0 0.0
    %2086 = vmatpush1.msra.mxu0 0.0
    %2087 = vmatprep.subr.mxu0 0.0
    %2088 = vmatpush1.msra.mxu0 0.0
    %2089 = vmatprep.subr.mxu0 0.0
    %2090 = vmatpush1.msra.mxu0 0.0
    %2091 = vmatprep.subr.mxu0 0.0
    %2092 = vmatpush1.msra.mxu0 0.0
    %2093 = vmatprep.subr.mxu0 0.0
    %2094 = vmatpush1.msra.mxu0 0.0
    %2095 = vmatprep.subr.mxu0 0.0
    %2096 = vmatpush1.msra.mxu0 0.0
    %2097 = vmatprep.subr.mxu0 0.0
    %2098 = vmatpush1.msra.mxu0 0.0
    %2099 = vmatprep.subr.mxu0 0.0
    %2100 = vmatpush1.msra.mxu0 0.0
    %2101 = vmatprep.subr.mxu0 0.0
    %2102 = vmatpush1.msra.mxu0 0.0
    %2103 = vmatprep.subr.mxu0 0.0
    %2104 = vmatpush1.msra.mxu0 0.0
    %2105 = vmatprep.subr.mxu0 0.0
    %2106 = vmatpush1.msra.mxu0 0.0
    %2107 = vmatprep.subr.mxu0 0.0
    %2108 = vmatpush1.msra.mxu0 0.0
    %2109 = vmatprep.subr.mxu0 0.0
    %2110 = vmatpush1.msra.mxu0 0.0
    %2111 = vmatprep.subr.mxu0 0.0
    %2112 = vmatpush1.msra.mxu0 0.0
    %2113 = vmatprep.subr.mxu0 0.0
    %2114 = vmatpush1.msra.mxu0 0.0
    %2115 = vmatprep.mubr.f32.mxu0 0.0
    %2116 = vmatmul.mubr.f32.gmra.mrb[0].mxu0 %v2049
    %v2117 = vpop.f32.mrb[0].mxu0
    %v2118 = vadd.f32 0.0, %v2117
    %v2119 = vpop.f32.mrb[0].mxu0
    %2120 = vdwg.mxu0
    %v2122 = vsel %vm1715, %v1751, 0
    %2124 = vmatprep.subr.mxu0 0.0
    %2125 = vmatpush1.msra.mxu0 %v1013
    %2126 = vmatprep.subr.mxu0 0.0
    %2127 = vmatpush1.msra.mxu0 0.0
    %2128 = vmatprep.subr.mxu0 0.0
    %2129 = vmatpush1.msra.mxu0 0.0
    %2130 = vmatprep.subr.mxu0 0.0
    %2131 = vmatpush1.msra.mxu0 0.0
    %2132 = vmatprep.subr.mxu0 0.0
    %2133 = vmatpush1.msra.mxu0 0.0
    %2134 = vmatprep.subr.mxu0 0.0
    %2135 = vmatpush1.msra.mxu0 0.0
    %2136 = vmatprep.subr.mxu0 0.0
    %2137 = vmatpush1.msra.mxu0 0.0
    %2138 = vmatprep.subr.mxu0 0.0
    %2139 = vmatpush1.msra.mxu0 0.0
    %2140 = vmatprep.subr.mxu0 0.0
    %2141 = vmatpush1.msra.mxu0 0.0
    %2142 = vmatprep.subr.mxu0 0.0
    %2143 = vmatpush1.msra.mxu0 0.0
    %2144 = vmatprep.subr.mxu0 0.0
    %2145 = vmatpush1.msra.mxu0 0.0
    %2146 = vmatprep.subr.mxu0 0.0
    %2147 = vmatpush1.msra.mxu0 0.0
    %2148 = vmatprep.subr.mxu0 0.0
    %2149 = vmatpush1.msra.mxu0 0.0
    %2150 = vmatprep.subr.mxu0 0.0
    %2151 = vmatpush1.msra.mxu0 0.0
    %2152 = vmatprep.subr.mxu0 0.0
    %2153 = vmatpush1.msra.mxu0 0.0
    %2154 = vmatprep.subr.mxu0 0.0
    %2155 = vmatpush1.msra.mxu0 0.0
    %2156 = vmatprep.subr.mxu0 0.0
    %2157 = vmatpush1.msra.mxu0 0.0
    %2158 = vmatprep.subr.mxu0 0.0
    %2159 = vmatpush1.msra.mxu0 0.0
    %2160 = vmatprep.subr.mxu0 0.0
    %2161 = vmatpush1.msra.mxu0 0.0
    %2162 = vmatprep.subr.mxu0 0.0
    %2163 = vmatpush1.msra.mxu0 0.0
    %2164 = vmatprep.subr.mxu0 0.0
    %2165 = vmatpush1.msra.mxu0 0.0
    %2166 = vmatprep.subr.mxu0 0.0
    %2167 = vmatpush1.msra.mxu0 0.0
    %2168 = vmatprep.subr.mxu0 0.0
    %2169 = vmatpush1.msra.mxu0 0.0
    %2170 = vmatprep.subr.mxu0 0.0
    %2171 = vmatpush1.msra.mxu0 0.0
    %2172 = vmatprep.subr.mxu0 0.0
    %2173 = vmatpush1.msra.mxu0 0.0
    %2174 = vmatprep.subr.mxu0 0.0
    %2175 = vmatpush1.msra.mxu0 0.0
    %2176 = vmatprep.subr.mxu0 0.0
    %2177 = vmatpush1.msra.mxu0 0.0
    %2178 = vmatprep.subr.mxu0 0.0
    %2179 = vmatpush1.msra.mxu0 0.0
    %2180 = vmatprep.subr.mxu0 0.0
    %2181 = vmatpush1.msra.mxu0 0.0
    %2182 = vmatprep.subr.mxu0 0.0
    %2183 = vmatpush1.msra.mxu0 0.0
    %2184 = vmatprep.subr.mxu0 0.0
    %2185 = vmatpush1.msra.mxu0 0.0
    %2186 = vmatprep.subr.mxu0 0.0
    %2187 = vmatpush1.msra.mxu0 0.0
    %2188 = vmatprep.mubr.f32.mxu0 0.0
    %2189 = vmatmul.mubr.f32.gmra.mrb[0].mxu0 %v2122
    %v2190 = vpop.f32.mrb[0].mxu0
    %v2191 = vadd.f32 0.0, %v2190
    %v2192 = vpop.f32.mrb[0].mxu0
    %2193 = vdwg.mxu0
    %v2195 = vsel %vm1715, %v1753, 0
    %2197 = vmatprep.subr.mxu0 0.0
    %2198 = vmatpush1.msra.mxu0 %v1083
    %2199 = vmatprep.subr.mxu0 0.0
    %2200 = vmatpush1.msra.mxu0 0.0
    %2201 = vmatprep.subr.mxu0 0.0
    %2202 = vmatpush1.msra.mxu0 0.0
    %2203 = vmatprep.subr.mxu0 0.0
    %2204 = vmatpush1.msra.mxu0 0.0
    %2205 = vmatprep.subr.mxu0 0.0
    %2206 = vmatpush1.msra.mxu0 0.0
    %2207 = vmatprep.subr.mxu0 0.0
    %2208 = vmatpush1.msra.mxu0 0.0
    %2209 = vmatprep.subr.mxu0 0.0
    %2210 = vmatpush1.msra.mxu0 0.0
    %2211 = vmatprep.subr.mxu0 0.0
    %2212 = vmatpush1.msra.mxu0 0.0
    %2213 = vmatprep.subr.mxu0 0.0
    %2214 = vmatpush1.msra.mxu0 0.0
    %2215 = vmatprep.subr.mxu0 0.0
    %2216 = vmatpush1.msra.mxu0 0.0
    %2217 = vmatprep.subr.mxu0 0.0
    %2218 = vmatpush1.msra.mxu0 0.0
    %2219 = vmatprep.subr.mxu0 0.0
    %2220 = vmatpush1.msra.mxu0 0.0
    %2221 = vmatprep.subr.mxu0 0.0
    %2222 = vmatpush1.msra.mxu0 0.0
    %2223 = vmatprep.subr.mxu0 0.0
    %2224 = vmatpush1.msra.mxu0 0.0
    %2225 = vmatprep.subr.mxu0 0.0
    %2226 = vmatpush1.msra.mxu0 0.0
    %2227 = vmatprep.subr.mxu0 0.0
    %2228 = vmatpush1.msra.mxu0 0.0
    %2229 = vmatprep.subr.mxu0 0.0
    %2230 = vmatpush1.msra.mxu0 0.0
    %2231 = vmatprep.subr.mxu0 0.0
    %2232 = vmatpush1.msra.mxu0 0.0
    %2233 = vmatprep.subr.mxu0 0.0
    %2234 = vmatpush1.msra.mxu0 0.0
    %2235 = vmatprep.subr.mxu0 0.0
    %2236 = vmatpush1.msra.mxu0 0.0
    %2237 = vmatprep.subr.mxu0 0.0
    %2238 = vmatpush1.msra.mxu0 0.0
    %2239 = vmatprep.subr.mxu0 0.0
    %2240 = vmatpush1.msra.mxu0 0.0
    %2241 = vmatprep.subr.mxu0 0.0
    %2242 = vmatpush1.msra.mxu0 0.0
    %2243 = vmatprep.subr.mxu0 0.0
    %2244 = vmatpush1.msra.mxu0 0.0
    %2245 = vmatprep.subr.mxu0 0.0
    %2246 = vmatpush1.msra.mxu0 0.0
    %2247 = vmatprep.subr.mxu0 0.0
    %2248 = vmatpush1.msra.mxu0 0.0
    %2249 = vmatprep.subr.mxu0 0.0
    %2250 = vmatpush1.msra.mxu0 0.0
    %2251 = vmatprep.subr.mxu0 0.0
    %2252 = vmatpush1.msra.mxu0 0.0
    %2253 = vmatprep.subr.mxu0 0.0
    %2254 = vmatpush1.msra.mxu0 0.0
    %2255 = vmatprep.subr.mxu0 0.0
    %2256 = vmatpush1.msra.mxu0 0.0
    %2257 = vmatprep.subr.mxu0 0.0
    %2258 = vmatpush1.msra.mxu0 0.0
    %2259 = vmatprep.subr.mxu0 0.0
    %2260 = vmatpush1.msra.mxu0 0.0
    %2261 = vmatprep.mubr.f32.mxu0 0.0
    %2262 = vmatmul.mubr.f32.gmra.mrb[0].mxu0 %v2195
    %v2263 = vpop.f32.mrb[0].mxu0
    %v2264 = vadd.f32 0.0, %v2263
    %v2265 = vpop.f32.mrb[0].mxu0
    %2266 = vdwg.mxu0
    %v2268 = vsel %vm1715, %v1755, 0
    %2270 = vmatprep.subr.mxu0 0.0
    %2271 = vmatpush1.msra.mxu0 %v1088
    %2272 = vmatprep.subr.mxu0 0.0
    %2273 = vmatpush1.msra.mxu0 0.0
    %2274 = vmatprep.subr.mxu0 0.0
    %2275 = vmatpush1.msra.mxu0 0.0
    %2276 = vmatprep.subr.mxu0 0.0
    %2277 = vmatpush1.msra.mxu0 0.0
    %2278 = vmatprep.subr.mxu0 0.0
    %2279 = vmatpush1.msra.mxu0 0.0
    %2280 = vmatprep.subr.mxu0 0.0
    %2281 = vmatpush1.msra.mxu0 0.0
    %2282 = vmatprep.subr.mxu0 0.0
    %2283 = vmatpush1.msra.mxu0 0.0
    %2284 = vmatprep.subr.mxu0 0.0
    %2285 = vmatpush1.msra.mxu0 0.0
    %2286 = vmatprep.subr.mxu0 0.0
    %2287 = vmatpush1.msra.mxu0 0.0
    %2288 = vmatprep.subr.mxu0 0.0
    %2289 = vmatpush1.msra.mxu0 0.0
    %2290 = vmatprep.subr.mxu0 0.0
    %2291 = vmatpush1.msra.mxu0 0.0
    %2292 = vmatprep.subr.mxu0 0.0
    %2293 = vmatpush1.msra.mxu0 0.0
    %2294 = vmatprep.subr.mxu0 0.0
    %2295 = vmatpush1.msra.mxu0 0.0
    %2296 = vmatprep.subr.mxu0 0.0
    %2297 = vmatpush1.msra.mxu0 0.0
    %2298 = vmatprep.subr.mxu0 0.0
    %2299 = vmatpush1.msra.mxu0 0.0
    %2300 = vmatprep.subr.mxu0 0.0
    %2301 = vmatpush1.msra.mxu0 0.0
    %2302 = vmatprep.subr.mxu0 0.0
    %2303 = vmatpush1.msra.mxu0 0.0
    %2304 = vmatprep.subr.mxu0 0.0
    %2305 = vmatpush1.msra.mxu0 0.0
    %2306 = vmatprep.subr.mxu0 0.0
    %2307 = vmatpush1.msra.mxu0 0.0
    %2308 = vmatprep.subr.mxu0 0.0
    %2309 = vmatpush1.msra.mxu0 0.0
    %2310 = vmatprep.subr.mxu0 0.0
    %2311 = vmatpush1.msra.mxu0 0.0
    %2312 = vmatprep.subr.mxu0 0.0
    %2313 = vmatpush1.msra.mxu0 0.0
    %2314 = vmatprep.subr.mxu0 0.0
    %2315 = vmatpush1.msra.mxu0 0.0
    %2316 = vmatprep.subr.mxu0 0.0
    %2317 = vmatpush1.msra.mxu0 0.0
    %2318 = vmatprep.subr.mxu0 0.0
    %2319 = vmatpush1.msra.mxu0 0.0
    %2320 = vmatprep.subr.mxu0 0.0
    %2321 = vmatpush1.msra.mxu0 0.0
    %2322 = vmatprep.subr.mxu0 0.0
    %2323 = vmatpush1.msra.mxu0 0.0
    %2324 = vmatprep.subr.mxu0 0.0
    %2325 = vmatpush1.msra.mxu0 0.0
    %2326 = vmatprep.subr.mxu0 0.0
    %2327 = vmatpush1.msra.mxu0 0.0
    %2328 = vmatprep.subr.mxu0 0.0
    %2329 = vmatpush1.msra.mxu0 0.0
    %2330 = vmatprep.subr.mxu0 0.0
    %2331 = vmatpush1.msra.mxu0 0.0
    %2332 = vmatprep.subr.mxu0 0.0
    %2333 = vmatpush1.msra.mxu0 0.0
    %2334 = vmatprep.mubr.f32.mxu0 0.0
    %2335 = vmatmul.mubr.f32.gmra.mrb[0].mxu0 %v2268
    %v2336 = vpop.f32.mrb[0].mxu0
    %v2337 = vadd.f32 0.0, %v2336
    %v2338 = vpop.f32.mrb[0].mxu0
    %2339 = vdwg.mxu0
    %v2340 = vld [vmem:[%s3] sm:$0xff]
    %v2341 = vld [vmem:[%s3 + $0x8] sm:$0xff]
    %v2342 = vld [vmem:[%s3 + $0x10] sm:$0xff]
    %v2343 = vld [vmem:[%s3 + $0x18] sm:$0xff]
    %v2344 = vld [vmem:[%s3 + $0x20] sm:$0xff]
    %v2345 = vld [vmem:[%s3 + $0x28] sm:$0xff]
    %v2346 = vld [vmem:[%s3 + $0x30] sm:$0xff]
    %v2347 = vld [vmem:[%s3 + $0x38] sm:$0xff]
    %v2348 = vld [vmem:[%s3 + $0x40] sm:$0xff]
    %v2349 = vld [vmem:[%s3 + $0x48] sm:$0xff]
    %v2350 = vld [vmem:[%s3 + $0x50] sm:$0xff]
    %v2351 = vld [vmem:[%s3 + $0x58] sm:$0xff]
    %v2352 = vld [vmem:[%s3 + $0x60] sm:$0xff]
    %v2353 = vld [vmem:[%s3 + $0x68] sm:$0xff]
    %v2354 = vld [vmem:[%s3 + $0x70] sm:$0xff]
    %v2355 = vld [vmem:[%s3 + $0x78] sm:$0xff]
    %v2357 = vsel %vm184, %v1826, 0
    %v2360 = vsel %vm184, %v1899, 0
    %2362 = vmatprep.subr.mxu0 0.0
    %2363 = vmatpush1.msra.mxu0 %v2340
    %2364 = vmatprep.subr.mxu0 0.0
    %2365 = vmatpush1.msra.mxu0 %v2341
    %2366 = vmatprep.subr.mxu0 0.0
    %2367 = vmatpush1.msra.mxu0 %v2342
    %2368 = vmatprep.subr.mxu0 0.0
    %2369 = vmatpush1.msra.mxu0 %v2343
    %2370 = vmatprep.subr.mxu0 0.0
    %2371 = vmatpush1.msra.mxu0 0.0
    %2372 = vmatprep.subr.mxu0 0.0
    %2373 = vmatpush1.msra.mxu0 0.0
    %2374 = vmatprep.subr.mxu0 0.0
    %2375 = vmatpush1.msra.mxu0 0.0
    %2376 = vmatprep.subr.mxu0 0.0
    %2377 = vmatpush1.msra.mxu0 0.0
    %2378 = vmatprep.subr.mxu0 0.0
    %2379 = vmatpush1.msra.mxu0 0.0
    %2380 = vmatprep.subr.mxu0 0.0
    %2381 = vmatpush1.msra.mxu0 0.0
    %2382 = vmatprep.subr.mxu0 0.0
    %2383 = vmatpush1.msra.mxu0 0.0
    %2384 = vmatprep.subr.mxu0 0.0
    %2385 = vmatpush1.msra.mxu0 0.0
    %2386 = vmatprep.subr.mxu0 0.0
    %2387 = vmatpush1.msra.mxu0 0.0
    %2388 = vmatprep.subr.mxu0 0.0
    %2389 = vmatpush1.msra.mxu0 0.0
    %2390 = vmatprep.subr.mxu0 0.0
    %2391 = vmatpush1.msra.mxu0 0.0
    %2392 = vmatprep.subr.mxu0 0.0
    %2393 = vmatpush1.msra.mxu0 0.0
    %2394 = vmatprep.subr.mxu0 0.0
    %2395 = vmatpush1.msra.mxu0 0.0
    %2396 = vmatprep.subr.mxu0 0.0
    %2397 = vmatpush1.msra.mxu0 0.0
    %2398 = vmatprep.subr.mxu0 0.0
    %2399 = vmatpush1.msra.mxu0 0.0
    %2400 = vmatprep.subr.mxu0 0.0
    %2401 = vmatpush1.msra.mxu0 0.0
    %2402 = vmatprep.subr.mxu0 0.0
    %2403 = vmatpush1.msra.mxu0 0.0
    %2404 = vmatprep.subr.mxu0 0.0
    %2405 = vmatpush1.msra.mxu0 0.0
    %2406 = vmatprep.subr.mxu0 0.0
    %2407 = vmatpush1.msra.mxu0 0.0
    %2408 = vmatprep.subr.mxu0 0.0
    %2409 = vmatpush1.msra.mxu0 0.0
    %2410 = vmatprep.subr.mxu0 0.0
    %2411 = vmatpush1.msra.mxu0 0.0
    %2412 = vmatprep.subr.mxu0 0.0
    %2413 = vmatpush1.msra.mxu0 0.0
    %2414 = vmatprep.subr.mxu0 0.0
    %2415 = vmatpush1.msra.mxu0 0.0
    %2416 = vmatprep.subr.mxu0 0.0
    %2417 = vmatpush1.msra.mxu0 0.0
    %2418 = vmatprep.subr.mxu0 0.0
    %2419 = vmatpush1.msra.mxu0 0.0
    %2420 = vmatprep.subr.mxu0 0.0
    %2421 = vmatpush1.msra.mxu0 0.0
    %2422 = vmatprep.subr.mxu0 0.0
    %2423 = vmatpush1.msra.mxu0 0.0
    %2424 = vmatprep.subr.mxu0 0.0
    %2425 = vmatpush1.msra.mxu0 0.0
    %2426 = vmatprep.mubr.f32.mxu0 0.0
    %2427 = vmatmul.mubr.f32.gmra.mrb[0].mxu0 %v2357
    %v2428 = vpop.f32.mrb[0].mxu0
    %v2429 = vadd.f32 0.0, %v2428
    %v2430 = vpop.f32.mrb[0].mxu0
    %2431 = vmatprep.mubr.f32.mxu0 0.0
    %2432 = vmatmul.mubr.f32.gmra.mrb[0].mxu0 %v2360
    %v2433 = vpop.f32.mrb[0].mxu0
    %v2434 = vadd.f32 0.0, %v2433
    %v2435 = vpop.f32.mrb[0].mxu0
    %2436 = vdwg.mxu0
    %v2438 = vsel %vm184, %v1972, 0
    %v2441 = vsel %vm184, %v2045, 0
    %2443 = vmatprep.subr.mxu0 0.0
    %2444 = vmatpush1.msra.mxu0 %v2344
    %2445 = vmatprep.subr.mxu0 0.0
    %2446 = vmatpush1.msra.mxu0 %v2345
    %2447 = vmatprep.subr.mxu0 0.0
    %2448 = vmatpush1.msra.mxu0 %v2346
    %2449 = vmatprep.subr.mxu0 0.0
    %2450 = vmatpush1.msra.mxu0 %v2347
    %2451 = vmatprep.subr.mxu0 0.0
    %2452 = vmatpush1.msra.mxu0 0.0
    %2453 = vmatprep.subr.mxu0 0.0
    %2454 = vmatpush1.msra.mxu0 0.0
    %2455 = vmatprep.subr.mxu0 0.0
    %2456 = vmatpush1.msra.mxu0 0.0
    %2457 = vmatprep.subr.mxu0 0.0
    %2458 = vmatpush1.msra.mxu0 0.0
    %2459 = vmatprep.subr.mxu0 0.0
    %2460 = vmatpush1.msra.mxu0 0.0
    %2461 = vmatprep.subr.mxu0 0.0
    %2462 = vmatpush1.msra.mxu0 0.0
    %2463 = vmatprep.subr.mxu0 0.0
    %2464 = vmatpush1.msra.mxu0 0.0
    %2465 = vmatprep.subr.mxu0 0.0
    %2466 = vmatpush1.msra.mxu0 0.0
    %2467 = vmatprep.subr.mxu0 0.0
    %2468 = vmatpush1.msra.mxu0 0.0
    %2469 = vmatprep.subr.mxu0 0.0
    %2470 = vmatpush1.msra.mxu0 0.0
    %2471 = vmatprep.subr.mxu0 0.0
    %2472 = vmatpush1.msra.mxu0 0.0
    %2473 = vmatprep.subr.mxu0 0.0
    %2474 = vmatpush1.msra.mxu0 0.0
    %2475 = vmatprep.subr.mxu0 0.0
    %2476 = vmatpush1.msra.mxu0 0.0
    %2477 = vmatprep.subr.mxu0 0.0
    %2478 = vmatpush1.msra.mxu0 0.0
    %2479 = vmatprep.subr.mxu0 0.0
    %2480 = vmatpush1.msra.mxu0 0.0
    %2481 = vmatprep.subr.mxu0 0.0
    %2482 = vmatpush1.msra.mxu0 0.0
    %2483 = vmatprep.subr.mxu0 0.0
    %2484 = vmatpush1.msra.mxu0 0.0
    %2485 = vmatprep.subr.mxu0 0.0
    %2486 = vmatpush1.msra.mxu0 0.0
    %2487 = vmatprep.subr.mxu0 0.0
    %2488 = vmatpush1.msra.mxu0 0.0
    %2489 = vmatprep.subr.mxu0 0.0
    %2490 = vmatpush1.msra.mxu0 0.0
    %2491 = vmatprep.subr.mxu0 0.0
    %2492 = vmatpush1.msra.mxu0 0.0
    %2493 = vmatprep.subr.mxu0 0.0
    %2494 = vmatpush1.msra.mxu0 0.0
    %2495 = vmatprep.subr.mxu0 0.0
    %2496 = vmatpush1.msra.mxu0 0.0
    %2497 = vmatprep.subr.mxu0 0.0
    %2498 = vmatpush1.msra.mxu0 0.0
    %2499 = vmatprep.subr.mxu0 0.0
    %2500 = vmatpush1.msra.mxu0 0.0
    %2501 = vmatprep.subr.mxu0 0.0
    %2502 = vmatpush1.msra.mxu0 0.0
    %2503 = vmatprep.subr.mxu0 0.0
    %2504 = vmatpush1.msra.mxu0 0.0
    %2505 = vmatprep.subr.mxu0 0.0
    %2506 = vmatpush1.msra.mxu0 0.0
    %2507 = vmatprep.mubr.f32.mxu0 0.0
    %2508 = vmatmul.mubr.f32.gmra.mrb[0].mxu0 %v2438
    %v2509 = vpop.f32.mrb[0].mxu0
    %v2510 = vadd.f32 0.0, %v2509
    %v2511 = vpop.f32.mrb[0].mxu0
    %2512 = vmatprep.mubr.f32.mxu0 0.0
    %2513 = vmatmul.mubr.f32.gmra.mrb[0].mxu0 %v2441
    %v2514 = vpop.f32.mrb[0].mxu0
    %v2515 = vadd.f32 0.0, %v2514
    %v2516 = vpop.f32.mrb[0].mxu0
    %2517 = vdwg.mxu0
    %v2519 = vsel %vm184, %v2118, 0
    %v2522 = vsel %vm184, %v2191, 0
    %2524 = vmatprep.subr.mxu0 0.0
    %2525 = vmatpush1.msra.mxu0 %v2348
    %2526 = vmatprep.subr.mxu0 0.0
    %2527 = vmatpush1.msra.mxu0 %v2349
    %2528 = vmatprep.subr.mxu0 0.0
    %2529 = vmatpush1.msra.mxu0 %v2350
    %2530 = vmatprep.subr.mxu0 0.0
    %2531 = vmatpush1.msra.mxu0 %v2351
    %2532 = vmatprep.subr.mxu0 0.0
    %2533 = vmatpush1.msra.mxu0 0.0
    %2534 = vmatprep.subr.mxu0 0.0
    %2535 = vmatpush1.msra.mxu0 0.0
    %2536 = vmatprep.subr.mxu0 0.0
    %2537 = vmatpush1.msra.mxu0 0.0
    %2538 = vmatprep.subr.mxu0 0.0
    %2539 = vmatpush1.msra.mxu0 0.0
    %2540 = vmatprep.subr.mxu0 0.0
    %2541 = vmatpush1.msra.mxu0 0.0
    %2542 = vmatprep.subr.mxu0 0.0
    %2543 = vmatpush1.msra.mxu0 0.0
    %2544 = vmatprep.subr.mxu0 0.0
    %2545 = vmatpush1.msra.mxu0 0.0
    %2546 = vmatprep.subr.mxu0 0.0
    %2547 = vmatpush1.msra.mxu0 0.0
    %2548 = vmatprep.subr.mxu0 0.0
    %2549 = vmatpush1.msra.mxu0 0.0
    %2550 = vmatprep.subr.mxu0 0.0
    %2551 = vmatpush1.msra.mxu0 0.0
    %2552 = vmatprep.subr.mxu0 0.0
    %2553 = vmatpush1.msra.mxu0 0.0
    %2554 = vmatprep.subr.mxu0 0.0
    %2555 = vmatpush1.msra.mxu0 0.0
    %2556 = vmatprep.subr.mxu0 0.0
    %2557 = vmatpush1.msra.mxu0 0.0
    %2558 = vmatprep.subr.mxu0 0.0
    %2559 = vmatpush1.msra.mxu0 0.0
    %2560 = vmatprep.subr.mxu0 0.0
    %2561 = vmatpush1.msra.mxu0 0.0
    %2562 = vmatprep.subr.mxu0 0.0
    %2563 = vmatpush1.msra.mxu0 0.0
    %2564 = vmatprep.subr.mxu0 0.0
    %2565 = vmatpush1.msra.mxu0 0.0
    %2566 = vmatprep.subr.mxu0 0.0
    %2567 = vmatpush1.msra.mxu0 0.0
    %2568 = vmatprep.subr.mxu0 0.0
    %2569 = vmatpush1.msra.mxu0 0.0
    %2570 = vmatprep.subr.mxu0 0.0
    %2571 = vmatpush1.msra.mxu0 0.0
    %2572 = vmatprep.subr.mxu0 0.0
    %2573 = vmatpush1.msra.mxu0 0.0
    %2574 = vmatprep.subr.mxu0 0.0
    %2575 = vmatpush1.msra.mxu0 0.0
    %2576 = vmatprep.subr.mxu0 0.0
    %2577 = vmatpush1.msra.mxu0 0.0
    %2578 = vmatprep.subr.mxu0 0.0
    %2579 = vmatpush1.msra.mxu0 0.0
    %2580 = vmatprep.subr.mxu0 0.0
    %2581 = vmatpush1.msra.mxu0 0.0
    %2582 = vmatprep.subr.mxu0 0.0
    %2583 = vmatpush1.msra.mxu0 0.0
    %2584 = vmatprep.subr.mxu0 0.0
    %2585 = vmatpush1.msra.mxu0 0.0
    %2586 = vmatprep.subr.mxu0 0.0
    %2587 = vmatpush1.msra.mxu0 0.0
    %2588 = vmatprep.mubr.f32.mxu0 0.0
    %2589 = vmatmul.mubr.f32.gmra.mrb[0].mxu0 %v2519
    %v2590 = vpop.f32.mrb[0].mxu0
    %v2591 = vadd.f32 0.0, %v2590
    %v2592 = vpop.f32.mrb[0].mxu0
    %2593 = vmatprep.mubr.f32.mxu0 0.0
    %2594 = vmatmul.mubr.f32.gmra.mrb[0].mxu0 %v2522
    %v2595 = vpop.f32.mrb[0].mxu0
    %v2596 = vadd.f32 0.0, %v2595
    %v2597 = vpop.f32.mrb[0].mxu0
    %2598 = vdwg.mxu0
    %v2600 = vsel %vm184, %v2264, 0
    %v2603 = vsel %vm184, %v2337, 0
    %2605 = vmatprep.subr.mxu0 0.0
    %2606 = vmatpush1.msra.mxu0 %v2352
    %2607 = vmatprep.subr.mxu0 0.0
    %2608 = vmatpush1.msra.mxu0 %v2353
    %2609 = vmatprep.subr.mxu0 0.0
    %2610 = vmatpush1.msra.mxu0 %v2354
    %2611 = vmatprep.subr.mxu0 0.0
    %2612 = vmatpush1.msra.mxu0 %v2355
    %2613 = vmatprep.subr.mxu0 0.0
    %2614 = vmatpush1.msra.mxu0 0.0
    %2615 = vmatprep.subr.mxu0 0.0
    %2616 = vmatpush1.msra.mxu0 0.0
    %2617 = vmatprep.subr.mxu0 0.0
    %2618 = vmatpush1.msra.mxu0 0.0
    %2619 = vmatprep.subr.mxu0 0.0
    %2620 = vmatpush1.msra.mxu0 0.0
    %2621 = vmatprep.subr.mxu0 0.0
    %2622 = vmatpush1.msra.mxu0 0.0
    %2623 = vmatprep.subr.mxu0 0.0
    %2624 = vmatpush1.msra.mxu0 0.0
    %2625 = vmatprep.subr.mxu0 0.0
    %2626 = vmatpush1.msra.mxu0 0.0
    %2627 = vmatprep.subr.mxu0 0.0
    %2628 = vmatpush1.msra.mxu0 0.0
    %2629 = vmatprep.subr.mxu0 0.0
    %2630 = vmatpush1.msra.mxu0 0.0
    %2631 = vmatprep.subr.mxu0 0.0
    %2632 = vmatpush1.msra.mxu0 0.0
    %2633 = vmatprep.subr.mxu0 0.0
    %2634 = vmatpush1.msra.mxu0 0.0
    %2635 = vmatprep.subr.mxu0 0.0
    %2636 = vmatpush1.msra.mxu0 0.0
    %2637 = vmatprep.subr.mxu0 0.0
    %2638 = vmatpush1.msra.mxu0 0.0
    %2639 = vmatprep.subr.mxu0 0.0
    %2640 = vmatpush1.msra.mxu0 0.0
    %2641 = vmatprep.subr.mxu0 0.0
    %2642 = vmatpush1.msra.mxu0 0.0
    %2643 = vmatprep.subr.mxu0 0.0
    %2644 = vmatpush1.msra.mxu0 0.0
    %2645 = vmatprep.subr.mxu0 0.0
    %2646 = vmatpush1.msra.mxu0 0.0
    %2647 = vmatprep.subr.mxu0 0.0
    %2648 = vmatpush1.msra.mxu0 0.0
    %2649 = vmatprep.subr.mxu0 0.0
    %2650 = vmatpush1.msra.mxu0 0.0
    %2651 = vmatprep.subr.mxu0 0.0
    %2652 = vmatpush1.msra.mxu0 0.0
    %2653 = vmatprep.subr.mxu0 0.0
    %2654 = vmatpush1.msra.mxu0 0.0
    %2655 = vmatprep.subr.mxu0 0.0
    %2656 = vmatpush1.msra.mxu0 0.0
    %2657 = vmatprep.subr.mxu0 0.0
    %2658 = vmatpush1.msra.mxu0 0.0
    %2659 = vmatprep.subr.mxu0 0.0
    %2660 = vmatpush1.msra.mxu0 0.0
    %2661 = vmatprep.subr.mxu0 0.0
    %2662 = vmatpush1.msra.mxu0 0.0
    %2663 = vmatprep.subr.mxu0 0.0
    %2664 = vmatpush1.msra.mxu0 0.0
    %2665 = vmatprep.subr.mxu0 0.0
    %2666 = vmatpush1.msra.mxu0 0.0
    %2667 = vmatprep.subr.mxu0 0.0
    %2668 = vmatpush1.msra.mxu0 0.0
    %2669 = vmatprep.mubr.f32.mxu0 0.0
    %2670 = vmatmul.mubr.f32.gmra.mrb[0].mxu0 %v2600
    %v2671 = vpop.f32.mrb[0].mxu0
    %v2672 = vadd.f32 0.0, %v2671
    %v2673 = vpop.f32.mrb[0].mxu0
    %2674 = vmatprep.mubr.f32.mxu0 0.0
    %2675 = vmatmul.mubr.f32.gmra.mrb[0].mxu0 %v2603
    %v2676 = vpop.f32.mrb[0].mxu0
    %v2677 = vadd.f32 0.0, %v2676
    %v2678 = vpop.f32.mrb[0].mxu0
    %2679 = vdwg.mxu0
    %v2680 = vsel %vm184, %v2429, 0.0
    %v2681 = vsel %vm184, %v2510, 0.0
    %v2682 = vadd.f32 %v2680, %v2681
    %v2683 = vsel %vm184, %v2591, 0.0
    %v2684 = vadd.f32 %v2682, %v2683
    %v2685 = vsel %vm184, %v2672, 0.0
    %v2686 = vadd.f32 %v2684, %v2685
    %v2687 = vsel %vm184, %v2434, 0.0
    %v2688 = vsel %vm184, %v2515, 0.0
    %v2689 = vadd.f32 %v2687, %v2688
    %v2690 = vsel %vm184, %v2596, 0.0
    %v2691 = vadd.f32 %v2689, %v2690
    %v2692 = vsel %vm184, %v2677, 0.0
    %v2693 = vadd.f32 %v2691, %v2692
    %v2694 = vld [vmem:[%s4] sm:$0x1]
    %v2696 = vlaneseq
    %v2697 = vshrl.u32 %v2696, 7
    %v2698 = vsub.s32 0, %v2697
    %v2699 = vrot.slane %v2694, %v2698
    %v2701 = vadd.f32 %v2686, %v2699
    %v2702 = vadd.f32 %v2693, %v2699
    %v2703 = vadd.f32 %v134, %v2701
    %v2704 = vadd.f32 %v135, %v2702
    %v2705 = vld [vmem:[#allocation8] sm:$0x1]
    %v2706 = vld [vmem:[#allocation10] sm:$0x1]
    %v2707 = vsel %vm184, %v2703, 0.0
    %2708 = vadd.xlane.f32.xlu0 %v2707
    %v2709 = vpop.xlane.xlu0 %2708
    %v2710 = vsel %vm184, %v2704, 0.0
    %2711 = vadd.xlane.f32.xlu0 %v2710
    %v2712 = vpop.xlane.xlu0 %2711
    %v2713 = vrcp.pop 32.0
    %v2714 = vmul.f32 %v2709, %v2713
    %v2715 = vmul.f32 %v2712, %v2713
    %v2716 = vsub.f32 %v2703, %v2714
    %v2717 = vsub.f32 %v2704, %v2715
    %v2718 = vmul.f32 %v2716, %v2716
    %v2719 = vmul.f32 %v2717, %v2717
    %v2720 = vsel %vm184, %v2718, 0.0
    %2721 = vadd.xlane.f32.xlu0 %v2720
    %v2722 = vpop.xlane.xlu0 %2721
    %v2723 = vsel %vm184, %v2719, 0.0
    %2724 = vadd.xlane.f32.xlu0 %v2723
    %v2725 = vpop.xlane.xlu0 %2724
    %v2726 = vmul.f32 %v2722, %v2713
    %v2727 = vmul.f32 %v2725, %v2713
    %v2728 = vadd.f32 %v2726, 1e-05
    %v2729 = vadd.f32 %v2727, 1e-05
    %v2730 = vrsqrt.pop %v2728
    %v2731 = vrsqrt.pop %v2729
    %v2732 = vmul.f32 %v2716, %v2730
    %v2733 = vmul.f32 %v2717, %v2731
    %v2735 = vlaneseq
    %v2736 = vshrl.u32 %v2735, 7
    %v2737 = vsub.s32 0, %v2736
    %v2738 = vrot.slane %v2705, %v2737
    %v2740 = vmul.f32 %v2732, %v2738
    %v2741 = vmul.f32 %v2733, %v2738
    %v2743 = vlaneseq
    %v2744 = vshrl.u32 %v2743, 7
    %v2745 = vsub.s32 0, %v2744
    %v2746 = vrot.slane %v2706, %v2745
    %v2748 = vadd.f32 %v2740, %v2746
    %v2749 = vadd.f32 %v2741, %v2746
    %v2750 = vld [vmem:[%s7] sm:$0xff]
    %v2751 = vld [vmem:[%s7 + $0x8] sm:$0xff]
    %v2752 = vld [vmem:[%s7 + $0x10] sm:$0xff]
    %v2753 = vld [vmem:[%s7 + $0x18] sm:$0xff]
    %v2754 = vld [vmem:[#allocation11] sm:$0x1]
    %v2756 = vlaneseq
    %v2757 = vshrl.u32 %v2756, 7
    %v2758 = vsub.s32 0, %v2757
    %v2759 = vrot.slane %v2754, %v2758
    %v2762 = vsel %vm184, %v2748, 0
    %v2765 = vsel %vm184, %v2749, 0
    %2767 = vmatprep.subr.mxu0 0.0
    %2768 = vmatpush1.msra.mxu0 %v2750
    %2769 = vmatprep.subr.mxu0 0.0
    %2770 = vmatpush1.msra.mxu0 %v2751
    %2771 = vmatprep.subr.mxu0 0.0
    %2772 = vmatpush1.msra.mxu0 %v2752
    %2773 = vmatprep.subr.mxu0 0.0
    %2774 = vmatpush1.msra.mxu0 %v2753
    %2775 = vmatprep.subr.mxu0 0.0
    %2776 = vmatpush1.msra.mxu0 0.0
    %2777 = vmatprep.subr.mxu0 0.0
    %2778 = vmatpush1.msra.mxu0 0.0
    %2779 = vmatprep.subr.mxu0 0.0
    %2780 = vmatpush1.msra.mxu0 0.0
    %2781 = vmatprep.subr.mxu0 0.0
    %2782 = vmatpush1.msra.mxu0 0.0
    %2783 = vmatprep.subr.mxu0 0.0
    %2784 = vmatpush1.msra.mxu0 0.0
    %2785 = vmatprep.subr.mxu0 0.0
    %2786 = vmatpush1.msra.mxu0 0.0
    %2787 = vmatprep.subr.mxu0 0.0
    %2788 = vmatpush1.msra.mxu0 0.0
    %2789 = vmatprep.subr.mxu0 0.0
    %2790 = vmatpush1.msra.mxu0 0.0
    %2791 = vmatprep.subr.mxu0 0.0
    %2792 = vmatpush1.msra.mxu0 0.0
    %2793 = vmatprep.subr.mxu0 0.0
    %2794 = vmatpush1.msra.mxu0 0.0
    %2795 = vmatprep.subr.mxu0 0.0
    %2796 = vmatpush1.msra.mxu0 0.0
    %2797 = vmatprep.subr.mxu0 0.0
    %2798 = vmatpush1.msra.mxu0 0.0
    %2799 = vmatprep.subr.mxu0 0.0
    %2800 = vmatpush1.msra.mxu0 0.0
    %2801 = vmatprep.subr.mxu0 0.0
    %2802 = vmatpush1.msra.mxu0 0.0
    %2803 = vmatprep.subr.mxu0 0.0
    %2804 = vmatpush1.msra.mxu0 0.0
    %2805 = vmatprep.subr.mxu0 0.0
    %2806 = vmatpush1.msra.mxu0 0.0
    %2807 = vmatprep.subr.mxu0 0.0
    %2808 = vmatpush1.msra.mxu0 0.0
    %2809 = vmatprep.subr.mxu0 0.0
    %2810 = vmatpush1.msra.mxu0 0.0
    %2811 = vmatprep.subr.mxu0 0.0
    %2812 = vmatpush1.msra.mxu0 0.0
    %2813 = vmatprep.subr.mxu0 0.0
    %2814 = vmatpush1.msra.mxu0 0.0
    %2815 = vmatprep.subr.mxu0 0.0
    %2816 = vmatpush1.msra.mxu0 0.0
    %2817 = vmatprep.subr.mxu0 0.0
    %2818 = vmatpush1.msra.mxu0 0.0
    %2819 = vmatprep.subr.mxu0 0.0
    %2820 = vmatpush1.msra.mxu0 0.0
    %2821 = vmatprep.subr.mxu0 0.0
    %2822 = vmatpush1.msra.mxu0 0.0
    %2823 = vmatprep.subr.mxu0 0.0
    %2824 = vmatpush1.msra.mxu0 0.0
    %2825 = vmatprep.subr.mxu0 0.0
    %2826 = vmatpush1.msra.mxu0 0.0
    %2827 = vmatprep.subr.mxu0 0.0
    %2828 = vmatpush1.msra.mxu0 0.0
    %2829 = vmatprep.subr.mxu0 0.0
    %2830 = vmatpush1.msra.mxu0 0.0
    %2831 = vmatprep.mubr.f32.mxu0 0.0
    %2832 = vmatmul.mubr.f32.gmra.mrb[0].mxu0 %v2762
    %v2833 = vpop.f32.mrb[0].mxu0
    %v2834 = vadd.f32 %v2759, %v2833
    %v2835 = vpop.f32.mrb[0].mxu0
    %2836 = vmatprep.mubr.f32.mxu0 0.0
    %2837 = vmatmul.mubr.f32.gmra.mrb[0].mxu0 %v2765
    %v2838 = vpop.f32.mrb[0].mxu0
    %v2839 = vadd.f32 %v2759, %v2838
    %v2840 = vpop.f32.mrb[0].mxu0
    %2841 = vdwg.mxu0
    %v2842 = vmax.f32 %v2834, 0.0
    %v2843 = vmax.f32 %v2839, 0.0
    %v2844 = vld [vmem:[%s9] sm:$0xff]
    %v2845 = vld [vmem:[%s9 + $0x8] sm:$0xff]
    %v2846 = vld [vmem:[%s9 + $0x10] sm:$0xff]
    %v2847 = vld [vmem:[%s9 + $0x18] sm:$0xff]
    %v2848 = vld [vmem:[%s9 + $0x20] sm:$0xff]
    %v2849 = vld [vmem:[%s9 + $0x28] sm:$0xff]
    %v2850 = vld [vmem:[%s9 + $0x30] sm:$0xff]
    %v2851 = vld [vmem:[%s9 + $0x38] sm:$0xff]
    %v2852 = vld [vmem:[%s9 + $0x40] sm:$0xff]
    %v2853 = vld [vmem:[%s9 + $0x48] sm:$0xff]
    %v2854 = vld [vmem:[%s9 + $0x50] sm:$0xff]
    %v2855 = vld [vmem:[%s9 + $0x58] sm:$0xff]
    %v2856 = vld [vmem:[%s9 + $0x60] sm:$0xff]
    %v2857 = vld [vmem:[%s9 + $0x68] sm:$0xff]
    %v2858 = vld [vmem:[%s9 + $0x70] sm:$0xff]
    %v2859 = vld [vmem:[%s9 + $0x78] sm:$0xff]
    %v2860 = vld [vmem:[%s10] sm:$0x1]
    %v2862 = vlaneseq
    %v2863 = vshrl.u32 %v2862, 7
    %v2864 = vsub.s32 0, %v2863
    %v2865 = vrot.slane %v2860, %v2864
    %2867 = vmatprep.subr.mxu0 0.0
    %2868 = vmatpush1.msra.mxu0 %v2844
    %2869 = vmatprep.subr.mxu0 0.0
    %2870 = vmatpush1.msra.mxu0 %v2845
    %2871 = vmatprep.subr.mxu0 0.0
    %2872 = vmatpush1.msra.mxu0 %v2846
    %2873 = vmatprep.subr.mxu0 0.0
    %2874 = vmatpush1.msra.mxu0 %v2847
    %2875 = vmatprep.subr.mxu0 0.0
    %2876 = vmatpush1.msra.mxu0 %v2848
    %2877 = vmatprep.subr.mxu0 0.0
    %2878 = vmatpush1.msra.mxu0 %v2849
    %2879 = vmatprep.subr.mxu0 0.0
    %2880 = vmatpush1.msra.mxu0 %v2850
    %2881 = vmatprep.subr.mxu0 0.0
    %2882 = vmatpush1.msra.mxu0 %v2851
    %2883 = vmatprep.subr.mxu0 0.0
    %2884 = vmatpush1.msra.mxu0 %v2852
    %2885 = vmatprep.subr.mxu0 0.0
    %2886 = vmatpush1.msra.mxu0 %v2853
    %2887 = vmatprep.subr.mxu0 0.0
    %2888 = vmatpush1.msra.mxu0 %v2854
    %2889 = vmatprep.subr.mxu0 0.0
    %2890 = vmatpush1.msra.mxu0 %v2855
    %2891 = vmatprep.subr.mxu0 0.0
    %2892 = vmatpush1.msra.mxu0 %v2856
    %2893 = vmatprep.subr.mxu0 0.0
    %2894 = vmatpush1.msra.mxu0 %v2857
    %2895 = vmatprep.subr.mxu0 0.0
    %2896 = vmatpush1.msra.mxu0 %v2858
    %2897 = vmatprep.subr.mxu0 0.0
    %2898 = vmatpush1.msra.mxu0 %v2859
    %2899 = vmatprep.subr.mxu0 0.0
    %2900 = vmatpush1.msra.mxu0 0.0
    %2901 = vmatprep.subr.mxu0 0.0
    %2902 = vmatpush1.msra.mxu0 0.0
    %2903 = vmatprep.subr.mxu0 0.0
    %2904 = vmatpush1.msra.mxu0 0.0
    %2905 = vmatprep.subr.mxu0 0.0
    %2906 = vmatpush1.msra.mxu0 0.0
    %2907 = vmatprep.subr.mxu0 0.0
    %2908 = vmatpush1.msra.mxu0 0.0
    %2909 = vmatprep.subr.mxu0 0.0
    %2910 = vmatpush1.msra.mxu0 0.0
    %2911 = vmatprep.subr.mxu0 0.0
    %2912 = vmatpush1.msra.mxu0 0.0
    %2913 = vmatprep.subr.mxu0 0.0
    %2914 = vmatpush1.msra.mxu0 0.0
    %2915 = vmatprep.subr.mxu0 0.0
    %2916 = vmatpush1.msra.mxu0 0.0
    %2917 = vmatprep.subr.mxu0 0.0
    %2918 = vmatpush1.msra.mxu0 0.0
    %2919 = vmatprep.subr.mxu0 0.0
    %2920 = vmatpush1.msra.mxu0 0.0
    %2921 = vmatprep.subr.mxu0 0.0
    %2922 = vmatpush1.msra.mxu0 0.0
    %2923 = vmatprep.subr.mxu0 0.0
    %2924 = vmatpush1.msra.mxu0 0.0
    %2925 = vmatprep.subr.mxu0 0.0
    %2926 = vmatpush1.msra.mxu0 0.0
    %2927 = vmatprep.subr.mxu0 0.0
    %2928 = vmatpush1.msra.mxu0 0.0
    %2929 = vmatprep.subr.mxu0 0.0
    %2930 = vmatpush1.msra.mxu0 0.0
    %2931 = vmatprep.mubr.f32.mxu0 0.0
    %2932 = vmatmul.mubr.f32.gmra.mrb[0].mxu0 %v2842
    %v2933 = vpop.f32.mrb[0].mxu0
    %v2934 = vadd.f32 %v2865, %v2933
    %v2935 = vpop.f32.mrb[0].mxu0
    %2936 = vmatprep.mubr.f32.mxu0 0.0
    %2937 = vmatmul.mubr.f32.gmra.mrb[0].mxu0 %v2843
    %v2938 = vpop.f32.mrb[0].mxu0
    %v2939 = vadd.f32 %v2865, %v2938
    %v2940 = vpop.f32.mrb[0].mxu0
    %2941 = vdwg.mxu0
    %v2942 = vadd.f32 %v2748, %v2934
    %v2943 = vadd.f32 %v2749, %v2939
    %v2944 = vld [vmem:[%s11] sm:$0x1]
    %v2945 = vld [vmem:[%s12] sm:$0x1]
    %v2946 = vsel %vm184, %v2942, 0.0
    %2947 = vadd.xlane.f32.xlu0 %v2946
    %v2948 = vpop.xlane.xlu0 %2947
    %v2949 = vsel %vm184, %v2943, 0.0
    %2950 = vadd.xlane.f32.xlu0 %v2949
    %v2951 = vpop.xlane.xlu0 %2950
    %v2952 = vmul.f32 %v2948, %v2713
    %v2953 = vmul.f32 %v2951, %v2713
    %v2954 = vsub.f32 %v2942, %v2952
    %v2955 = vsub.f32 %v2943, %v2953
    %v2956 = vmul.f32 %v2954, %v2954
    %v2957 = vmul.f32 %v2955, %v2955
    %v2958 = vsel %vm184, %v2956, 0.0
    %2959 = vadd.xlane.f32.xlu0 %v2958
    %v2960 = vpop.xlane.xlu0 %2959
    %v2961 = vsel %vm184, %v2957, 0.0
    %2962 = vadd.xlane.f32.xlu0 %v2961
    %v2963 = vpop.xlane.xlu0 %2962
    %v2964 = vmul.f32 %v2960, %v2713
    %v2965 = vmul.f32 %v2963, %v2713
    %v2966 = vadd.f32 %v2964, 1e-05
    %v2967 = vadd.f32 %v2965, 1e-05
    %v2968 = vrsqrt.pop %v2966
    %v2969 = vrsqrt.pop %v2967
    %v2970 = vmul.f32 %v2954, %v2968
    %v2971 = vmul.f32 %v2955, %v2969
    %v2973 = vlaneseq
    %v2974 = vshrl.u32 %v2973, 7
    %v2975 = vsub.s32 0, %v2974
    %v2976 = vrot.slane %v2944, %v2975
    %v2978 = vmul.f32 %v2970, %v2976
    %v2979 = vmul.f32 %v2971, %v2976
    %v2981 = vlaneseq
    %v2982 = vshrl.u32 %v2981, 7
    %v2983 = vsub.s32 0, %v2982
    %v2984 = vrot.slane %v2945, %v2983
    %v2986 = vadd.f32 %v2978, %v2984
    %v2987 = vadd.f32 %v2979, %v2984
    %s2988 = scalar_lea.vmem [#allocation7], 384
    %v2989 = vld [vmem:[%s2988] sm:$0xff]
    %v2990 = vld [vmem:[%s2988 + $0x8] sm:$0xff]
    %v2991 = vld [vmem:[%s2988 + $0x10] sm:$0xff]
    %v2992 = vld [vmem:[%s2988 + $0x18] sm:$0xff]
    %v2993 = vld [vmem:[%s2988 + $0x20] sm:$0xff]
    %v2994 = vld [vmem:[%s2988 + $0x28] sm:$0xff]
    %v2995 = vld [vmem:[%s2988 + $0x30] sm:$0xff]
    %v2996 = vld [vmem:[%s2988 + $0x38] sm:$0xff]
    %v2997 = vld [vmem:[%s2988 + $0x40] sm:$0xff]
    %v2998 = vld [vmem:[%s2988 + $0x48] sm:$0xff]
    %v2999 = vld [vmem:[%s2988 + $0x50] sm:$0xff]
    %v3000 = vld [vmem:[%s2988 + $0x58] sm:$0xff]
    %v3001 = vld [vmem:[%s2988 + $0x60] sm:$0xff]
    %v3002 = vld [vmem:[%s2988 + $0x68] sm:$0xff]
    %v3003 = vld [vmem:[%s2988 + $0x70] sm:$0xff]
    %v3004 = vld [vmem:[%s2988 + $0x78] sm:$0xff]
    %v3005 = vld [vmem:[%s2988 + $0x80] sm:$0xff]
    %v3006 = vld [vmem:[%s2988 + $0x88] sm:$0xff]
    %v3007 = vld [vmem:[%s2988 + $0x90] sm:$0xff]
    %v3008 = vld [vmem:[%s2988 + $0x98] sm:$0xff]
    %v3009 = vld [vmem:[%s2988 + $0xa0] sm:$0xff]
    %v3010 = vld [vmem:[%s2988 + $0xa8] sm:$0xff]
    %v3011 = vld [vmem:[%s2988 + $0xb0] sm:$0xff]
    %v3012 = vld [vmem:[%s2988 + $0xb8] sm:$0xff]
    %v3013 = vld [vmem:[%s2988 + $0xc0] sm:$0xff]
    %v3014 = vld [vmem:[%s2988 + $0xc8] sm:$0xff]
    %v3015 = vld [vmem:[%s2988 + $0xd0] sm:$0xff]
    %v3016 = vld [vmem:[%s2988 + $0xd8] sm:$0xff]
    %v3017 = vld [vmem:[%s2988 + $0xe0] sm:$0xff]
    %v3018 = vld [vmem:[%s2988 + $0xe8] sm:$0xff]
    %v3019 = vld [vmem:[%s2988 + $0xf0] sm:$0xff]
    %v3020 = vld [vmem:[%s2988 + $0xf8] sm:$0xff]
    %v3021 = vld [vmem:[%s2988 + $0x100] sm:$0xff]
    %v3022 = vld [vmem:[%s2988 + $0x108] sm:$0xff]
    %v3023 = vld [vmem:[%s2988 + $0x110] sm:$0xff]
    %v3024 = vld [vmem:[%s2988 + $0x118] sm:$0xff]
    %v3025 = vld [vmem:[%s2988 + $0x120] sm:$0xff]
    %v3026 = vld [vmem:[%s2988 + $0x128] sm:$0xff]
    %v3027 = vld [vmem:[%s2988 + $0x130] sm:$0xff]
    %v3028 = vld [vmem:[%s2988 + $0x138] sm:$0xff]
    %v3029 = vld [vmem:[%s2988 + $0x140] sm:$0xff]
    %v3030 = vld [vmem:[%s2988 + $0x148] sm:$0xff]
    %v3031 = vld [vmem:[%s2988 + $0x150] sm:$0xff]
    %v3032 = vld [vmem:[%s2988 + $0x158] sm:$0xff]
    %v3033 = vld [vmem:[%s2988 + $0x160] sm:$0xff]
    %v3034 = vld [vmem:[%s2988 + $0x168] sm:$0xff]
    %v3035 = vld [vmem:[%s2988 + $0x170] sm:$0xff]
    %v3036 = vld [vmem:[%s2988 + $0x178] sm:$0xff]
    %v3038 = vsel %vm184, %v2986, 0
    %v3041 = vsel %vm184, %v2987, 0
    %3043 = vmatprep.subr.mxu0 0.0
    %3044 = vmatpush1.msra.mxu0 %v2989
    %3045 = vmatprep.subr.mxu0 0.0
    %3046 = vmatpush1.msra.mxu0 %v2990
    %3047 = vmatprep.subr.mxu0 0.0
    %3048 = vmatpush1.msra.mxu0 %v2991
    %3049 = vmatprep.subr.mxu0 0.0
    %3050 = vmatpush1.msra.mxu0 %v2992
    %3051 = vmatprep.subr.mxu0 0.0
    %3052 = vmatpush1.msra.mxu0 0.0
    %3053 = vmatprep.subr.mxu0 0.0
    %3054 = vmatpush1.msra.mxu0 0.0
    %3055 = vmatprep.subr.mxu0 0.0
    %3056 = vmatpush1.msra.mxu0 0.0
    %3057 = vmatprep.subr.mxu0 0.0
    %3058 = vmatpush1.msra.mxu0 0.0
    %3059 = vmatprep.subr.mxu0 0.0
    %3060 = vmatpush1.msra.mxu0 0.0
    %3061 = vmatprep.subr.mxu0 0.0
    %3062 = vmatpush1.msra.mxu0 0.0
    %3063 = vmatprep.subr.mxu0 0.0
    %3064 = vmatpush1.msra.mxu0 0.0
    %3065 = vmatprep.subr.mxu0 0.0
    %3066 = vmatpush1.msra.mxu0 0.0
    %3067 = vmatprep.subr.mxu0 0.0
    %3068 = vmatpush1.msra.mxu0 0.0
    %3069 = vmatprep.subr.mxu0 0.0
    %3070 = vmatpush1.msra.mxu0 0.0
    %3071 = vmatprep.subr.mxu0 0.0
    %3072 = vmatpush1.msra.mxu0 0.0
    %3073 = vmatprep.subr.mxu0 0.0
    %3074 = vmatpush1.msra.mxu0 0.0
    %3075 = vmatprep.subr.mxu0 0.0
    %3076 = vmatpush1.msra.mxu0 0.0
    %3077 = vmatprep.subr.mxu0 0.0
    %3078 = vmatpush1.msra.mxu0 0.0
    %3079 = vmatprep.subr.mxu0 0.0
    %3080 = vmatpush1.msra.mxu0 0.0
    %3081 = vmatprep.subr.mxu0 0.0
    %3082 = vmatpush1.msra.mxu0 0.0
    %3083 = vmatprep.subr.mxu0 0.0
    %3084 = vmatpush1.msra.mxu0 0.0
    %3085 = vmatprep.subr.mxu0 0.0
    %3086 = vmatpush1.msra.mxu0 0.0
    %3087 = vmatprep.subr.mxu0 0.0
    %3088 = vmatpush1.msra.mxu0 0.0
    %3089 = vmatprep.subr.mxu0 0.0
    %3090 = vmatpush1.msra.mxu0 0.0
    %3091 = vmatprep.subr.mxu0 0.0
    %3092 = vmatpush1.msra.mxu0 0.0
    %3093 = vmatprep.subr.mxu0 0.0
    %3094 = vmatpush1.msra.mxu0 0.0
    %3095 = vmatprep.subr.mxu0 0.0
    %3096 = vmatpush1.msra.mxu0 0.0
    %3097 = vmatprep.subr.mxu0 0.0
    %3098 = vmatpush1.msra.mxu0 0.0
    %3099 = vmatprep.subr.mxu0 0.0
    %3100 = vmatpush1.msra.mxu0 0.0
    %3101 = vmatprep.subr.mxu0 0.0
    %3102 = vmatpush1.msra.mxu0 0.0
    %3103 = vmatprep.subr.mxu0 0.0
    %3104 = vmatpush1.msra.mxu0 0.0
    %3105 = vmatprep.subr.mxu0 0.0
    %3106 = vmatpush1.msra.mxu0 0.0
    %3107 = vmatprep.mubr.f32.mxu0 0.0
    %3108 = vmatmul.mubr.f32.gmra.mrb[0].mxu0 %v3038
    %v3109 = vpop.f32.mrb[0].mxu0
    %v3110 = vadd.f32 0.0, %v3109
    %v3111 = vpop.f32.mrb[0].mxu0
    %3112 = vmatprep.mubr.f32.mxu0 0.0
    %3113 = vmatmul.mubr.f32.gmra.mrb[0].mxu0 %v3041
    %v3114 = vpop.f32.mrb[0].mxu0
    %v3115 = vadd.f32 0.0, %v3114
    %v3116 = vpop.f32.mrb[0].mxu0
    %3117 = vdwg.mxu0
    %3118 = vmatprep.subr.mxu0 0.0
    %3119 = vmatpush1.msra.mxu0 %v2993
    %3120 = vmatprep.subr.mxu0 0.0
    %3121 = vmatpush1.msra.mxu0 %v2994
    %3122 = vmatprep.subr.mxu0 0.0
    %3123 = vmatpush1.msra.mxu0 %v2995
    %3124 = vmatprep.subr.mxu0 0.0
    %3125 = vmatpush1.msra.mxu0 %v2996
    %3126 = vmatprep.subr.mxu0 0.0
    %3127 = vmatpush1.msra.mxu0 0.0
    %3128 = vmatprep.subr.mxu0 0.0
    %3129 = vmatpush1.msra.mxu0 0.0
    %3130 = vmatprep.subr.mxu0 0.0
    %3131 = vmatpush1.msra.mxu0 0.0
    %3132 = vmatprep.subr.mxu0 0.0
    %3133 = vmatpush1.msra.mxu0 0.0
    %3134 = vmatprep.subr.mxu0 0.0
    %3135 = vmatpush1.msra.mxu0 0.0
    %3136 = vmatprep.subr.mxu0 0.0
    %3137 = vmatpush1.msra.mxu0 0.0
    %3138 = vmatprep.subr.mxu0 0.0
    %3139 = vmatpush1.msra.mxu0 0.0
    %3140 = vmatprep.subr.mxu0 0.0
    %3141 = vmatpush1.msra.mxu0 0.0
    %3142 = vmatprep.subr.mxu0 0.0
    %3143 = vmatpush1.msra.mxu0 0.0
    %3144 = vmatprep.subr.mxu0 0.0
    %3145 = vmatpush1.msra.mxu0 0.0
    %3146 = vmatprep.subr.mxu0 0.0
    %3147 = vmatpush1.msra.mxu0 0.0
    %3148 = vmatprep.subr.mxu0 0.0
    %3149 = vmatpush1.msra.mxu0 0.0
    %3150 = vmatprep.subr.mxu0 0.0
    %3151 = vmatpush1.msra.mxu0 0.0
    %3152 = vmatprep.subr.mxu0 0.0
    %3153 = vmatpush1.msra.mxu0 0.0
    %3154 = vmatprep.subr.mxu0 0.0
    %3155 = vmatpush1.msra.mxu0 0.0
    %3156 = vmatprep.subr.mxu0 0.0
    %3157 = vmatpush1.msra.mxu0 0.0
    %3158 = vmatprep.subr.mxu0 0.0
    %3159 = vmatpush1.msra.mxu0 0.0
    %3160 = vmatprep.subr.mxu0 0.0
    %3161 = vmatpush1.msra.mxu0 0.0
    %3162 = vmatprep.subr.mxu0 0.0
    %3163 = vmatpush1.msra.mxu0 0.0
    %3164 = vmatprep.subr.mxu0 0.0
    %3165 = vmatpush1.msra.mxu0 0.0
    %3166 = vmatprep.subr.mxu0 0.0
    %3167 = vmatpush1.msra.mxu0 0.0
    %3168 = vmatprep.subr.mxu0 0.0
    %3169 = vmatpush1.msra.mxu0 0.0
    %3170 = vmatprep.subr.mxu0 0.0
    %3171 = vmatpush1.msra.mxu0 0.0
    %3172 = vmatprep.subr.mxu0 0.0
    %3173 = vmatpush1.msra.mxu0 0.0
    %3174 = vmatprep.subr.mxu0 0.0
    %3175 = vmatpush1.msra.mxu0 0.0
    %3176 = vmatprep.subr.mxu0 0.0
    %3177 = vmatpush1.msra.mxu0 0.0
    %3178 = vmatprep.subr.mxu0 0.0
    %3179 = vmatpush1.msra.mxu0 0.0
    %3180 = vmatprep.subr.mxu0 0.0
    %3181 = vmatpush1.msra.mxu0 0.0
    %3182 = vmatprep.mubr.f32.mxu0 0.0
    %3183 = vmatmul.mubr.f32.gmra.mrb[0].mxu0 %v3038
    %v3184 = vpop.f32.mrb[0].mxu0
    %v3185 = vadd.f32 0.0, %v3184
    %v3186 = vpop.f32.mrb[0].mxu0
    %3187 = vmatprep.mubr.f32.mxu0 0.0
    %3188 = vmatmul.mubr.f32.gmra.mrb[0].mxu0 %v3041
    %v3189 = vpop.f32.mrb[0].mxu0
    %v3190 = vadd.f32 0.0, %v3189
    %v3191 = vpop.f32.mrb[0].mxu0
    %3192 = vdwg.mxu0
    %3193 = vmatprep.subr.mxu0 0.0
    %3194 = vmatpush1.msra.mxu0 %v2997
    %3195 = vmatprep.subr.mxu0 0.0
    %3196 = vmatpush1.msra.mxu0 %v2998
    %3197 = vmatprep.subr.mxu0 0.0
    %3198 = vmatpush1.msra.mxu0 %v2999
    %3199 = vmatprep.subr.mxu0 0.0
    %3200 = vmatpush1.msra.mxu0 %v3000
    %3201 = vmatprep.subr.mxu0 0.0
    %3202 = vmatpush1.msra.mxu0 0.0
    %3203 = vmatprep.subr.mxu0 0.0
    %3204 = vmatpush1.msra.mxu0 0.0
    %3205 = vmatprep.subr.mxu0 0.0
    %3206 = vmatpush1.msra.mxu0 0.0
    %3207 = vmatprep.subr.mxu0 0.0
    %3208 = vmatpush1.msra.mxu0 0.0
    %3209 = vmatprep.subr.mxu0 0.0
    %3210 = vmatpush1.msra.mxu0 0.0
    %3211 = vmatprep.subr.mxu0 0.0
    %3212 = vmatpush1.msra.mxu0 0.0
    %3213 = vmatprep.subr.mxu0 0.0
    %3214 = vmatpush1.msra.mxu0 0.0
    %3215 = vmatprep.subr.mxu0 0.0
    %3216 = vmatpush1.msra.mxu0 0.0
    %3217 = vmatprep.subr.mxu0 0.0
    %3218 = vmatpush1.msra.mxu0 0.0
    %3219 = vmatprep.subr.mxu0 0.0
    %3220 = vmatpush1.msra.mxu0 0.0
    %3221 = vmatprep.subr.mxu0 0.0
    %3222 = vmatpush1.msra.mxu0 0.0
    %3223 = vmatprep.subr.mxu0 0.0
    %3224 = vmatpush1.msra.mxu0 0.0
    %3225 = vmatprep.subr.mxu0 0.0
    %3226 = vmatpush1.msra.mxu0 0.0
    %3227 = vmatprep.subr.mxu0 0.0
    %3228 = vmatpush1.msra.mxu0 0.0
    %3229 = vmatprep.subr.mxu0 0.0
    %3230 = vmatpush1.msra.mxu0 0.0
    %3231 = vmatprep.subr.mxu0 0.0
    %3232 = vmatpush1.msra.mxu0 0.0
    %3233 = vmatprep.subr.mxu0 0.0
    %3234 = vmatpush1.msra.mxu0 0.0
    %3235 = vmatprep.subr.mxu0 0.0
    %3236 = vmatpush1.msra.mxu0 0.0
    %3237 = vmatprep.subr.mxu0 0.0
    %3238 = vmatpush1.msra.mxu0 0.0
    %3239 = vmatprep.subr.mxu0 0.0
    %3240 = vmatpush1.msra.mxu0 0.0
    %3241 = vmatprep.subr.mxu0 0.0
    %3242 = vmatpush1.msra.mxu0 0.0
    %3243 = vmatprep.subr.mxu0 0.0
    %3244 = vmatpush1.msra.mxu0 0.0
    %3245 = vmatprep.subr.mxu0 0.0
    %3246 = vmatpush1.msra.mxu0 0.0
    %3247 = vmatprep.subr.mxu0 0.0
    %3248 = vmatpush1.msra.mxu0 0.0
    %3249 = vmatprep.subr.mxu0 0.0
    %3250 = vmatpush1.msra.mxu0 0.0
    %3251 = vmatprep.subr.mxu0 0.0
    %3252 = vmatpush1.msra.mxu0 0.0
    %3253 = vmatprep.subr.mxu0 0.0
    %3254 = vmatpush1.msra.mxu0 0.0
    %3255 = vmatprep.subr.mxu0 0.0
    %3256 = vmatpush1.msra.mxu0 0.0
    %3257 = vmatprep.mubr.f32.mxu0 0.0
    %3258 = vmatmul.mubr.f32.gmra.mrb[0].mxu0 %v3038
    %v3259 = vpop.f32.mrb[0].mxu0
    %v3260 = vadd.f32 0.0, %v3259
    %v3261 = vpop.f32.mrb[0].mxu0
    %3262 = vmatprep.mubr.f32.mxu0 0.0
    %3263 = vmatmul.mubr.f32.gmra.mrb[0].mxu0 %v3041
    %v3264 = vpop.f32.mrb[0].mxu0
    %v3265 = vadd.f32 0.0, %v3264
    %v3266 = vpop.f32.mrb[0].mxu0
    %3267 = vdwg.mxu0
    %3268 = vmatprep.subr.mxu0 0.0
    %3269 = vmatpush1.msra.mxu0 %v3001
    %3270 = vmatprep.subr.mxu0 0.0
    %3271 = vmatpush1.msra.mxu0 %v3002
    %3272 = vmatprep.subr.mxu0 0.0
    %3273 = vmatpush1.msra.mxu0 %v3003
    %3274 = vmatprep.subr.mxu0 0.0
    %3275 = vmatpush1.msra.mxu0 %v3004
    %3276 = vmatprep.subr.mxu0 0.0
    %3277 = vmatpush1.msra.mxu0 0.0
    %3278 = vmatprep.subr.mxu0 0.0
    %3279 = vmatpush1.msra.mxu0 0.0
    %3280 = vmatprep.subr.mxu0 0.0
    %3281 = vmatpush1.msra.mxu0 0.0
    %3282 = vmatprep.subr.mxu0 0.0
    %3283 = vmatpush1.msra.mxu0 0.0
    %3284 = vmatprep.subr.mxu0 0.0
    %3285 = vmatpush1.msra.mxu0 0.0
    %3286 = vmatprep.subr.mxu0 0.0
    %3287 = vmatpush1.msra.mxu0 0.0
    %3288 = vmatprep.subr.mxu0 0.0
    %3289 = vmatpush1.msra.mxu0 0.0
    %3290 = vmatprep.subr.mxu0 0.0
    %3291 = vmatpush1.msra.mxu0 0.0
    %3292 = vmatprep.subr.mxu0 0.0
    %3293 = vmatpush1.msra.mxu0 0.0
    %3294 = vmatprep.subr.mxu0 0.0
    %3295 = vmatpush1.msra.mxu0 0.0
    %3296 = vmatprep.subr.mxu0 0.0
    %3297 = vmatpush1.msra.mxu0 0.0
    %3298 = vmatprep.subr.mxu0 0.0
    %3299 = vmatpush1.msra.mxu0 0.0
    %3300 = vmatprep.subr.mxu0 0.0
    %3301 = vmatpush1.msra.mxu0 0.0
    %3302 = vmatprep.subr.mxu0 0.0
    %3303 = vmatpush1.msra.mxu0 0.0
    %3304 = vmatprep.subr.mxu0 0.0
    %3305 = vmatpush1.msra.mxu0 0.0
    %3306 = vmatprep.subr.mxu0 0.0
    %3307 = vmatpush1.msra.mxu0 0.0
    %3308 = vmatprep.subr.mxu0 0.0
    %3309 = vmatpush1.msra.mxu0 0.0
    %3310 = vmatprep.subr.mxu0 0.0
    %3311 = vmatpush1.msra.mxu0 0.0
    %3312 = vmatprep.subr.mxu0 0.0
    %3313 = vmatpush1.msra.mxu0 0.0
    %3314 = vmatprep.subr.mxu0 0.0
    %3315 = vmatpush1.msra.mxu0 0.0
    %3316 = vmatprep.subr.mxu0 0.0
    %3317 = vmatpush1.msra.mxu0 0.0
    %3318 = vmatprep.subr.mxu0 0.0
    %3319 = vmatpush1.msra.mxu0 0.0
    %3320 = vmatprep.subr.mxu0 0.0
    %3321 = vmatpush1.msra.mxu0 0.0
    %3322 = vmatprep.subr.mxu0 0.0
    %3323 = vmatpush1.msra.mxu0 0.0
    %3324 = vmatprep.subr.mxu0 0.0
    %3325 = vmatpush1.msra.mxu0 0.0
    %3326 = vmatprep.subr.mxu0 0.0
    %3327 = vmatpush1.msra.mxu0 0.0
    %3328 = vmatprep.subr.mxu0 0.0
    %3329 = vmatpush1.msra.mxu0 0.0
    %3330 = vmatprep.subr.mxu0 0.0
    %3331 = vmatpush1.msra.mxu0 0.0
    %3332 = vmatprep.mubr.f32.mxu0 0.0
    %3333 = vmatmul.mubr.f32.gmra.mrb[0].mxu0 %v3038
    %v3334 = vpop.f32.mrb[0].mxu0
    %v3335 = vadd.f32 0.0, %v3334
    %v3336 = vpop.f32.mrb[0].mxu0
    %3337 = vmatprep.mubr.f32.mxu0 0.0
    %3338 = vmatmul.mubr.f32.gmra.mrb[0].mxu0 %v3041
    %v3339 = vpop.f32.mrb[0].mxu0
    %v3340 = vadd.f32 0.0, %v3339
    %v3341 = vpop.f32.mrb[0].mxu0
    %3342 = vdwg.mxu0
    %3343 = vmatprep.subr.mxu0 0.0
    %3344 = vmatpush1.msra.mxu0 %v3005
    %3345 = vmatprep.subr.mxu0 0.0
    %3346 = vmatpush1.msra.mxu0 %v3006
    %3347 = vmatprep.subr.mxu0 0.0
    %3348 = vmatpush1.msra.mxu0 %v3007
    %3349 = vmatprep.subr.mxu0 0.0
    %3350 = vmatpush1.msra.mxu0 %v3008
    %3351 = vmatprep.subr.mxu0 0.0
    %3352 = vmatpush1.msra.mxu0 0.0
    %3353 = vmatprep.subr.mxu0 0.0
    %3354 = vmatpush1.msra.mxu0 0.0
    %3355 = vmatprep.subr.mxu0 0.0
    %3356 = vmatpush1.msra.mxu0 0.0
    %3357 = vmatprep.subr.mxu0 0.0
    %3358 = vmatpush1.msra.mxu0 0.0
    %3359 = vmatprep.subr.mxu0 0.0
    %3360 = vmatpush1.msra.mxu0 0.0
    %3361 = vmatprep.subr.mxu0 0.0
    %3362 = vmatpush1.msra.mxu0 0.0
    %3363 = vmatprep.subr.mxu0 0.0
    %3364 = vmatpush1.msra.mxu0 0.0
    %3365 = vmatprep.subr.mxu0 0.0
    %3366 = vmatpush1.msra.mxu0 0.0
    %3367 = vmatprep.subr.mxu0 0.0
    %3368 = vmatpush1.msra.mxu0 0.0
    %3369 = vmatprep.subr.mxu0 0.0
    %3370 = vmatpush1.msra.mxu0 0.0
    %3371 = vmatprep.subr.mxu0 0.0
    %3372 = vmatpush1.msra.mxu0 0.0
    %3373 = vmatprep.subr.mxu0 0.0
    %3374 = vmatpush1.msra.mxu0 0.0
    %3375 = vmatprep.subr.mxu0 0.0
    %3376 = vmatpush1.msra.mxu0 0.0
    %3377 = vmatprep.subr.mxu0 0.0
    %3378 = vmatpush1.msra.mxu0 0.0
    %3379 = vmatprep.subr.mxu0 0.0
    %3380 = vmatpush1.msra.mxu0 0.0
    %3381 = vmatprep.subr.mxu0 0.0
    %3382 = vmatpush1.msra.mxu0 0.0
    %3383 = vmatprep.subr.mxu0 0.0
    %3384 = vmatpush1.msra.mxu0 0.0
    %3385 = vmatprep.subr.mxu0 0.0
    %3386 = vmatpush1.msra.mxu0 0.0
    %3387 = vmatprep.subr.mxu0 0.0
    %3388 = vmatpush1.msra.mxu0 0.0
    %3389 = vmatprep.subr.mxu0 0.0
    %3390 = vmatpush1.msra.mxu0 0.0
    %3391 = vmatprep.subr.mxu0 0.0
    %3392 = vmatpush1.msra.mxu0 0.0
    %3393 = vmatprep.subr.mxu0 0.0
    %3394 = vmatpush1.msra.mxu0 0.0
    %3395 = vmatprep.subr.mxu0 0.0
    %3396 = vmatpush1.msra.mxu0 0.0
    %3397 = vmatprep.subr.mxu0 0.0
    %3398 = vmatpush1.msra.mxu0 0.0
    %3399 = vmatprep.subr.mxu0 0.0
    %3400 = vmatpush1.msra.mxu0 0.0
    %3401 = vmatprep.subr.mxu0 0.0
    %3402 = vmatpush1.msra.mxu0 0.0
    %3403 = vmatprep.subr.mxu0 0.0
    %3404 = vmatpush1.msra.mxu0 0.0
    %3405 = vmatprep.subr.mxu0 0.0
    %3406 = vmatpush1.msra.mxu0 0.0
    %3407 = vmatprep.mubr.f32.mxu0 0.0
    %3408 = vmatmul.mubr.f32.gmra.mrb[0].mxu0 %v3038
    %v3409 = vpop.f32.mrb[0].mxu0
    %v3410 = vadd.f32 0.0, %v3409
    %v3411 = vpop.f32.mrb[0].mxu0
    %3412 = vmatprep.mubr.f32.mxu0 0.0
    %3413 = vmatmul.mubr.f32.gmra.mrb[0].mxu0 %v3041
    %v3414 = vpop.f32.mrb[0].mxu0
    %v3415 = vadd.f32 0.0, %v3414
    %v3416 = vpop.f32.mrb[0].mxu0
    %3417 = vdwg.mxu0
    %3418 = vmatprep.subr.mxu0 0.0
    %3419 = vmatpush1.msra.mxu0 %v3009
    %3420 = vmatprep.subr.mxu0 0.0
    %3421 = vmatpush1.msra.mxu0 %v3010
    %3422 = vmatprep.subr.mxu0 0.0
    %3423 = vmatpush1.msra.mxu0 %v3011
    %3424 = vmatprep.subr.mxu0 0.0
    %3425 = vmatpush1.msra.mxu0 %v3012
    %3426 = vmatprep.subr.mxu0 0.0
    %3427 = vmatpush1.msra.mxu0 0.0
    %3428 = vmatprep.subr.mxu0 0.0
    %3429 = vmatpush1.msra.mxu0 0.0
    %3430 = vmatprep.subr.mxu0 0.0
    %3431 = vmatpush1.msra.mxu0 0.0
    %3432 = vmatprep.subr.mxu0 0.0
    %3433 = vmatpush1.msra.mxu0 0.0
    %3434 = vmatprep.subr.mxu0 0.0
    %3435 = vmatpush1.msra.mxu0 0.0
    %3436 = vmatprep.subr.mxu0 0.0
    %3437 = vmatpush1.msra.mxu0 0.0
    %3438 = vmatprep.subr.mxu0 0.0
    %3439 = vmatpush1.msra.mxu0 0.0
    %3440 = vmatprep.subr.mxu0 0.0
    %3441 = vmatpush1.msra.mxu0 0.0
    %3442 = vmatprep.subr.mxu0 0.0
    %3443 = vmatpush1.msra.mxu0 0.0
    %3444 = vmatprep.subr.mxu0 0.0
    %3445 = vmatpush1.msra.mxu0 0.0
    %3446 = vmatprep.subr.mxu0 0.0
    %3447 = vmatpush1.msra.mxu0 0.0
    %3448 = vmatprep.subr.mxu0 0.0
    %3449 = vmatpush1.msra.mxu0 0.0
    %3450 = vmatprep.subr.mxu0 0.0
    %3451 = vmatpush1.msra.mxu0 0.0
    %3452 = vmatprep.subr.mxu0 0.0
    %3453 = vmatpush1.msra.mxu0 0.0
    %3454 = vmatprep.subr.mxu0 0.0
    %3455 = vmatpush1.msra.mxu0 0.0
    %3456 = vmatprep.subr.mxu0 0.0
    %3457 = vmatpush1.msra.mxu0 0.0
    %3458 = vmatprep.subr.mxu0 0.0
    %3459 = vmatpush1.msra.mxu0 0.0
    %3460 = vmatprep.subr.mxu0 0.0
    %3461 = vmatpush1.msra.mxu0 0.0
    %3462 = vmatprep.subr.mxu0 0.0
    %3463 = vmatpush1.msra.mxu0 0.0
    %3464 = vmatprep.subr.mxu0 0.0
    %3465 = vmatpush1.msra.mxu0 0.0
    %3466 = vmatprep.subr.mxu0 0.0
    %3467 = vmatpush1.msra.mxu0 0.0
    %3468 = vmatprep.subr.mxu0 0.0
    %3469 = vmatpush1.msra.mxu0 0.0
    %3470 = vmatprep.subr.mxu0 0.0
    %3471 = vmatpush1.msra.mxu0 0.0
    %3472 = vmatprep.subr.mxu0 0.0
    %3473 = vmatpush1.msra.mxu0 0.0
    %3474 = vmatprep.subr.mxu0 0.0
    %3475 = vmatpush1.msra.mxu0 0.0
    %3476 = vmatprep.subr.mxu0 0.0
    %3477 = vmatpush1.msra.mxu0 0.0
    %3478 = vmatprep.subr.mxu0 0.0
    %3479 = vmatpush1.msra.mxu0 0.0
    %3480 = vmatprep.subr.mxu0 0.0
    %3481 = vmatpush1.msra.mxu0 0.0
    %3482 = vmatprep.mubr.f32.mxu0 0.0
    %3483 = vmatmul.mubr.f32.gmra.mrb[0].mxu0 %v3038
    %v3484 = vpop.f32.mrb[0].mxu0
    %v3485 = vadd.f32 0.0, %v3484
    %v3486 = vpop.f32.mrb[0].mxu0
    %3487 = vmatprep.mubr.f32.mxu0 0.0
    %3488 = vmatmul.mubr.f32.gmra.mrb[0].mxu0 %v3041
    %v3489 = vpop.f32.mrb[0].mxu0
    %v3490 = vadd.f32 0.0, %v3489
    %v3491 = vpop.f32.mrb[0].mxu0
    %3492 = vdwg.mxu0
    %3493 = vmatprep.subr.mxu0 0.0
    %3494 = vmatpush1.msra.mxu0 %v3013
    %3495 = vmatprep.subr.mxu0 0.0
    %3496 = vmatpush1.msra.mxu0 %v3014
    %3497 = vmatprep.subr.mxu0 0.0
    %3498 = vmatpush1.msra.mxu0 %v3015
    %3499 = vmatprep.subr.mxu0 0.0
    %3500 = vmatpush1.msra.mxu0 %v3016
    %3501 = vmatprep.subr.mxu0 0.0
    %3502 = vmatpush1.msra.mxu0 0.0
    %3503 = vmatprep.subr.mxu0 0.0
    %3504 = vmatpush1.msra.mxu0 0.0
    %3505 = vmatprep.subr.mxu0 0.0
    %3506 = vmatpush1.msra.mxu0 0.0
    %3507 = vmatprep.subr.mxu0 0.0
    %3508 = vmatpush1.msra.mxu0 0.0
    %3509 = vmatprep.subr.mxu0 0.0
    %3510 = vmatpush1.msra.mxu0 0.0
    %3511 = vmatprep.subr.mxu0 0.0
    %3512 = vmatpush1.msra.mxu0 0.0
    %3513 = vmatprep.subr.mxu0 0.0
    %3514 = vmatpush1.msra.mxu0 0.0
    %3515 = vmatprep.subr.mxu0 0.0
    %3516 = vmatpush1.msra.mxu0 0.0
    %3517 = vmatprep.subr.mxu0 0.0
    %3518 = vmatpush1.msra.mxu0 0.0
    %3519 = vmatprep.subr.mxu0 0.0
    %3520 = vmatpush1.msra.mxu0 0.0
    %3521 = vmatprep.subr.mxu0 0.0
    %3522 = vmatpush1.msra.mxu0 0.0
    %3523 = vmatprep.subr.mxu0 0.0
    %3524 = vmatpush1.msra.mxu0 0.0
    %3525 = vmatprep.subr.mxu0 0.0
    %3526 = vmatpush1.msra.mxu0 0.0
    %3527 = vmatprep.subr.mxu0 0.0
    %3528 = vmatpush1.msra.mxu0 0.0
    %3529 = vmatprep.subr.mxu0 0.0
    %3530 = vmatpush1.msra.mxu0 0.0
    %3531 = vmatprep.subr.mxu0 0.0
    %3532 = vmatpush1.msra.mxu0 0.0
    %3533 = vmatprep.subr.mxu0 0.0
    %3534 = vmatpush1.msra.mxu0 0.0
    %3535 = vmatprep.subr.mxu0 0.0
    %3536 = vmatpush1.msra.mxu0 0.0
    %3537 = vmatprep.subr.mxu0 0.0
    %3538 = vmatpush1.msra.mxu0 0.0
    %3539 = vmatprep.subr.mxu0 0.0
    %3540 = vmatpush1.msra.mxu0 0.0
    %3541 = vmatprep.subr.mxu0 0.0
    %3542 = vmatpush1.msra.mxu0 0.0
    %3543 = vmatprep.subr.mxu0 0.0
    %3544 = vmatpush1.msra.mxu0 0.0
    %3545 = vmatprep.subr.mxu0 0.0
    %3546 = vmatpush1.msra.mxu0 0.0
    %3547 = vmatprep.subr.mxu0 0.0
    %3548 = vmatpush1.msra.mxu0 0.0
    %3549 = vmatprep.subr.mxu0 0.0
    %3550 = vmatpush1.msra.mxu0 0.0
    %3551 = vmatprep.subr.mxu0 0.0
    %3552 = vmatpush1.msra.mxu0 0.0
    %3553 = vmatprep.subr.mxu0 0.0
    %3554 = vmatpush1.msra.mxu0 0.0
    %3555 = vmatprep.subr.mxu0 0.0
    %3556 = vmatpush1.msra.mxu0 0.0
    %3557 = vmatprep.mubr.f32.mxu0 0.0
    %3558 = vmatmul.mubr.f32.gmra.mrb[0].mxu0 %v3038
    %v3559 = vpop.f32.mrb[0].mxu0
    %v3560 = vadd.f32 0.0, %v3559
    %v3561 = vpop.f32.mrb[0].mxu0
    %3562 = vmatprep.mubr.f32.mxu0 0.0
    %3563 = vmatmul.mubr.f32.gmra.mrb[0].mxu0 %v3041
    %v3564 = vpop.f32.mrb[0].mxu0
    %v3565 = vadd.f32 0.0, %v3564
    %v3566 = vpop.f32.mrb[0].mxu0
    %3567 = vdwg.mxu0
    %3568 = vmatprep.subr.mxu0 0.0
    %3569 = vmatpush1.msra.mxu0 %v3017
    %3570 = vmatprep.subr.mxu0 0.0
    %3571 = vmatpush1.msra.mxu0 %v3018
    %3572 = vmatprep.subr.mxu0 0.0
    %3573 = vmatpush1.msra.mxu0 %v3019
    %3574 = vmatprep.subr.mxu0 0.0
    %3575 = vmatpush1.msra.mxu0 %v3020
    %3576 = vmatprep.subr.mxu0 0.0
    %3577 = vmatpush1.msra.mxu0 0.0
    %3578 = vmatprep.subr.mxu0 0.0
    %3579 = vmatpush1.msra.mxu0 0.0
    %3580 = vmatprep.subr.mxu0 0.0
    %3581 = vmatpush1.msra.mxu0 0.0
    %3582 = vmatprep.subr.mxu0 0.0
    %3583 = vmatpush1.msra.mxu0 0.0
    %3584 = vmatprep.subr.mxu0 0.0
    %3585 = vmatpush1.msra.mxu0 0.0
    %3586 = vmatprep.subr.mxu0 0.0
    %3587 = vmatpush1.msra.mxu0 0.0
    %3588 = vmatprep.subr.mxu0 0.0
    %3589 = vmatpush1.msra.mxu0 0.0
    %3590 = vmatprep.subr.mxu0 0.0
    %3591 = vmatpush1.msra.mxu0 0.0
    %3592 = vmatprep.subr.mxu0 0.0
    %3593 = vmatpush1.msra.mxu0 0.0
    %3594 = vmatprep.subr.mxu0 0.0
    %3595 = vmatpush1.msra.mxu0 0.0
    %3596 = vmatprep.subr.mxu0 0.0
    %3597 = vmatpush1.msra.mxu0 0.0
    %3598 = vmatprep.subr.mxu0 0.0
    %3599 = vmatpush1.msra.mxu0 0.0
    %3600 = vmatprep.subr.mxu0 0.0
    %3601 = vmatpush1.msra.mxu0 0.0
    %3602 = vmatprep.subr.mxu0 0.0
    %3603 = vmatpush1.msra.mxu0 0.0
    %3604 = vmatprep.subr.mxu0 0.0
    %3605 = vmatpush1.msra.mxu0 0.0
    %3606 = vmatprep.subr.mxu0 0.0
    %3607 = vmatpush1.msra.mxu0 0.0
    %3608 = vmatprep.subr.mxu0 0.0
    %3609 = vmatpush1.msra.mxu0 0.0
    %3610 = vmatprep.subr.mxu0 0.0
    %3611 = vmatpush1.msra.mxu0 0.0
    %3612 = vmatprep.subr.mxu0 0.0
    %3613 = vmatpush1.msra.mxu0 0.0
    %3614 = vmatprep.subr.mxu0 0.0
    %3615 = vmatpush1.msra.mxu0 0.0
    %3616 = vmatprep.subr.mxu0 0.0
    %3617 = vmatpush1.msra.mxu0 0.0
    %3618 = vmatprep.subr.mxu0 0.0
    %3619 = vmatpush1.msra.mxu0 0.0
    %3620 = vmatprep.subr.mxu0 0.0
    %3621 = vmatpush1.msra.mxu0 0.0
    %3622 = vmatprep.subr.mxu0 0.0
    %3623 = vmatpush1.msra.mxu0 0.0
    %3624 = vmatprep.subr.mxu0 0.0
    %3625 = vmatpush1.msra.mxu0 0.0
    %3626 = vmatprep.subr.mxu0 0.0
    %3627 = vmatpush1.msra.mxu0 0.0
    %3628 = vmatprep.subr.mxu0 0.0
    %3629 = vmatpush1.msra.mxu0 0.0
    %3630 = vmatprep.subr.mxu0 0.0
    %3631 = vmatpush1.msra.mxu0 0.0
    %3632 = vmatprep.mubr.f32.mxu0 0.0
    %3633 = vmatmul.mubr.f32.gmra.mrb[0].mxu0 %v3038
    %v3634 = vpop.f32.mrb[0].mxu0
    %v3635 = vadd.f32 0.0, %v3634
    %v3636 = vpop.f32.mrb[0].mxu0
    %3637 = vmatprep.mubr.f32.mxu0 0.0
    %3638 = vmatmul.mubr.f32.gmra.mrb[0].mxu0 %v3041
    %v3639 = vpop.f32.mrb[0].mxu0
    %v3640 = vadd.f32 0.0, %v3639
    %v3641 = vpop.f32.mrb[0].mxu0
    %3642 = vdwg.mxu0
    %3643 = vmatprep.subr.mxu0 0.0
    %3644 = vmatpush1.msra.mxu0 %v3021
    %3645 = vmatprep.subr.mxu0 0.0
    %3646 = vmatpush1.msra.mxu0 %v3022
    %3647 = vmatprep.subr.mxu0 0.0
    %3648 = vmatpush1.msra.mxu0 %v3023
    %3649 = vmatprep.subr.mxu0 0.0
    %3650 = vmatpush1.msra.mxu0 %v3024
    %3651 = vmatprep.subr.mxu0 0.0
    %3652 = vmatpush1.msra.mxu0 0.0
    %3653 = vmatprep.subr.mxu0 0.0
    %3654 = vmatpush1.msra.mxu0 0.0
    %3655 = vmatprep.subr.mxu0 0.0
    %3656 = vmatpush1.msra.mxu0 0.0
    %3657 = vmatprep.subr.mxu0 0.0
    %3658 = vmatpush1.msra.mxu0 0.0
    %3659 = vmatprep.subr.mxu0 0.0
    %3660 = vmatpush1.msra.mxu0 0.0
    %3661 = vmatprep.subr.mxu0 0.0
    %3662 = vmatpush1.msra.mxu0 0.0
    %3663 = vmatprep.subr.mxu0 0.0
    %3664 = vmatpush1.msra.mxu0 0.0
    %3665 = vmatprep.subr.mxu0 0.0
    %3666 = vmatpush1.msra.mxu0 0.0
    %3667 = vmatprep.subr.mxu0 0.0
    %3668 = vmatpush1.msra.mxu0 0.0
    %3669 = vmatprep.subr.mxu0 0.0
    %3670 = vmatpush1.msra.mxu0 0.0
    %3671 = vmatprep.subr.mxu0 0.0
    %3672 = vmatpush1.msra.mxu0 0.0
    %3673 = vmatprep.subr.mxu0 0.0
    %3674 = vmatpush1.msra.mxu0 0.0
    %3675 = vmatprep.subr.mxu0 0.0
    %3676 = vmatpush1.msra.mxu0 0.0
    %3677 = vmatprep.subr.mxu0 0.0
    %3678 = vmatpush1.msra.mxu0 0.0
    %3679 = vmatprep.subr.mxu0 0.0
    %3680 = vmatpush1.msra.mxu0 0.0
    %3681 = vmatprep.subr.mxu0 0.0
    %3682 = vmatpush1.msra.mxu0 0.0
    %3683 = vmatprep.subr.mxu0 0.0
    %3684 = vmatpush1.msra.mxu0 0.0
    %3685 = vmatprep.subr.mxu0 0.0
    %3686 = vmatpush1.msra.mxu0 0.0
    %3687 = vmatprep.subr.mxu0 0.0
    %3688 = vmatpush1.msra.mxu0 0.0
    %3689 = vmatprep.subr.mxu0 0.0
    %3690 = vmatpush1.msra.mxu0 0.0
    %3691 = vmatprep.subr.mxu0 0.0
    %3692 = vmatpush1.msra.mxu0 0.0
    %3693 = vmatprep.subr.mxu0 0.0
    %3694 = vmatpush1.msra.mxu0 0.0
    %3695 = vmatprep.subr.mxu0 0.0
    %3696 = vmatpush1.msra.mxu0 0.0
    %3697 = vmatprep.subr.mxu0 0.0
    %3698 = vmatpush1.msra.mxu0 0.0
    %3699 = vmatprep.subr.mxu0 0.0
    %3700 = vmatpush1.msra.mxu0 0.0
    %3701 = vmatprep.subr.mxu0 0.0
    %3702 = vmatpush1.msra.mxu0 0.0
    %3703 = vmatprep.subr.mxu0 0.0
    %3704 = vmatpush1.msra.mxu0 0.0
    %3705 = vmatprep.subr.mxu0 0.0
    %3706 = vmatpush1.msra.mxu0 0.0
    %3707 = vmatprep.mubr.f32.mxu0 0.0
    %3708 = vmatmul.mubr.f32.gmra.mrb[0].mxu0 %v3038
    %v3709 = vpop.f32.mrb[0].mxu0
    %v3710 = vadd.f32 0.0, %v3709
    %v3711 = vpop.f32.mrb[0].mxu0
    %3712 = vmatprep.mubr.f32.mxu0 0.0
    %3713 = vmatmul.mubr.f32.gmra.mrb[0].mxu0 %v3041
    %v3714 = vpop.f32.mrb[0].mxu0
    %v3715 = vadd.f32 0.0, %v3714
    %v3716 = vpop.f32.mrb[0].mxu0
    %3717 = vdwg.mxu0
    %3718 = vmatprep.subr.mxu0 0.0
    %3719 = vmatpush1.msra.mxu0 %v3025
    %3720 = vmatprep.subr.mxu0 0.0
    %3721 = vmatpush1.msra.mxu0 %v3026
    %3722 = vmatprep.subr.mxu0 0.0
    %3723 = vmatpush1.msra.mxu0 %v3027
    %3724 = vmatprep.subr.mxu0 0.0
    %3725 = vmatpush1.msra.mxu0 %v3028
    %3726 = vmatprep.subr.mxu0 0.0
    %3727 = vmatpush1.msra.mxu0 0.0
    %3728 = vmatprep.subr.mxu0 0.0
    %3729 = vmatpush1.msra.mxu0 0.0
    %3730 = vmatprep.subr.mxu0 0.0
    %3731 = vmatpush1.msra.mxu0 0.0
    %3732 = vmatprep.subr.mxu0 0.0
    %3733 = vmatpush1.msra.mxu0 0.0
    %3734 = vmatprep.subr.mxu0 0.0
    %3735 = vmatpush1.msra.mxu0 0.0
    %3736 = vmatprep.subr.mxu0 0.0
    %3737 = vmatpush1.msra.mxu0 0.0
    %3738 = vmatprep.subr.mxu0 0.0
    %3739 = vmatpush1.msra.mxu0 0.0
    %3740 = vmatprep.subr.mxu0 0.0
    %3741 = vmatpush1.msra.mxu0 0.0
    %3742 = vmatprep.subr.mxu0 0.0
    %3743 = vmatpush1.msra.mxu0 0.0
    %3744 = vmatprep.subr.mxu0 0.0
    %3745 = vmatpush1.msra.mxu0 0.0
    %3746 = vmatprep.subr.mxu0 0.0
    %3747 = vmatpush1.msra.mxu0 0.0
    %3748 = vmatprep.subr.mxu0 0.0
    %3749 = vmatpush1.msra.mxu0 0.0
    %3750 = vmatprep.subr.mxu0 0.0
    %3751 = vmatpush1.msra.mxu0 0.0
    %3752 = vmatprep.subr.mxu0 0.0
    %3753 = vmatpush1.msra.mxu0 0.0
    %3754 = vmatprep.subr.mxu0 0.0
    %3755 = vmatpush1.msra.mxu0 0.0
    %3756 = vmatprep.subr.mxu0 0.0
    %3757 = vmatpush1.msra.mxu0 0.0
    %3758 = vmatprep.subr.mxu0 0.0
    %3759 = vmatpush1.msra.mxu0 0.0
    %3760 = vmatprep.subr.mxu0 0.0
    %3761 = vmatpush1.msra.mxu0 0.0
    %3762 = vmatprep.subr.mxu0 0.0
    %3763 = vmatpush1.msra.mxu0 0.0
    %3764 = vmatprep.subr.mxu0 0.0
    %3765 = vmatpush1.msra.mxu0 0.0
    %3766 = vmatprep.subr.mxu0 0.0
    %3767 = vmatpush1.msra.mxu0 0.0
    %3768 = vmatprep.subr.mxu0 0.0
    %3769 = vmatpush1.msra.mxu0 0.0
    %3770 = vmatprep.subr.mxu0 0.0
    %3771 = vmatpush1.msra.mxu0 0.0
    %3772 = vmatprep.subr.mxu0 0.0
    %3773 = vmatpush1.msra.mxu0 0.0
    %3774 = vmatprep.subr.mxu0 0.0
    %3775 = vmatpush1.msra.mxu0 0.0
    %3776 = vmatprep.subr.mxu0 0.0
    %3777 = vmatpush1.msra.mxu0 0.0
    %3778 = vmatprep.subr.mxu0 0.0
    %3779 = vmatpush1.msra.mxu0 0.0
    %3780 = vmatprep.subr.mxu0 0.0
    %3781 = vmatpush1.msra.mxu0 0.0
    %3782 = vmatprep.mubr.f32.mxu0 0.0
    %3783 = vmatmul.mubr.f32.gmra.mrb[0].mxu0 %v3038
    %v3784 = vpop.f32.mrb[0].mxu0
    %v3785 = vadd.f32 0.0, %v3784
    %v3786 = vpop.f32.mrb[0].mxu0
    %3787 = vmatprep.mubr.f32.mxu0 0.0
    %3788 = vmatmul.mubr.f32.gmra.mrb[0].mxu0 %v3041
    %v3789 = vpop.f32.mrb[0].mxu0
    %v3790 = vadd.f32 0.0, %v3789
    %v3791 = vpop.f32.mrb[0].mxu0
    %3792 = vdwg.mxu0
    %3793 = vmatprep.subr.mxu0 0.0
    %3794 = vmatpush1.msra.mxu0 %v3029
    %3795 = vmatprep.subr.mxu0 0.0
    %3796 = vmatpush1.msra.mxu0 %v3030
    %3797 = vmatprep.subr.mxu0 0.0
    %3798 = vmatpush1.msra.mxu0 %v3031
    %3799 = vmatprep.subr.mxu0 0.0
    %3800 = vmatpush1.msra.mxu0 %v3032
    %3801 = vmatprep.subr.mxu0 0.0
    %3802 = vmatpush1.msra.mxu0 0.0
    %3803 = vmatprep.subr.mxu0 0.0
    %3804 = vmatpush1.msra.mxu0 0.0
    %3805 = vmatprep.subr.mxu0 0.0
    %3806 = vmatpush1.msra.mxu0 0.0
    %3807 = vmatprep.subr.mxu0 0.0
    %3808 = vmatpush1.msra.mxu0 0.0
    %3809 = vmatprep.subr.mxu0 0.0
    %3810 = vmatpush1.msra.mxu0 0.0
    %3811 = vmatprep.subr.mxu0 0.0
    %3812 = vmatpush1.msra.mxu0 0.0
    %3813 = vmatprep.subr.mxu0 0.0
    %3814 = vmatpush1.msra.mxu0 0.0
    %3815 = vmatprep.subr.mxu0 0.0
    %3816 = vmatpush1.msra.mxu0 0.0
    %3817 = vmatprep.subr.mxu0 0.0
    %3818 = vmatpush1.msra.mxu0 0.0
    %3819 = vmatprep.subr.mxu0 0.0
    %3820 = vmatpush1.msra.mxu0 0.0
    %3821 = vmatprep.subr.mxu0 0.0
    %3822 = vmatpush1.msra.mxu0 0.0
    %3823 = vmatprep.subr.mxu0 0.0
    %3824 = vmatpush1.msra.mxu0 0.0
    %3825 = vmatprep.subr.mxu0 0.0
    %3826 = vmatpush1.msra.mxu0 0.0
    %3827 = vmatprep.subr.mxu0 0.0
    %3828 = vmatpush1.msra.mxu0 0.0
    %3829 = vmatprep.subr.mxu0 0.0
    %3830 = vmatpush1.msra.mxu0 0.0
    %3831 = vmatprep.subr.mxu0 0.0
    %3832 = vmatpush1.msra.mxu0 0.0
    %3833 = vmatprep.subr.mxu0 0.0
    %3834 = vmatpush1.msra.mxu0 0.0
    %3835 = vmatprep.subr.mxu0 0.0
    %3836 = vmatpush1.msra.mxu0 0.0
    %3837 = vmatprep.subr.mxu0 0.0
    %3838 = vmatpush1.msra.mxu0 0.0
    %3839 = vmatprep.subr.mxu0 0.0
    %3840 = vmatpush1.msra.mxu0 0.0
    %3841 = vmatprep.subr.mxu0 0.0
    %3842 = vmatpush1.msra.mxu0 0.0
    %3843 = vmatprep.subr.mxu0 0.0
    %3844 = vmatpush1.msra.mxu0 0.0
    %3845 = vmatprep.subr.mxu0 0.0
    %3846 = vmatpush1.msra.mxu0 0.0
    %3847 = vmatprep.subr.mxu0 0.0
    %3848 = vmatpush1.msra.mxu0 0.0
    %3849 = vmatprep.subr.mxu0 0.0
    %3850 = vmatpush1.msra.mxu0 0.0
    %3851 = vmatprep.subr.mxu0 0.0
    %3852 = vmatpush1.msra.mxu0 0.0
    %3853 = vmatprep.subr.mxu0 0.0
    %3854 = vmatpush1.msra.mxu0 0.0
    %3855 = vmatprep.subr.mxu0 0.0
    %3856 = vmatpush1.msra.mxu0 0.0
    %3857 = vmatprep.mubr.f32.mxu0 0.0
    %3858 = vmatmul.mubr.f32.gmra.mrb[0].mxu0 %v3038
    %v3859 = vpop.f32.mrb[0].mxu0
    %v3860 = vadd.f32 0.0, %v3859
    %v3861 = vpop.f32.mrb[0].mxu0
    %3862 = vmatprep.mubr.f32.mxu0 0.0
    %3863 = vmatmul.mubr.f32.gmra.mrb[0].mxu0 %v3041
    %v3864 = vpop.f32.mrb[0].mxu0
    %v3865 = vadd.f32 0.0, %v3864
    %v3866 = vpop.f32.mrb[0].mxu0
    %3867 = vdwg.mxu0
    %3868 = vmatprep.subr.mxu0 0.0
    %3869 = vmatpush1.msra.mxu0 %v3033
    %3870 = vmatprep.subr.mxu0 0.0
    %3871 = vmatpush1.msra.mxu0 %v3034
    %3872 = vmatprep.subr.mxu0 0.0
    %3873 = vmatpush1.msra.mxu0 %v3035
    %3874 = vmatprep.subr.mxu0 0.0
    %3875 = vmatpush1.msra.mxu0 %v3036
    %3876 = vmatprep.subr.mxu0 0.0
    %3877 = vmatpush1.msra.mxu0 0.0
    %3878 = vmatprep.subr.mxu0 0.0
    %3879 = vmatpush1.msra.mxu0 0.0
    %3880 = vmatprep.subr.mxu0 0.0
    %3881 = vmatpush1.msra.mxu0 0.0
    %3882 = vmatprep.subr.mxu0 0.0
    %3883 = vmatpush1.msra.mxu0 0.0
    %3884 = vmatprep.subr.mxu0 0.0
    %3885 = vmatpush1.msra.mxu0 0.0
    %3886 = vmatprep.subr.mxu0 0.0
    %3887 = vmatpush1.msra.mxu0 0.0
    %3888 = vmatprep.subr.mxu0 0.0
    %3889 = vmatpush1.msra.mxu0 0.0
    %3890 = vmatprep.subr.mxu0 0.0
    %3891 = vmatpush1.msra.mxu0 0.0
    %3892 = vmatprep.subr.mxu0 0.0
    %3893 = vmatpush1.msra.mxu0 0.0
    %3894 = vmatprep.subr.mxu0 0.0
    %3895 = vmatpush1.msra.mxu0 0.0
    %3896 = vmatprep.subr.mxu0 0.0
    %3897 = vmatpush1.msra.mxu0 0.0
    %3898 = vmatprep.subr.mxu0 0.0
    %3899 = vmatpush1.msra.mxu0 0.0
    %3900 = vmatprep.subr.mxu0 0.0
    %3901 = vmatpush1.msra.mxu0 0.0
    %3902 = vmatprep.subr.mxu0 0.0
    %3903 = vmatpush1.msra.mxu0 0.0
    %3904 = vmatprep.subr.mxu0 0.0
    %3905 = vmatpush1.msra.mxu0 0.0
    %3906 = vmatprep.subr.mxu0 0.0
    %3907 = vmatpush1.msra.mxu0 0.0
    %3908 = vmatprep.subr.mxu0 0.0
    %3909 = vmatpush1.msra.mxu0 0.0
    %3910 = vmatprep.subr.mxu0 0.0
    %3911 = vmatpush1.msra.mxu0 0.0
    %3912 = vmatprep.subr.mxu0 0.0
    %3913 = vmatpush1.msra.mxu0 0.0
    %3914 = vmatprep.subr.mxu0 0.0
    %3915 = vmatpush1.msra.mxu0 0.0
    %3916 = vmatprep.subr.mxu0 0.0
    %3917 = vmatpush1.msra.mxu0 0.0
    %3918 = vmatprep.subr.mxu0 0.0
    %3919 = vmatpush1.msra.mxu0 0.0
    %3920 = vmatprep.subr.mxu0 0.0
    %3921 = vmatpush1.msra.mxu0 0.0
    %3922 = vmatprep.subr.mxu0 0.0
    %3923 = vmatpush1.msra.mxu0 0.0
    %3924 = vmatprep.subr.mxu0 0.0
    %3925 = vmatpush1.msra.mxu0 0.0
    %3926 = vmatprep.subr.mxu0 0.0
    %3927 = vmatpush1.msra.mxu0 0.0
    %3928 = vmatprep.subr.mxu0 0.0
    %3929 = vmatpush1.msra.mxu0 0.0
    %3930 = vmatprep.subr.mxu0 0.0
    %3931 = vmatpush1.msra.mxu0 0.0
    %3932 = vmatprep.mubr.f32.mxu0 0.0
    %3933 = vmatmul.mubr.f32.gmra.mrb[0].mxu0 %v3038
    %v3934 = vpop.f32.mrb[0].mxu0
    %v3935 = vadd.f32 0.0, %v3934
    %v3936 = vpop.f32.mrb[0].mxu0
    %3937 = vmatprep.mubr.f32.mxu0 0.0
    %3938 = vmatmul.mubr.f32.gmra.mrb[0].mxu0 %v3041
    %v3939 = vpop.f32.mrb[0].mxu0
    %v3940 = vadd.f32 0.0, %v3939
    %v3941 = vpop.f32.mrb[0].mxu0
    %3942 = vdwg.mxu0
    %v3944 = vsel %vm184, %v3110, 0
    %v3947 = vsel %vm184, %v3410, 0
    %3949 = vmatprep.subr.mxu0 0.0
    %3950 = vmatpush1.xpose.msra.mxu0 %v3947
    %3951 = vmatprep.subr.mxu0 0.0
    %3952 = vmatpush1.xpose.msra.mxu0 0.0
    %3953 = vmatprep.subr.mxu0 0.0
    %3954 = vmatpush1.xpose.msra.mxu0 0.0
    %3955 = vmatprep.subr.mxu0 0.0
    %3956 = vmatpush1.xpose.msra.mxu0 0.0
    %3957 = vmatprep.subr.mxu0 0.0
    %3958 = vmatpush1.xpose.msra.mxu0 0.0
    %3959 = vmatprep.subr.mxu0 0.0
    %3960 = vmatpush1.xpose.msra.mxu0 0.0
    %3961 = vmatprep.subr.mxu0 0.0
    %3962 = vmatpush1.xpose.msra.mxu0 0.0
    %3963 = vmatprep.subr.mxu0 0.0
    %3964 = vmatpush1.xpose.msra.mxu0 0.0
    %3965 = vmatprep.subr.mxu0 0.0
    %3966 = vmatpush1.xpose.msra.mxu0 0.0
    %3967 = vmatprep.subr.mxu0 0.0
    %3968 = vmatpush1.xpose.msra.mxu0 0.0
    %3969 = vmatprep.subr.mxu0 0.0
    %3970 = vmatpush1.xpose.msra.mxu0 0.0
    %3971 = vmatprep.subr.mxu0 0.0
    %3972 = vmatpush1.xpose.msra.mxu0 0.0
    %3973 = vmatprep.subr.mxu0 0.0
    %3974 = vmatpush1.xpose.msra.mxu0 0.0
    %3975 = vmatprep.subr.mxu0 0.0
    %3976 = vmatpush1.xpose.msra.mxu0 0.0
    %3977 = vmatprep.subr.mxu0 0.0
    %3978 = vmatpush1.xpose.msra.mxu0 0.0
    %3979 = vmatprep.subr.mxu0 0.0
    %3980 = vmatpush1.xpose.msra.mxu0 0.0
    %3981 = vmatprep.subr.mxu0 0.0
    %3982 = vmatpush1.xpose.msra.mxu0 0.0
    %3983 = vmatprep.subr.mxu0 0.0
    %3984 = vmatpush1.xpose.msra.mxu0 0.0
    %3985 = vmatprep.subr.mxu0 0.0
    %3986 = vmatpush1.xpose.msra.mxu0 0.0
    %3987 = vmatprep.subr.mxu0 0.0
    %3988 = vmatpush1.xpose.msra.mxu0 0.0
    %3989 = vmatprep.subr.mxu0 0.0
    %3990 = vmatpush1.xpose.msra.mxu0 0.0
    %3991 = vmatprep.subr.mxu0 0.0
    %3992 = vmatpush1.xpose.msra.mxu0 0.0
    %3993 = vmatprep.subr.mxu0 0.0
    %3994 = vmatpush1.xpose.msra.mxu0 0.0
    %3995 = vmatprep.subr.mxu0 0.0
    %3996 = vmatpush1.xpose.msra.mxu0 0.0
    %3997 = vmatprep.subr.mxu0 0.0
    %3998 = vmatpush1.xpose.msra.mxu0 0.0
    %3999 = vmatprep.subr.mxu0 0.0
    %4000 = vmatpush1.xpose.msra.mxu0 0.0
    %4001 = vmatprep.subr.mxu0 0.0
    %4002 = vmatpush1.xpose.msra.mxu0 0.0
    %4003 = vmatprep.subr.mxu0 0.0
    %4004 = vmatpush1.xpose.msra.mxu0 0.0
    %4005 = vmatprep.subr.mxu0 0.0
    %4006 = vmatpush1.xpose.msra.mxu0 0.0
    %4007 = vmatprep.subr.mxu0 0.0
    %4008 = vmatpush1.xpose.msra.mxu0 0.0
    %4009 = vmatprep.subr.mxu0 0.0
    %4010 = vmatpush1.xpose.msra.mxu0 0.0
    %4011 = vmatprep.subr.mxu0 0.0
    %4012 = vmatpush1.xpose.msra.mxu0 0.0
    %4013 = vmatprep.mubr.f32.mxu0 0.0
    %4014 = vmatmul.mubr.f32.gmra.mrb[0].mxu0 %v3944
    %v4015 = vpop.f32.mrb[0].mxu0
    %v4016 = vadd.f32 0.0, %v4015
    %v4017 = vpop.f32.mrb[0].mxu0
    %4018 = vdwg.mxu0
    %v4020 = vsel %vm184, %v3115, 0
    %v4023 = vsel %vm184, %v3415, 0
    %4025 = vmatprep.subr.mxu0 0.0
    %4026 = vmatpush1.xpose.msra.mxu0 %v4023
    %4027 = vmatprep.subr.mxu0 0.0
    %4028 = vmatpush1.xpose.msra.mxu0 0.0
    %4029 = vmatprep.subr.mxu0 0.0
    %4030 = vmatpush1.xpose.msra.mxu0 0.0
    %4031 = vmatprep.subr.mxu0 0.0
    %4032 = vmatpush1.xpose.msra.mxu0 0.0
    %4033 = vmatprep.subr.mxu0 0.0
    %4034 = vmatpush1.xpose.msra.mxu0 0.0
    %4035 = vmatprep.subr.mxu0 0.0
    %4036 = vmatpush1.xpose.msra.mxu0 0.0
    %4037 = vmatprep.subr.mxu0 0.0
    %4038 = vmatpush1.xpose.msra.mxu0 0.0
    %4039 = vmatprep.subr.mxu0 0.0
    %4040 = vmatpush1.xpose.msra.mxu0 0.0
    %4041 = vmatprep.subr.mxu0 0.0
    %4042 = vmatpush1.xpose.msra.mxu0 0.0
    %4043 = vmatprep.subr.mxu0 0.0
    %4044 = vmatpush1.xpose.msra.mxu0 0.0
    %4045 = vmatprep.subr.mxu0 0.0
    %4046 = vmatpush1.xpose.msra.mxu0 0.0
    %4047 = vmatprep.subr.mxu0 0.0
    %4048 = vmatpush1.xpose.msra.mxu0 0.0
    %4049 = vmatprep.subr.mxu0 0.0
    %4050 = vmatpush1.xpose.msra.mxu0 0.0
    %4051 = vmatprep.subr.mxu0 0.0
    %4052 = vmatpush1.xpose.msra.mxu0 0.0
    %4053 = vmatprep.subr.mxu0 0.0
    %4054 = vmatpush1.xpose.msra.mxu0 0.0
    %4055 = vmatprep.subr.mxu0 0.0
    %4056 = vmatpush1.xpose.msra.mxu0 0.0
    %4057 = vmatprep.subr.mxu0 0.0
    %4058 = vmatpush1.xpose.msra.mxu0 0.0
    %4059 = vmatprep.subr.mxu0 0.0
    %4060 = vmatpush1.xpose.msra.mxu0 0.0
    %4061 = vmatprep.subr.mxu0 0.0
    %4062 = vmatpush1.xpose.msra.mxu0 0.0
    %4063 = vmatprep.subr.mxu0 0.0
    %4064 = vmatpush1.xpose.msra.mxu0 0.0
    %4065 = vmatprep.subr.mxu0 0.0
    %4066 = vmatpush1.xpose.msra.mxu0 0.0
    %4067 = vmatprep.subr.mxu0 0.0
    %4068 = vmatpush1.xpose.msra.mxu0 0.0
    %4069 = vmatprep.subr.mxu0 0.0
    %4070 = vmatpush1.xpose.msra.mxu0 0.0
    %4071 = vmatprep.subr.mxu0 0.0
    %4072 = vmatpush1.xpose.msra.mxu0 0.0
    %4073 = vmatprep.subr.mxu0 0.0
    %4074 = vmatpush1.xpose.msra.mxu0 0.0
    %4075 = vmatprep.subr.mxu0 0.0
    %4076 = vmatpush1.xpose.msra.mxu0 0.0
    %4077 = vmatprep.subr.mxu0 0.0
    %4078 = vmatpush1.xpose.msra.mxu0 0.0
    %4079 = vmatprep.subr.mxu0 0.0
    %4080 = vmatpush1.xpose.msra.mxu0 0.0
    %4081 = vmatprep.subr.mxu0 0.0
    %4082 = vmatpush1.xpose.msra.mxu0 0.0
    %4083 = vmatprep.subr.mxu0 0.0
    %4084 = vmatpush1.xpose.msra.mxu0 0.0
    %4085 = vmatprep.subr.mxu0 0.0
    %4086 = vmatpush1.xpose.msra.mxu0 0.0
    %4087 = vmatprep.subr.mxu0 0.0
    %4088 = vmatpush1.xpose.msra.mxu0 0.0
    %4089 = vmatprep.mubr.f32.mxu0 0.0
    %4090 = vmatmul.mubr.f32.gmra.mrb[0].mxu0 %v4020
    %v4091 = vpop.f32.mrb[0].mxu0
    %v4092 = vadd.f32 0.0, %v4091
    %v4093 = vpop.f32.mrb[0].mxu0
    %4094 = vdwg.mxu0
    %v4096 = vsel %vm184, %v3185, 0
    %v4099 = vsel %vm184, %v3485, 0
    %4101 = vmatprep.subr.mxu0 0.0
    %4102 = vmatpush1.xpose.msra.mxu0 %v4099
    %4103 = vmatprep.subr.mxu0 0.0
    %4104 = vmatpush1.xpose.msra.mxu0 0.0
    %4105 = vmatprep.subr.mxu0 0.0
    %4106 = vmatpush1.xpose.msra.mxu0 0.0
    %4107 = vmatprep.subr.mxu0 0.0
    %4108 = vmatpush1.xpose.msra.mxu0 0.0
    %4109 = vmatprep.subr.mxu0 0.0
    %4110 = vmatpush1.xpose.msra.mxu0 0.0
    %4111 = vmatprep.subr.mxu0 0.0
    %4112 = vmatpush1.xpose.msra.mxu0 0.0
    %4113 = vmatprep.subr.mxu0 0.0
    %4114 = vmatpush1.xpose.msra.mxu0 0.0
    %4115 = vmatprep.subr.mxu0 0.0
    %4116 = vmatpush1.xpose.msra.mxu0 0.0
    %4117 = vmatprep.subr.mxu0 0.0
    %4118 = vmatpush1.xpose.msra.mxu0 0.0
    %4119 = vmatprep.subr.mxu0 0.0
    %4120 = vmatpush1.xpose.msra.mxu0 0.0
    %4121 = vmatprep.subr.mxu0 0.0
    %4122 = vmatpush1.xpose.msra.mxu0 0.0
    %4123 = vmatprep.subr.mxu0 0.0
    %4124 = vmatpush1.xpose.msra.mxu0 0.0
    %4125 = vmatprep.subr.mxu0 0.0
    %4126 = vmatpush1.xpose.msra.mxu0 0.0
    %4127 = vmatprep.subr.mxu0 0.0
    %4128 = vmatpush1.xpose.msra.mxu0 0.0
    %4129 = vmatprep.subr.mxu0 0.0
    %4130 = vmatpush1.xpose.msra.mxu0 0.0
    %4131 = vmatprep.subr.mxu0 0.0
    %4132 = vmatpush1.xpose.msra.mxu0 0.0
    %4133 = vmatprep.subr.mxu0 0.0
    %4134 = vmatpush1.xpose.msra.mxu0 0.0
    %4135 = vmatprep.subr.mxu0 0.0
    %4136 = vmatpush1.xpose.msra.mxu0 0.0
    %4137 = vmatprep.subr.mxu0 0.0
    %4138 = vmatpush1.xpose.msra.mxu0 0.0
    %4139 = vmatprep.subr.mxu0 0.0
    %4140 = vmatpush1.xpose.msra.mxu0 0.0
    %4141 = vmatprep.subr.mxu0 0.0
    %4142 = vmatpush1.xpose.msra.mxu0 0.0
    %4143 = vmatprep.subr.mxu0 0.0
    %4144 = vmatpush1.xpose.msra.mxu0 0.0
    %4145 = vmatprep.subr.mxu0 0.0
    %4146 = vmatpush1.xpose.msra.mxu0 0.0
    %4147 = vmatprep.subr.mxu0 0.0
    %4148 = vmatpush1.xpose.msra.mxu0 0.0
    %4149 = vmatprep.subr.mxu0 0.0
    %4150 = vmatpush1.xpose.msra.mxu0 0.0
    %4151 = vmatprep.subr.mxu0 0.0
    %4152 = vmatpush1.xpose.msra.mxu0 0.0
    %4153 = vmatprep.subr.mxu0 0.0
    %4154 = vmatpush1.xpose.msra.mxu0 0.0
    %4155 = vmatprep.subr.mxu0 0.0
    %4156 = vmatpush1.xpose.msra.mxu0 0.0
    %4157 = vmatprep.subr.mxu0 0.0
    %4158 = vmatpush1.xpose.msra.mxu0 0.0
    %4159 = vmatprep.subr.mxu0 0.0
    %4160 = vmatpush1.xpose.msra.mxu0 0.0
    %4161 = vmatprep.subr.mxu0 0.0
    %4162 = vmatpush1.xpose.msra.mxu0 0.0
    %4163 = vmatprep.subr.mxu0 0.0
    %4164 = vmatpush1.xpose.msra.mxu0 0.0
    %4165 = vmatprep.mubr.f32.mxu0 0.0
    %4166 = vmatmul.mubr.f32.gmra.mrb[0].mxu0 %v4096
    %v4167 = vpop.f32.mrb[0].mxu0
    %v4168 = vadd.f32 0.0, %v4167
    %v4169 = vpop.f32.mrb[0].mxu0
    %4170 = vdwg.mxu0
    %v4172 = vsel %vm184, %v3190, 0
    %v4175 = vsel %vm184, %v3490, 0
    %4177 = vmatprep.subr.mxu0 0.0
    %4178 = vmatpush1.xpose.msra.mxu0 %v4175
    %4179 = vmatprep.subr.mxu0 0.0
    %4180 = vmatpush1.xpose.msra.mxu0 0.0
    %4181 = vmatprep.subr.mxu0 0.0
    %4182 = vmatpush1.xpose.msra.mxu0 0.0
    %4183 = vmatprep.subr.mxu0 0.0
    %4184 = vmatpush1.xpose.msra.mxu0 0.0
    %4185 = vmatprep.subr.mxu0 0.0
    %4186 = vmatpush1.xpose.msra.mxu0 0.0
    %4187 = vmatprep.subr.mxu0 0.0
    %4188 = vmatpush1.xpose.msra.mxu0 0.0
    %4189 = vmatprep.subr.mxu0 0.0
    %4190 = vmatpush1.xpose.msra.mxu0 0.0
    %4191 = vmatprep.subr.mxu0 0.0
    %4192 = vmatpush1.xpose.msra.mxu0 0.0
    %4193 = vmatprep.subr.mxu0 0.0
    %4194 = vmatpush1.xpose.msra.mxu0 0.0
    %4195 = vmatprep.subr.mxu0 0.0
    %4196 = vmatpush1.xpose.msra.mxu0 0.0
    %4197 = vmatprep.subr.mxu0 0.0
    %4198 = vmatpush1.xpose.msra.mxu0 0.0
    %4199 = vmatprep.subr.mxu0 0.0
    %4200 = vmatpush1.xpose.msra.mxu0 0.0
    %4201 = vmatprep.subr.mxu0 0.0
    %4202 = vmatpush1.xpose.msra.mxu0 0.0
    %4203 = vmatprep.subr.mxu0 0.0
    %4204 = vmatpush1.xpose.msra.mxu0 0.0
    %4205 = vmatprep.subr.mxu0 0.0
    %4206 = vmatpush1.xpose.msra.mxu0 0.0
    %4207 = vmatprep.subr.mxu0 0.0
    %4208 = vmatpush1.xpose.msra.mxu0 0.0
    %4209 = vmatprep.subr.mxu0 0.0
    %4210 = vmatpush1.xpose.msra.mxu0 0.0
    %4211 = vmatprep.subr.mxu0 0.0
    %4212 = vmatpush1.xpose.msra.mxu0 0.0
    %4213 = vmatprep.subr.mxu0 0.0
    %4214 = vmatpush1.xpose.msra.mxu0 0.0
    %4215 = vmatprep.subr.mxu0 0.0
    %4216 = vmatpush1.xpose.msra.mxu0 0.0
    %4217 = vmatprep.subr.mxu0 0.0
    %4218 = vmatpush1.xpose.msra.mxu0 0.0
    %4219 = vmatprep.subr.mxu0 0.0
    %4220 = vmatpush1.xpose.msra.mxu0 0.0
    %4221 = vmatprep.subr.mxu0 0.0
    %4222 = vmatpush1.xpose.msra.mxu0 0.0
    %4223 = vmatprep.subr.mxu0 0.0
    %4224 = vmatpush1.xpose.msra.mxu0 0.0
    %4225 = vmatprep.subr.mxu0 0.0
    %4226 = vmatpush1.xpose.msra.mxu0 0.0
    %4227 = vmatprep.subr.mxu0 0.0
    %4228 = vmatpush1.xpose.msra.mxu0 0.0
    %4229 = vmatprep.subr.mxu0 0.0
    %4230 = vmatpush1.xpose.msra.mxu0 0.0
    %4231 = vmatprep.subr.mxu0 0.0
    %4232 = vmatpush1.xpose.msra.mxu0 0.0
    %4233 = vmatprep.subr.mxu0 0.0
    %4234 = vmatpush1.xpose.msra.mxu0 0.0
    %4235 = vmatprep.subr.mxu0 0.0
    %4236 = vmatpush1.xpose.msra.mxu0 0.0
    %4237 = vmatprep.subr.mxu0 0.0
    %4238 = vmatpush1.xpose.msra.mxu0 0.0
    %4239 = vmatprep.subr.mxu0 0.0
    %4240 = vmatpush1.xpose.msra.mxu0 0.0
    %4241 = vmatprep.mubr.f32.mxu0 0.0
    %4242 = vmatmul.mubr.f32.gmra.mrb[0].mxu0 %v4172
    %v4243 = vpop.f32.mrb[0].mxu0
    %v4244 = vadd.f32 0.0, %v4243
    %v4245 = vpop.f32.mrb[0].mxu0
    %4246 = vdwg.mxu0
    %v4248 = vsel %vm184, %v3260, 0
    %v4251 = vsel %vm184, %v3560, 0
    %4253 = vmatprep.subr.mxu0 0.0
    %4254 = vmatpush1.xpose.msra.mxu0 %v4251
    %4255 = vmatprep.subr.mxu0 0.0
    %4256 = vmatpush1.xpose.msra.mxu0 0.0
    %4257 = vmatprep.subr.mxu0 0.0
    %4258 = vmatpush1.xpose.msra.mxu0 0.0
    %4259 = vmatprep.subr.mxu0 0.0
    %4260 = vmatpush1.xpose.msra.mxu0 0.0
    %4261 = vmatprep.subr.mxu0 0.0
    %4262 = vmatpush1.xpose.msra.mxu0 0.0
    %4263 = vmatprep.subr.mxu0 0.0
    %4264 = vmatpush1.xpose.msra.mxu0 0.0
    %4265 = vmatprep.subr.mxu0 0.0
    %4266 = vmatpush1.xpose.msra.mxu0 0.0
    %4267 = vmatprep.subr.mxu0 0.0
    %4268 = vmatpush1.xpose.msra.mxu0 0.0
    %4269 = vmatprep.subr.mxu0 0.0
    %4270 = vmatpush1.xpose.msra.mxu0 0.0
    %4271 = vmatprep.subr.mxu0 0.0
    %4272 = vmatpush1.xpose.msra.mxu0 0.0
    %4273 = vmatprep.subr.mxu0 0.0
    %4274 = vmatpush1.xpose.msra.mxu0 0.0
    %4275 = vmatprep.subr.mxu0 0.0
    %4276 = vmatpush1.xpose.msra.mxu0 0.0
    %4277 = vmatprep.subr.mxu0 0.0
    %4278 = vmatpush1.xpose.msra.mxu0 0.0
    %4279 = vmatprep.subr.mxu0 0.0
    %4280 = vmatpush1.xpose.msra.mxu0 0.0
    %4281 = vmatprep.subr.mxu0 0.0
    %4282 = vmatpush1.xpose.msra.mxu0 0.0
    %4283 = vmatprep.subr.mxu0 0.0
    %4284 = vmatpush1.xpose.msra.mxu0 0.0
    %4285 = vmatprep.subr.mxu0 0.0
    %4286 = vmatpush1.xpose.msra.mxu0 0.0
    %4287 = vmatprep.subr.mxu0 0.0
    %4288 = vmatpush1.xpose.msra.mxu0 0.0
    %4289 = vmatprep.subr.mxu0 0.0
    %4290 = vmatpush1.xpose.msra.mxu0 0.0
    %4291 = vmatprep.subr.mxu0 0.0
    %4292 = vmatpush1.xpose.msra.mxu0 0.0
    %4293 = vmatprep.subr.mxu0 0.0
    %4294 = vmatpush1.xpose.msra.mxu0 0.0
    %4295 = vmatprep.subr.mxu0 0.0
    %4296 = vmatpush1.xpose.msra.mxu0 0.0
    %4297 = vmatprep.subr.mxu0 0.0
    %4298 = vmatpush1.xpose.msra.mxu0 0.0
    %4299 = vmatprep.subr.mxu0 0.0
    %4300 = vmatpush1.xpose.msra.mxu0 0.0
    %4301 = vmatprep.subr.mxu0 0.0
    %4302 = vmatpush1.xpose.msra.mxu0 0.0
    %4303 = vmatprep.subr.mxu0 0.0
    %4304 = vmatpush1.xpose.msra.mxu0 0.0
    %4305 = vmatprep.subr.mxu0 0.0
    %4306 = vmatpush1.xpose.msra.mxu0 0.0
    %4307 = vmatprep.subr.mxu0 0.0
    %4308 = vmatpush1.xpose.msra.mxu0 0.0
    %4309 = vmatprep.subr.mxu0 0.0
    %4310 = vmatpush1.xpose.msra.mxu0 0.0
    %4311 = vmatprep.subr.mxu0 0.0
    %4312 = vmatpush1.xpose.msra.mxu0 0.0
    %4313 = vmatprep.subr.mxu0 0.0
    %4314 = vmatpush1.xpose.msra.mxu0 0.0
    %4315 = vmatprep.subr.mxu0 0.0
    %4316 = vmatpush1.xpose.msra.mxu0 0.0
    %4317 = vmatprep.mubr.f32.mxu0 0.0
    %4318 = vmatmul.mubr.f32.gmra.mrb[0].mxu0 %v4248
    %v4319 = vpop.f32.mrb[0].mxu0
    %v4320 = vadd.f32 0.0, %v4319
    %v4321 = vpop.f32.mrb[0].mxu0
    %4322 = vdwg.mxu0
    %v4324 = vsel %vm184, %v3265, 0
    %v4327 = vsel %vm184, %v3565, 0
    %4329 = vmatprep.subr.mxu0 0.0
    %4330 = vmatpush1.xpose.msra.mxu0 %v4327
    %4331 = vmatprep.subr.mxu0 0.0
    %4332 = vmatpush1.xpose.msra.mxu0 0.0
    %4333 = vmatprep.subr.mxu0 0.0
    %4334 = vmatpush1.xpose.msra.mxu0 0.0
    %4335 = vmatprep.subr.mxu0 0.0
    %4336 = vmatpush1.xpose.msra.mxu0 0.0
    %4337 = vmatprep.subr.mxu0 0.0
    %4338 = vmatpush1.xpose.msra.mxu0 0.0
    %4339 = vmatprep.subr.mxu0 0.0
    %4340 = vmatpush1.xpose.msra.mxu0 0.0
    %4341 = vmatprep.subr.mxu0 0.0
    %4342 = vmatpush1.xpose.msra.mxu0 0.0
    %4343 = vmatprep.subr.mxu0 0.0
    %4344 = vmatpush1.xpose.msra.mxu0 0.0
    %4345 = vmatprep.subr.mxu0 0.0
    %4346 = vmatpush1.xpose.msra.mxu0 0.0
    %4347 = vmatprep.subr.mxu0 0.0
    %4348 = vmatpush1.xpose.msra.mxu0 0.0
    %4349 = vmatprep.subr.mxu0 0.0
    %4350 = vmatpush1.xpose.msra.mxu0 0.0
    %4351 = vmatprep.subr.mxu0 0.0
    %4352 = vmatpush1.xpose.msra.mxu0 0.0
    %4353 = vmatprep.subr.mxu0 0.0
    %4354 = vmatpush1.xpose.msra.mxu0 0.0
    %4355 = vmatprep.subr.mxu0 0.0
    %4356 = vmatpush1.xpose.msra.mxu0 0.0
    %4357 = vmatprep.subr.mxu0 0.0
    %4358 = vmatpush1.xpose.msra.mxu0 0.0
    %4359 = vmatprep.subr.mxu0 0.0
    %4360 = vmatpush1.xpose.msra.mxu0 0.0
    %4361 = vmatprep.subr.mxu0 0.0
    %4362 = vmatpush1.xpose.msra.mxu0 0.0
    %4363 = vmatprep.subr.mxu0 0.0
    %4364 = vmatpush1.xpose.msra.mxu0 0.0
    %4365 = vmatprep.subr.mxu0 0.0
    %4366 = vmatpush1.xpose.msra.mxu0 0.0
    %4367 = vmatprep.subr.mxu0 0.0
    %4368 = vmatpush1.xpose.msra.mxu0 0.0
    %4369 = vmatprep.subr.mxu0 0.0
    %4370 = vmatpush1.xpose.msra.mxu0 0.0
    %4371 = vmatprep.subr.mxu0 0.0
    %4372 = vmatpush1.xpose.msra.mxu0 0.0
    %4373 = vmatprep.subr.mxu0 0.0
    %4374 = vmatpush1.xpose.msra.mxu0 0.0
    %4375 = vmatprep.subr.mxu0 0.0
    %4376 = vmatpush1.xpose.msra.mxu0 0.0
    %4377 = vmatprep.subr.mxu0 0.0
    %4378 = vmatpush1.xpose.msra.mxu0 0.0
    %4379 = vmatprep.subr.mxu0 0.0
    %4380 = vmatpush1.xpose.msra.mxu0 0.0
    %4381 = vmatprep.subr.mxu0 0.0
    %4382 = vmatpush1.xpose.msra.mxu0 0.0
    %4383 = vmatprep.subr.mxu0 0.0
    %4384 = vmatpush1.xpose.msra.mxu0 0.0
    %4385 = vmatprep.subr.mxu0 0.0
    %4386 = vmatpush1.xpose.msra.mxu0 0.0
    %4387 = vmatprep.subr.mxu0 0.0
    %4388 = vmatpush1.xpose.msra.mxu0 0.0
    %4389 = vmatprep.subr.mxu0 0.0
    %4390 = vmatpush1.xpose.msra.mxu0 0.0
    %4391 = vmatprep.subr.mxu0 0.0
    %4392 = vmatpush1.xpose.msra.mxu0 0.0
    %4393 = vmatprep.mubr.f32.mxu0 0.0
    %4394 = vmatmul.mubr.f32.gmra.mrb[0].mxu0 %v4324
    %v4395 = vpop.f32.mrb[0].mxu0
    %v4396 = vadd.f32 0.0, %v4395
    %v4397 = vpop.f32.mrb[0].mxu0
    %4398 = vdwg.mxu0
    %v4400 = vsel %vm184, %v3335, 0
    %v4403 = vsel %vm184, %v3635, 0
    %4405 = vmatprep.subr.mxu0 0.0
    %4406 = vmatpush1.xpose.msra.mxu0 %v4403
    %4407 = vmatprep.subr.mxu0 0.0
    %4408 = vmatpush1.xpose.msra.mxu0 0.0
    %4409 = vmatprep.subr.mxu0 0.0
    %4410 = vmatpush1.xpose.msra.mxu0 0.0
    %4411 = vmatprep.subr.mxu0 0.0
    %4412 = vmatpush1.xpose.msra.mxu0 0.0
    %4413 = vmatprep.subr.mxu0 0.0
    %4414 = vmatpush1.xpose.msra.mxu0 0.0
    %4415 = vmatprep.subr.mxu0 0.0
    %4416 = vmatpush1.xpose.msra.mxu0 0.0
    %4417 = vmatprep.subr.mxu0 0.0
    %4418 = vmatpush1.xpose.msra.mxu0 0.0
    %4419 = vmatprep.subr.mxu0 0.0
    %4420 = vmatpush1.xpose.msra.mxu0 0.0
    %4421 = vmatprep.subr.mxu0 0.0
    %4422 = vmatpush1.xpose.msra.mxu0 0.0
    %4423 = vmatprep.subr.mxu0 0.0
    %4424 = vmatpush1.xpose.msra.mxu0 0.0
    %4425 = vmatprep.subr.mxu0 0.0
    %4426 = vmatpush1.xpose.msra.mxu0 0.0
    %4427 = vmatprep.subr.mxu0 0.0
    %4428 = vmatpush1.xpose.msra.mxu0 0.0
    %4429 = vmatprep.subr.mxu0 0.0
    %4430 = vmatpush1.xpose.msra.mxu0 0.0
    %4431 = vmatprep.subr.mxu0 0.0
    %4432 = vmatpush1.xpose.msra.mxu0 0.0
    %4433 = vmatprep.subr.mxu0 0.0
    %4434 = vmatpush1.xpose.msra.mxu0 0.0
    %4435 = vmatprep.subr.mxu0 0.0
    %4436 = vmatpush1.xpose.msra.mxu0 0.0
    %4437 = vmatprep.subr.mxu0 0.0
    %4438 = vmatpush1.xpose.msra.mxu0 0.0
    %4439 = vmatprep.subr.mxu0 0.0
    %4440 = vmatpush1.xpose.msra.mxu0 0.0
    %4441 = vmatprep.subr.mxu0 0.0
    %4442 = vmatpush1.xpose.msra.mxu0 0.0
    %4443 = vmatprep.subr.mxu0 0.0
    %4444 = vmatpush1.xpose.msra.mxu0 0.0
    %4445 = vmatprep.subr.mxu0 0.0
    %4446 = vmatpush1.xpose.msra.mxu0 0.0
    %4447 = vmatprep.subr.mxu0 0.0
    %4448 = vmatpush1.xpose.msra.mxu0 0.0
    %4449 = vmatprep.subr.mxu0 0.0
    %4450 = vmatpush1.xpose.msra.mxu0 0.0
    %4451 = vmatprep.subr.mxu0 0.0
    %4452 = vmatpush1.xpose.msra.mxu0 0.0
    %4453 = vmatprep.subr.mxu0 0.0
    %4454 = vmatpush1.xpose.msra.mxu0 0.0
    %4455 = vmatprep.subr.mxu0 0.0
    %4456 = vmatpush1.xpose.msra.mxu0 0.0
    %4457 = vmatprep.subr.mxu0 0.0
    %4458 = vmatpush1.xpose.msra.mxu0 0.0
    %4459 = vmatprep.subr.mxu0 0.0
    %4460 = vmatpush1.xpose.msra.mxu0 0.0
    %4461 = vmatprep.subr.mxu0 0.0
    %4462 = vmatpush1.xpose.msra.mxu0 0.0
    %4463 = vmatprep.subr.mxu0 0.0
    %4464 = vmatpush1.xpose.msra.mxu0 0.0
    %4465 = vmatprep.subr.mxu0 0.0
    %4466 = vmatpush1.xpose.msra.mxu0 0.0
    %4467 = vmatprep.subr.mxu0 0.0
    %4468 = vmatpush1.xpose.msra.mxu0 0.0
    %4469 = vmatprep.mubr.f32.mxu0 0.0
    %4470 = vmatmul.mubr.f32.gmra.mrb[0].mxu0 %v4400
    %v4471 = vpop.f32.mrb[0].mxu0
    %v4472 = vadd.f32 0.0, %v4471
    %v4473 = vpop.f32.mrb[0].mxu0
    %4474 = vdwg.mxu0
    %v4476 = vsel %vm184, %v3340, 0
    %v4479 = vsel %vm184, %v3640, 0
    %4481 = vmatprep.subr.mxu0 0.0
    %4482 = vmatpush1.xpose.msra.mxu0 %v4479
    %4483 = vmatprep.subr.mxu0 0.0
    %4484 = vmatpush1.xpose.msra.mxu0 0.0
    %4485 = vmatprep.subr.mxu0 0.0
    %4486 = vmatpush1.xpose.msra.mxu0 0.0
    %4487 = vmatprep.subr.mxu0 0.0
    %4488 = vmatpush1.xpose.msra.mxu0 0.0
    %4489 = vmatprep.subr.mxu0 0.0
    %4490 = vmatpush1.xpose.msra.mxu0 0.0
    %4491 = vmatprep.subr.mxu0 0.0
    %4492 = vmatpush1.xpose.msra.mxu0 0.0
    %4493 = vmatprep.subr.mxu0 0.0
    %4494 = vmatpush1.xpose.msra.mxu0 0.0
    %4495 = vmatprep.subr.mxu0 0.0
    %4496 = vmatpush1.xpose.msra.mxu0 0.0
    %4497 = vmatprep.subr.mxu0 0.0
    %4498 = vmatpush1.xpose.msra.mxu0 0.0
    %4499 = vmatprep.subr.mxu0 0.0
    %4500 = vmatpush1.xpose.msra.mxu0 0.0
    %4501 = vmatprep.subr.mxu0 0.0
    %4502 = vmatpush1.xpose.msra.mxu0 0.0
    %4503 = vmatprep.subr.mxu0 0.0
    %4504 = vmatpush1.xpose.msra.mxu0 0.0
    %4505 = vmatprep.subr.mxu0 0.0
    %4506 = vmatpush1.xpose.msra.mxu0 0.0
    %4507 = vmatprep.subr.mxu0 0.0
    %4508 = vmatpush1.xpose.msra.mxu0 0.0
    %4509 = vmatprep.subr.mxu0 0.0
    %4510 = vmatpush1.xpose.msra.mxu0 0.0
    %4511 = vmatprep.subr.mxu0 0.0
    %4512 = vmatpush1.xpose.msra.mxu0 0.0
    %4513 = vmatprep.subr.mxu0 0.0
    %4514 = vmatpush1.xpose.msra.mxu0 0.0
    %4515 = vmatprep.subr.mxu0 0.0
    %4516 = vmatpush1.xpose.msra.mxu0 0.0
    %4517 = vmatprep.subr.mxu0 0.0
    %4518 = vmatpush1.xpose.msra.mxu0 0.0
    %4519 = vmatprep.subr.mxu0 0.0
    %4520 = vmatpush1.xpose.msra.mxu0 0.0
    %4521 = vmatprep.subr.mxu0 0.0
    %4522 = vmatpush1.xpose.msra.mxu0 0.0
    %4523 = vmatprep.subr.mxu0 0.0
    %4524 = vmatpush1.xpose.msra.mxu0 0.0
    %4525 = vmatprep.subr.mxu0 0.0
    %4526 = vmatpush1.xpose.msra.mxu0 0.0
    %4527 = vmatprep.subr.mxu0 0.0
    %4528 = vmatpush1.xpose.msra.mxu0 0.0
    %4529 = vmatprep.subr.mxu0 0.0
    %4530 = vmatpush1.xpose.msra.mxu0 0.0
    %4531 = vmatprep.subr.mxu0 0.0
    %4532 = vmatpush1.xpose.msra.mxu0 0.0
    %4533 = vmatprep.subr.mxu0 0.0
    %4534 = vmatpush1.xpose.msra.mxu0 0.0
    %4535 = vmatprep.subr.mxu0 0.0
    %4536 = vmatpush1.xpose.msra.mxu0 0.0
    %4537 = vmatprep.subr.mxu0 0.0
    %4538 = vmatpush1.xpose.msra.mxu0 0.0
    %4539 = vmatprep.subr.mxu0 0.0
    %4540 = vmatpush1.xpose.msra.mxu0 0.0
    %4541 = vmatprep.subr.mxu0 0.0
    %4542 = vmatpush1.xpose.msra.mxu0 0.0
    %4543 = vmatprep.subr.mxu0 0.0
    %4544 = vmatpush1.xpose.msra.mxu0 0.0
    %4545 = vmatprep.mubr.f32.mxu0 0.0
    %4546 = vmatmul.mubr.f32.gmra.mrb[0].mxu0 %v4476
    %v4547 = vpop.f32.mrb[0].mxu0
    %v4548 = vadd.f32 0.0, %v4547
    %v4549 = vpop.f32.mrb[0].mxu0
    %4550 = vdwg.mxu0
    %v4551 = vmul.f32 %v4016, 1.442695
    %v4552 = vpow.pop %v4551
    %v4553 = vmul.f32 %v4092, 1.442695
    %v4554 = vpow.pop %v4553
    %v4555 = vmul.f32 %v4168, 1.442695
    %v4556 = vpow.pop %v4555
    %v4557 = vmul.f32 %v4244, 1.442695
    %v4558 = vpow.pop %v4557
    %v4559 = vmul.f32 %v4320, 1.442695
    %v4560 = vpow.pop %v4559
    %v4561 = vmul.f32 %v4396, 1.442695
    %v4562 = vpow.pop %v4561
    %v4563 = vmul.f32 %v4472, 1.442695
    %v4564 = vpow.pop %v4563
    %v4565 = vmul.f32 %v4548, 1.442695
    %v4566 = vpow.pop %v4565
    %v4567 = vsel %vm1715, %v4552, 0.0
    %4568 = vadd.xlane.f32.xlu0 %v4567
    %v4569 = vpop.xlane.xlu0 %4568
    %v4570 = vsel %vm1715, %v4554, 0.0
    %4571 = vadd.xlane.f32.xlu0 %v4570
    %v4572 = vpop.xlane.xlu0 %4571
    %v4573 = vsel %vm1715, %v4556, 0.0
    %4574 = vadd.xlane.f32.xlu0 %v4573
    %v4575 = vpop.xlane.xlu0 %4574
    %v4576 = vsel %vm1715, %v4558, 0.0
    %4577 = vadd.xlane.f32.xlu0 %v4576
    %v4578 = vpop.xlane.xlu0 %4577
    %v4579 = vsel %vm1715, %v4560, 0.0
    %4580 = vadd.xlane.f32.xlu0 %v4579
    %v4581 = vpop.xlane.xlu0 %4580
    %v4582 = vsel %vm1715, %v4562, 0.0
    %4583 = vadd.xlane.f32.xlu0 %v4582
    %v4584 = vpop.xlane.xlu0 %4583
    %v4585 = vsel %vm1715, %v4564, 0.0
    %4586 = vadd.xlane.f32.xlu0 %v4585
    %v4587 = vpop.xlane.xlu0 %4586
    %v4588 = vsel %vm1715, %v4566, 0.0
    %4589 = vadd.xlane.f32.xlu0 %v4588
    %v4590 = vpop.xlane.xlu0 %4589
    %v4591 = vrcp.pop %v4569
    %v4592 = vmul.f32 %v4552, %v4591
    %v4593 = vrcp.pop %v4572
    %v4594 = vmul.f32 %v4554, %v4593
    %v4595 = vrcp.pop %v4575
    %v4596 = vmul.f32 %v4556, %v4595
    %v4597 = vrcp.pop %v4578
    %v4598 = vmul.f32 %v4558, %v4597
    %v4599 = vrcp.pop %v4581
    %v4600 = vmul.f32 %v4560, %v4599
    %v4601 = vrcp.pop %v4584
    %v4602 = vmul.f32 %v4562, %v4601
    %v4603 = vrcp.pop %v4587
    %v4604 = vmul.f32 %v4564, %v4603
    %v4605 = vrcp.pop %v4590
    %v4606 = vmul.f32 %v4566, %v4605
    %v4608 = vsel %vm1715, %v4592, 0
    %4610 = vmatprep.subr.mxu0 0.0
    %4611 = vmatpush1.msra.mxu0 %v3710
    %4612 = vmatprep.subr.mxu0 0.0
    %4613 = vmatpush1.msra.mxu0 0.0
    %4614 = vmatprep.subr.mxu0 0.0
    %4615 = vmatpush1.msra.mxu0 0.0
    %4616 = vmatprep.subr.mxu0 0.0
    %4617 = vmatpush1.msra.mxu0 0.0
    %4618 = vmatprep.subr.mxu0 0.0
    %4619 = vmatpush1.msra.mxu0 0.0
    %4620 = vmatprep.subr.mxu0 0.0
    %4621 = vmatpush1.msra.mxu0 0.0
    %4622 = vmatprep.subr.mxu0 0.0
    %4623 = vmatpush1.msra.mxu0 0.0
    %4624 = vmatprep.subr.mxu0 0.0
    %4625 = vmatpush1.msra.mxu0 0.0
    %4626 = vmatprep.subr.mxu0 0.0
    %4627 = vmatpush1.msra.mxu0 0.0
    %4628 = vmatprep.subr.mxu0 0.0
    %4629 = vmatpush1.msra.mxu0 0.0
    %4630 = vmatprep.subr.mxu0 0.0
    %4631 = vmatpush1.msra.mxu0 0.0
    %4632 = vmatprep.subr.mxu0 0.0
    %4633 = vmatpush1.msra.mxu0 0.0
    %4634 = vmatprep.subr.mxu0 0.0
    %4635 = vmatpush1.msra.mxu0 0.0
    %4636 = vmatprep.subr.mxu0 0.0
    %4637 = vmatpush1.msra.mxu0 0.0
    %4638 = vmatprep.subr.mxu0 0.0
    %4639 = vmatpush1.msra.mxu0 0.0
    %4640 = vmatprep.subr.mxu0 0.0
    %4641 = vmatpush1.msra.mxu0 0.0
    %4642 = vmatprep.subr.mxu0 0.0
    %4643 = vmatpush1.msra.mxu0 0.0
    %4644 = vmatprep.subr.mxu0 0.0
    %4645 = vmatpush1.msra.mxu0 0.0
    %4646 = vmatprep.subr.mxu0 0.0
    %4647 = vmatpush1.msra.mxu0 0.0
    %4648 = vmatprep.subr.mxu0 0.0
    %4649 = vmatpush1.msra.mxu0 0.0
    %4650 = vmatprep.subr.mxu0 0.0
    %4651 = vmatpush1.msra.mxu0 0.0
    %4652 = vmatprep.subr.mxu0 0.0
    %4653 = vmatpush1.msra.mxu0 0.0
    %4654 = vmatprep.subr.mxu0 0.0
    %4655 = vmatpush1.msra.mxu0 0.0
    %4656 = vmatprep.subr.mxu0 0.0
    %4657 = vmatpush1.msra.mxu0 0.0
    %4658 = vmatprep.subr.mxu0 0.0
    %4659 = vmatpush1.msra.mxu0 0.0
    %4660 = vmatprep.subr.mxu0 0.0
    %4661 = vmatpush1.msra.mxu0 0.0
    %4662 = vmatprep.subr.mxu0 0.0
    %4663 = vmatpush1.msra.mxu0 0.0
    %4664 = vmatprep.subr.mxu0 0.0
    %4665 = vmatpush1.msra.mxu0 0.0
    %4666 = vmatprep.subr.mxu0 0.0
    %4667 = vmatpush1.msra.mxu0 0.0
    %4668 = vmatprep.subr.mxu0 0.0
    %4669 = vmatpush1.msra.mxu0 0.0
    %4670 = vmatprep.subr.mxu0 0.0
    %4671 = vmatpush1.msra.mxu0 0.0
    %4672 = vmatprep.subr.mxu0 0.0
    %4673 = vmatpush1.msra.mxu0 0.0
    %4674 = vmatprep.mubr.f32.mxu0 0.0
    %4675 = vmatmul.mubr.f32.gmra.mrb[0].mxu0 %v4608
    %v4676 = vpop.f32.mrb[0].mxu0
    %v4677 = vadd.f32 0.0, %v4676
    %v4678 = vpop.f32.mrb[0].mxu0
    %4679 = vdwg.mxu0
    %v4681 = vsel %vm1715, %v4594, 0
    %4683 = vmatprep.subr.mxu0 0.0
    %4684 = vmatpush1.msra.mxu0 %v3715
    %4685 = vmatprep.subr.mxu0 0.0
    %4686 = vmatpush1.msra.mxu0 0.0
    %4687 = vmatprep.subr.mxu0 0.0
    %4688 = vmatpush1.msra.mxu0 0.0
    %4689 = vmatprep.subr.mxu0 0.0
    %4690 = vmatpush1.msra.mxu0 0.0
    %4691 = vmatprep.subr.mxu0 0.0
    %4692 = vmatpush1.msra.mxu0 0.0
    %4693 = vmatprep.subr.mxu0 0.0
    %4694 = vmatpush1.msra.mxu0 0.0
    %4695 = vmatprep.subr.mxu0 0.0
    %4696 = vmatpush1.msra.mxu0 0.0
    %4697 = vmatprep.subr.mxu0 0.0
    %4698 = vmatpush1.msra.mxu0 0.0
    %4699 = vmatprep.subr.mxu0 0.0
    %4700 = vmatpush1.msra.mxu0 0.0
    %4701 = vmatprep.subr.mxu0 0.0
    %4702 = vmatpush1.msra.mxu0 0.0
    %4703 = vmatprep.subr.mxu0 0.0
    %4704 = vmatpush1.msra.mxu0 0.0
    %4705 = vmatprep.subr.mxu0 0.0
    %4706 = vmatpush1.msra.mxu0 0.0
    %4707 = vmatprep.subr.mxu0 0.0
    %4708 = vmatpush1.msra.mxu0 0.0
    %4709 = vmatprep.subr.mxu0 0.0
    %4710 = vmatpush1.msra.mxu0 0.0
    %4711 = vmatprep.subr.mxu0 0.0
    %4712 = vmatpush1.msra.mxu0 0.0
    %4713 = vmatprep.subr.mxu0 0.0
    %4714 = vmatpush1.msra.mxu0 0.0
    %4715 = vmatprep.subr.mxu0 0.0
    %4716 = vmatpush1.msra.mxu0 0.0
    %4717 = vmatprep.subr.mxu0 0.0
    %4718 = vmatpush1.msra.mxu0 0.0
    %4719 = vmatprep.subr.mxu0 0.0
    %4720 = vmatpush1.msra.mxu0 0.0
    %4721 = vmatprep.subr.mxu0 0.0
    %4722 = vmatpush1.msra.mxu0 0.0
    %4723 = vmatprep.subr.mxu0 0.0
    %4724 = vmatpush1.msra.mxu0 0.0
    %4725 = vmatprep.subr.mxu0 0.0
    %4726 = vmatpush1.msra.mxu0 0.0
    %4727 = vmatprep.subr.mxu0 0.0
    %4728 = vmatpush1.msra.mxu0 0.0
    %4729 = vmatprep.subr.mxu0 0.0
    %4730 = vmatpush1.msra.mxu0 0.0
    %4731 = vmatprep.subr.mxu0 0.0
    %4732 = vmatpush1.msra.mxu0 0.0
    %4733 = vmatprep.subr.mxu0 0.0
    %4734 = vmatpush1.msra.mxu0 0.0
    %4735 = vmatprep.subr.mxu0 0.0
    %4736 = vmatpush1.msra.mxu0 0.0
    %4737 = vmatprep.subr.mxu0 0.0
    %4738 = vmatpush1.msra.mxu0 0.0
    %4739 = vmatprep.subr.mxu0 0.0
    %4740 = vmatpush1.msra.mxu0 0.0
    %4741 = vmatprep.subr.mxu0 0.0
    %4742 = vmatpush1.msra.mxu0 0.0
    %4743 = vmatprep.subr.mxu0 0.0
    %4744 = vmatpush1.msra.mxu0 0.0
    %4745 = vmatprep.subr.mxu0 0.0
    %4746 = vmatpush1.msra.mxu0 0.0
    %4747 = vmatprep.mubr.f32.mxu0 0.0
    %4748 = vmatmul.mubr.f32.gmra.mrb[0].mxu0 %v4681
    %v4749 = vpop.f32.mrb[0].mxu0
    %v4750 = vadd.f32 0.0, %v4749
    %v4751 = vpop.f32.mrb[0].mxu0
    %4752 = vdwg.mxu0
    %v4754 = vsel %vm1715, %v4596, 0
    %4756 = vmatprep.subr.mxu0 0.0
    %4757 = vmatpush1.msra.mxu0 %v3785
    %4758 = vmatprep.subr.mxu0 0.0
    %4759 = vmatpush1.msra.mxu0 0.0
    %4760 = vmatprep.subr.mxu0 0.0
    %4761 = vmatpush1.msra.mxu0 0.0
    %4762 = vmatprep.subr.mxu0 0.0
    %4763 = vmatpush1.msra.mxu0 0.0
    %4764 = vmatprep.subr.mxu0 0.0
    %4765 = vmatpush1.msra.mxu0 0.0
    %4766 = vmatprep.subr.mxu0 0.0
    %4767 = vmatpush1.msra.mxu0 0.0
    %4768 = vmatprep.subr.mxu0 0.0
    %4769 = vmatpush1.msra.mxu0 0.0
    %4770 = vmatprep.subr.mxu0 0.0
    %4771 = vmatpush1.msra.mxu0 0.0
    %4772 = vmatprep.subr.mxu0 0.0
    %4773 = vmatpush1.msra.mxu0 0.0
    %4774 = vmatprep.subr.mxu0 0.0
    %4775 = vmatpush1.msra.mxu0 0.0
    %4776 = vmatprep.subr.mxu0 0.0
    %4777 = vmatpush1.msra.mxu0 0.0
    %4778 = vmatprep.subr.mxu0 0.0
    %4779 = vmatpush1.msra.mxu0 0.0
    %4780 = vmatprep.subr.mxu0 0.0
    %4781 = vmatpush1.msra.mxu0 0.0
    %4782 = vmatprep.subr.mxu0 0.0
    %4783 = vmatpush1.msra.mxu0 0.0
    %4784 = vmatprep.subr.mxu0 0.0
    %4785 = vmatpush1.msra.mxu0 0.0
    %4786 = vmatprep.subr.mxu0 0.0
    %4787 = vmatpush1.msra.mxu0 0.0
    %4788 = vmatprep.subr.mxu0 0.0
    %4789 = vmatpush1.msra.mxu0 0.0
    %4790 = vmatprep.subr.mxu0 0.0
    %4791 = vmatpush1.msra.mxu0 0.0
    %4792 = vmatprep.subr.mxu0 0.0
    %4793 = vmatpush1.msra.mxu0 0.0
    %4794 = vmatprep.subr.mxu0 0.0
    %4795 = vmatpush1.msra.mxu0 0.0
    %4796 = vmatprep.subr.mxu0 0.0
    %4797 = vmatpush1.msra.mxu0 0.0
    %4798 = vmatprep.subr.mxu0 0.0
    %4799 = vmatpush1.msra.mxu0 0.0
    %4800 = vmatprep.subr.mxu0 0.0
    %4801 = vmatpush1.msra.mxu0 0.0
    %4802 = vmatprep.subr.mxu0 0.0
    %4803 = vmatpush1.msra.mxu0 0.0
    %4804 = vmatprep.subr.mxu0 0.0
    %4805 = vmatpush1.msra.mxu0 0.0
    %4806 = vmatprep.subr.mxu0 0.0
    %4807 = vmatpush1.msra.mxu0 0.0
    %4808 = vmatprep.subr.mxu0 0.0
    %4809 = vmatpush1.msra.mxu0 0.0
    %4810 = vmatprep.subr.mxu0 0.0
    %4811 = vmatpush1.msra.mxu0 0.0
    %4812 = vmatprep.subr.mxu0 0.0
    %4813 = vmatpush1.msra.mxu0 0.0
    %4814 = vmatprep.subr.mxu0 0.0
    %4815 = vmatpush1.msra.mxu0 0.0
    %4816 = vmatprep.subr.mxu0 0.0
    %4817 = vmatpush1.msra.mxu0 0.0
    %4818 = vmatprep.subr.mxu0 0.0
    %4819 = vmatpush1.msra.mxu0 0.0
    %4820 = vmatprep.mubr.f32.mxu0 0.0
    %4821 = vmatmul.mubr.f32.gmra.mrb[0].mxu0 %v4754
    %v4822 = vpop.f32.mrb[0].mxu0
    %v4823 = vadd.f32 0.0, %v4822
    %v4824 = vpop.f32.mrb[0].mxu0
    %4825 = vdwg.mxu0
    %v4827 = vsel %vm1715, %v4598, 0
    %4829 = vmatprep.subr.mxu0 0.0
    %4830 = vmatpush1.msra.mxu0 %v3790
    %4831 = vmatprep.subr.mxu0 0.0
    %4832 = vmatpush1.msra.mxu0 0.0
    %4833 = vmatprep.subr.mxu0 0.0
    %4834 = vmatpush1.msra.mxu0 0.0
    %4835 = vmatprep.subr.mxu0 0.0
    %4836 = vmatpush1.msra.mxu0 0.0
    %4837 = vmatprep.subr.mxu0 0.0
    %4838 = vmatpush1.msra.mxu0 0.0
    %4839 = vmatprep.subr.mxu0 0.0
    %4840 = vmatpush1.msra.mxu0 0.0
    %4841 = vmatprep.subr.mxu0 0.0
    %4842 = vmatpush1.msra.mxu0 0.0
    %4843 = vmatprep.subr.mxu0 0.0
    %4844 = vmatpush1.msra.mxu0 0.0
    %4845 = vmatprep.subr.mxu0 0.0
    %4846 = vmatpush1.msra.mxu0 0.0
    %4847 = vmatprep.subr.mxu0 0.0
    %4848 = vmatpush1.msra.mxu0 0.0
    %4849 = vmatprep.subr.mxu0 0.0
    %4850 = vmatpush1.msra.mxu0 0.0
    %4851 = vmatprep.subr.mxu0 0.0
    %4852 = vmatpush1.msra.mxu0 0.0
    %4853 = vmatprep.subr.mxu0 0.0
    %4854 = vmatpush1.msra.mxu0 0.0
    %4855 = vmatprep.subr.mxu0 0.0
    %4856 = vmatpush1.msra.mxu0 0.0
    %4857 = vmatprep.subr.mxu0 0.0
    %4858 = vmatpush1.msra.mxu0 0.0
    %4859 = vmatprep.subr.mxu0 0.0
    %4860 = vmatpush1.msra.mxu0 0.0
    %4861 = vmatprep.subr.mxu0 0.0
    %4862 = vmatpush1.msra.mxu0 0.0
    %4863 = vmatprep.subr.mxu0 0.0
    %4864 = vmatpush1.msra.mxu0 0.0
    %4865 = vmatprep.subr.mxu0 0.0
    %4866 = vmatpush1.msra.mxu0 0.0
    %4867 = vmatprep.subr.mxu0 0.0
    %4868 = vmatpush1.msra.mxu0 0.0
    %4869 = vmatprep.subr.mxu0 0.0
    %4870 = vmatpush1.msra.mxu0 0.0
    %4871 = vmatprep.subr.mxu0 0.0
    %4872 = vmatpush1.msra.mxu0 0.0
    %4873 = vmatprep.subr.mxu0 0.0
    %4874 = vmatpush1.msra.mxu0 0.0
    %4875 = vmatprep.subr.mxu0 0.0
    %4876 = vmatpush1.msra.mxu0 0.0
    %4877 = vmatprep.subr.mxu0 0.0
    %4878 = vmatpush1.msra.mxu0 0.0
    %4879 = vmatprep.subr.mxu0 0.0
    %4880 = vmatpush1.msra.mxu0 0.0
    %4881 = vmatprep.subr.mxu0 0.0
    %4882 = vmatpush1.msra.mxu0 0.0
    %4883 = vmatprep.subr.mxu0 0.0
    %4884 = vmatpush1.msra.mxu0 0.0
    %4885 = vmatprep.subr.mxu0 0.0
    %4886 = vmatpush1.msra.mxu0 0.0
    %4887 = vmatprep.subr.mxu0 0.0
    %4888 = vmatpush1.msra.mxu0 0.0
    %4889 = vmatprep.subr.mxu0 0.0
    %4890 = vmatpush1.msra.mxu0 0.0
    %4891 = vmatprep.subr.mxu0 0.0
    %4892 = vmatpush1.msra.mxu0 0.0
    %4893 = vmatprep.mubr.f32.mxu0 0.0
    %4894 = vmatmul.mubr.f32.gmra.mrb[0].mxu0 %v4827
    %v4895 = vpop.f32.mrb[0].mxu0
    %v4896 = vadd.f32 0.0, %v4895
    %v4897 = vpop.f32.mrb[0].mxu0
    %4898 = vdwg.mxu0
    %v4900 = vsel %vm1715, %v4600, 0
    %4902 = vmatprep.subr.mxu0 0.0
    %4903 = vmatpush1.msra.mxu0 %v3860
    %4904 = vmatprep.subr.mxu0 0.0
    %4905 = vmatpush1.msra.mxu0 0.0
    %4906 = vmatprep.subr.mxu0 0.0
    %4907 = vmatpush1.msra.mxu0 0.0
    %4908 = vmatprep.subr.mxu0 0.0
    %4909 = vmatpush1.msra.mxu0 0.0
    %4910 = vmatprep.subr.mxu0 0.0
    %4911 = vmatpush1.msra.mxu0 0.0
    %4912 = vmatprep.subr.mxu0 0.0
    %4913 = vmatpush1.msra.mxu0 0.0
    %4914 = vmatprep.subr.mxu0 0.0
    %4915 = vmatpush1.msra.mxu0 0.0
    %4916 = vmatprep.subr.mxu0 0.0
    %4917 = vmatpush1.msra.mxu0 0.0
    %4918 = vmatprep.subr.mxu0 0.0
    %4919 = vmatpush1.msra.mxu0 0.0
    %4920 = vmatprep.subr.mxu0 0.0
    %4921 = vmatpush1.msra.mxu0 0.0
    %4922 = vmatprep.subr.mxu0 0.0
    %4923 = vmatpush1.msra.mxu0 0.0
    %4924 = vmatprep.subr.mxu0 0.0
    %4925 = vmatpush1.msra.mxu0 0.0
    %4926 = vmatprep.subr.mxu0 0.0
    %4927 = vmatpush1.msra.mxu0 0.0
    %4928 = vmatprep.subr.mxu0 0.0
    %4929 = vmatpush1.msra.mxu0 0.0
    %4930 = vmatprep.subr.mxu0 0.0
    %4931 = vmatpush1.msra.mxu0 0.0
    %4932 = vmatprep.subr.mxu0 0.0
    %4933 = vmatpush1.msra.mxu0 0.0
    %4934 = vmatprep.subr.mxu0 0.0
    %4935 = vmatpush1.msra.mxu0 0.0
    %4936 = vmatprep.subr.mxu0 0.0
    %4937 = vmatpush1.msra.mxu0 0.0
    %4938 = vmatprep.subr.mxu0 0.0
    %4939 = vmatpush1.msra.mxu0 0.0
    %4940 = vmatprep.subr.mxu0 0.0
    %4941 = vmatpush1.msra.mxu0 0.0
    %4942 = vmatprep.subr.mxu0 0.0
    %4943 = vmatpush1.msra.mxu0 0.0
    %4944 = vmatprep.subr.mxu0 0.0
    %4945 = vmatpush1.msra.mxu0 0.0
    %4946 = vmatprep.subr.mxu0 0.0
    %4947 = vmatpush1.msra.mxu0 0.0
    %4948 = vmatprep.subr.mxu0 0.0
    %4949 = vmatpush1.msra.mxu0 0.0
    %4950 = vmatprep.subr.mxu0 0.0
    %4951 = vmatpush1.msra.mxu0 0.0
    %4952 = vmatprep.subr.mxu0 0.0
    %4953 = vmatpush1.msra.mxu0 0.0
    %4954 = vmatprep.subr.mxu0 0.0
    %4955 = vmatpush1.msra.mxu0 0.0
    %4956 = vmatprep.subr.mxu0 0.0
    %4957 = vmatpush1.msra.mxu0 0.0
    %4958 = vmatprep.subr.mxu0 0.0
    %4959 = vmatpush1.msra.mxu0 0.0
    %4960 = vmatprep.subr.mxu0 0.0
    %4961 = vmatpush1.msra.mxu0 0.0
    %4962 = vmatprep.subr.mxu0 0.0
    %4963 = vmatpush1.msra.mxu0 0.0
    %4964 = vmatprep.subr.mxu0 0.0
    %4965 = vmatpush1.msra.mxu0 0.0
    %4966 = vmatprep.mubr.f32.mxu0 0.0
    %4967 = vmatmul.mubr.f32.gmra.mrb[0].mxu0 %v4900
    %v4968 = vpop.f32.mrb[0].mxu0
    %v4969 = vadd.f32 0.0, %v4968
    %v4970 = vpop.f32.mrb[0].mxu0
    %4971 = vdwg.mxu0
    %v4973 = vsel %vm1715, %v4602, 0
    %4975 = vmatprep.subr.mxu0 0.0
    %4976 = vmatpush1.msra.mxu0 %v3865
    %4977 = vmatprep.subr.mxu0 0.0
    %4978 = vmatpush1.msra.mxu0 0.0
    %4979 = vmatprep.subr.mxu0 0.0
    %4980 = vmatpush1.msra.mxu0 0.0
    %4981 = vmatprep.subr.mxu0 0.0
    %4982 = vmatpush1.msra.mxu0 0.0
    %4983 = vmatprep.subr.mxu0 0.0
    %4984 = vmatpush1.msra.mxu0 0.0
    %4985 = vmatprep.subr.mxu0 0.0
    %4986 = vmatpush1.msra.mxu0 0.0
    %4987 = vmatprep.subr.mxu0 0.0
    %4988 = vmatpush1.msra.mxu0 0.0
    %4989 = vmatprep.subr.mxu0 0.0
    %4990 = vmatpush1.msra.mxu0 0.0
    %4991 = vmatprep.subr.mxu0 0.0
    %4992 = vmatpush1.msra.mxu0 0.0
    %4993 = vmatprep.subr.mxu0 0.0
    %4994 = vmatpush1.msra.mxu0 0.0
    %4995 = vmatprep.subr.mxu0 0.0
    %4996 = vmatpush1.msra.mxu0 0.0
    %4997 = vmatprep.subr.mxu0 0.0
    %4998 = vmatpush1.msra.mxu0 0.0
    %4999 = vmatprep.subr.mxu0 0.0
    %5000 = vmatpush1.msra.mxu0 0.0
    %5001 = vmatprep.subr.mxu0 0.0
    %5002 = vmatpush1.msra.mxu0 0.0
    %5003 = vmatprep.subr.mxu0 0.0
    %5004 = vmatpush1.msra.mxu0 0.0
    %5005 = vmatprep.subr.mxu0 0.0
    %5006 = vmatpush1.msra.mxu0 0.0
    %5007 = vmatprep.subr.mxu0 0.0
    %5008 = vmatpush1.msra.mxu0 0.0
    %5009 = vmatprep.subr.mxu0 0.0
    %5010 = vmatpush1.msra.mxu0 0.0
    %5011 = vmatprep.subr.mxu0 0.0
    %5012 = vmatpush1.msra.mxu0 0.0
    %5013 = vmatprep.subr.mxu0 0.0
    %5014 = vmatpush1.msra.mxu0 0.0
    %5015 = vmatprep.subr.mxu0 0.0
    %5016 = vmatpush1.msra.mxu0 0.0
    %5017 = vmatprep.subr.mxu0 0.0
    %5018 = vmatpush1.msra.mxu0 0.0
    %5019 = vmatprep.subr.mxu0 0.0
    %5020 = vmatpush1.msra.mxu0 0.0
    %5021 = vmatprep.subr.mxu0 0.0
    %5022 = vmatpush1.msra.mxu0 0.0
    %5023 = vmatprep.subr.mxu0 0.0
    %5024 = vmatpush1.msra.mxu0 0.0
    %5025 = vmatprep.subr.mxu0 0.0
    %5026 = vmatpush1.msra.mxu0 0.0
    %5027 = vmatprep.subr.mxu0 0.0
    %5028 = vmatpush1.msra.mxu0 0.0
    %5029 = vmatprep.subr.mxu0 0.0
    %5030 = vmatpush1.msra.mxu0 0.0
    %5031 = vmatprep.subr.mxu0 0.0
    %5032 = vmatpush1.msra.mxu0 0.0
    %5033 = vmatprep.subr.mxu0 0.0
    %5034 = vmatpush1.msra.mxu0 0.0
    %5035 = vmatprep.subr.mxu0 0.0
    %5036 = vmatpush1.msra.mxu0 0.0
    %5037 = vmatprep.subr.mxu0 0.0
    %5038 = vmatpush1.msra.mxu0 0.0
    %5039 = vmatprep.mubr.f32.mxu0 0.0
    %5040 = vmatmul.mubr.f32.gmra.mrb[0].mxu0 %v4973
    %v5041 = vpop.f32.mrb[0].mxu0
    %v5042 = vadd.f32 0.0, %v5041
    %v5043 = vpop.f32.mrb[0].mxu0
    %5044 = vdwg.mxu0
    %v5046 = vsel %vm1715, %v4604, 0
    %5048 = vmatprep.subr.mxu0 0.0
    %5049 = vmatpush1.msra.mxu0 %v3935
    %5050 = vmatprep.subr.mxu0 0.0
    %5051 = vmatpush1.msra.mxu0 0.0
    %5052 = vmatprep.subr.mxu0 0.0
    %5053 = vmatpush1.msra.mxu0 0.0
    %5054 = vmatprep.subr.mxu0 0.0
    %5055 = vmatpush1.msra.mxu0 0.0
    %5056 = vmatprep.subr.mxu0 0.0
    %5057 = vmatpush1.msra.mxu0 0.0
    %5058 = vmatprep.subr.mxu0 0.0
    %5059 = vmatpush1.msra.mxu0 0.0
    %5060 = vmatprep.subr.mxu0 0.0
    %5061 = vmatpush1.msra.mxu0 0.0
    %5062 = vmatprep.subr.mxu0 0.0
    %5063 = vmatpush1.msra.mxu0 0.0
    %5064 = vmatprep.subr.mxu0 0.0
    %5065 = vmatpush1.msra.mxu0 0.0
    %5066 = vmatprep.subr.mxu0 0.0
    %5067 = vmatpush1.msra.mxu0 0.0
    %5068 = vmatprep.subr.mxu0 0.0
    %5069 = vmatpush1.msra.mxu0 0.0
    %5070 = vmatprep.subr.mxu0 0.0
    %5071 = vmatpush1.msra.mxu0 0.0
    %5072 = vmatprep.subr.mxu0 0.0
    %5073 = vmatpush1.msra.mxu0 0.0
    %5074 = vmatprep.subr.mxu0 0.0
    %5075 = vmatpush1.msra.mxu0 0.0
    %5076 = vmatprep.subr.mxu0 0.0
    %5077 = vmatpush1.msra.mxu0 0.0
    %5078 = vmatprep.subr.mxu0 0.0
    %5079 = vmatpush1.msra.mxu0 0.0
    %5080 = vmatprep.subr.mxu0 0.0
    %5081 = vmatpush1.msra.mxu0 0.0
    %5082 = vmatprep.subr.mxu0 0.0
    %5083 = vmatpush1.msra.mxu0 0.0
    %5084 = vmatprep.subr.mxu0 0.0
    %5085 = vmatpush1.msra.mxu0 0.0
    %5086 = vmatprep.subr.mxu0 0.0
    %5087 = vmatpush1.msra.mxu0 0.0
    %5088 = vmatprep.subr.mxu0 0.0
    %5089 = vmatpush1.msra.mxu0 0.0
    %5090 = vmatprep.subr.mxu0 0.0
    %5091 = vmatpush1.msra.mxu0 0.0
    %5092 = vmatprep.subr.mxu0 0.0
    %5093 = vmatpush1.msra.mxu0 0.0
    %5094 = vmatprep.subr.mxu0 0.0
    %5095 = vmatpush1.msra.mxu0 0.0
    %5096 = vmatprep.subr.mxu0 0.0
    %5097 = vmatpush1.msra.mxu0 0.0
    %5098 = vmatprep.subr.mxu0 0.0
    %5099 = vmatpush1.msra.mxu0 0.0
    %5100 = vmatprep.subr.mxu0 0.0
    %5101 = vmatpush1.msra.mxu0 0.0
    %5102 = vmatprep.subr.mxu0 0.0
    %5103 = vmatpush1.msra.mxu0 0.0
    %5104 = vmatprep.subr.mxu0 0.0
    %5105 = vmatpush1.msra.mxu0 0.0
    %5106 = vmatprep.subr.mxu0 0.0
    %5107 = vmatpush1.msra.mxu0 0.0
    %5108 = vmatprep.subr.mxu0 0.0
    %5109 = vmatpush1.msra.mxu0 0.0
    %5110 = vmatprep.subr.mxu0 0.0
    %5111 = vmatpush1.msra.mxu0 0.0
    %5112 = vmatprep.mubr.f32.mxu0 0.0
    %5113 = vmatmul.mubr.f32.gmra.mrb[0].mxu0 %v5046
    %v5114 = vpop.f32.mrb[0].mxu0
    %v5115 = vadd.f32 0.0, %v5114
    %v5116 = vpop.f32.mrb[0].mxu0
    %5117 = vdwg.mxu0
    %v5119 = vsel %vm1715, %v4606, 0
    %5121 = vmatprep.subr.mxu0 0.0
    %5122 = vmatpush1.msra.mxu0 %v3940
    %5123 = vmatprep.subr.mxu0 0.0
    %5124 = vmatpush1.msra.mxu0 0.0
    %5125 = vmatprep.subr.mxu0 0.0
    %5126 = vmatpush1.msra.mxu0 0.0
    %5127 = vmatprep.subr.mxu0 0.0
    %5128 = vmatpush1.msra.mxu0 0.0
    %5129 = vmatprep.subr.mxu0 0.0
    %5130 = vmatpush1.msra.mxu0 0.0
    %5131 = vmatprep.subr.mxu0 0.0
    %5132 = vmatpush1.msra.mxu0 0.0
    %5133 = vmatprep.subr.mxu0 0.0
    %5134 = vmatpush1.msra.mxu0 0.0
    %5135 = vmatprep.subr.mxu0 0.0
    %5136 = vmatpush1.msra.mxu0 0.0
    %5137 = vmatprep.subr.mxu0 0.0
    %5138 = vmatpush1.msra.mxu0 0.0
    %5139 = vmatprep.subr.mxu0 0.0
    %5140 = vmatpush1.msra.mxu0 0.0
    %5141 = vmatprep.subr.mxu0 0.0
    %5142 = vmatpush1.msra.mxu0 0.0
    %5143 = vmatprep.subr.mxu0 0.0
    %5144 = vmatpush1.msra.mxu0 0.0
    %5145 = vmatprep.subr.mxu0 0.0
    %5146 = vmatpush1.msra.mxu0 0.0
    %5147 = vmatprep.subr.mxu0 0.0
    %5148 = vmatpush1.msra.mxu0 0.0
    %5149 = vmatprep.subr.mxu0 0.0
    %5150 = vmatpush1.msra.mxu0 0.0
    %5151 = vmatprep.subr.mxu0 0.0
    %5152 = vmatpush1.msra.mxu0 0.0
    %5153 = vmatprep.subr.mxu0 0.0
    %5154 = vmatpush1.msra.mxu0 0.0
    %5155 = vmatprep.subr.mxu0 0.0
    %5156 = vmatpush1.msra.mxu0 0.0
    %5157 = vmatprep.subr.mxu0 0.0
    %5158 = vmatpush1.msra.mxu0 0.0
    %5159 = vmatprep.subr.mxu0 0.0
    %5160 = vmatpush1.msra.mxu0 0.0
    %5161 = vmatprep.subr.mxu0 0.0
    %5162 = vmatpush1.msra.mxu0 0.0
    %5163 = vmatprep.subr.mxu0 0.0
    %5164 = vmatpush1.msra.mxu0 0.0
    %5165 = vmatprep.subr.mxu0 0.0
    %5166 = vmatpush1.msra.mxu0 0.0
    %5167 = vmatprep.subr.mxu0 0.0
    %5168 = vmatpush1.msra.mxu0 0.0
    %5169 = vmatprep.subr.mxu0 0.0
    %5170 = vmatpush1.msra.mxu0 0.0
    %5171 = vmatprep.subr.mxu0 0.0
    %5172 = vmatpush1.msra.mxu0 0.0
    %5173 = vmatprep.subr.mxu0 0.0
    %5174 = vmatpush1.msra.mxu0 0.0
    %5175 = vmatprep.subr.mxu0 0.0
    %5176 = vmatpush1.msra.mxu0 0.0
    %5177 = vmatprep.subr.mxu0 0.0
    %5178 = vmatpush1.msra.mxu0 0.0
    %5179 = vmatprep.subr.mxu0 0.0
    %5180 = vmatpush1.msra.mxu0 0.0
    %5181 = vmatprep.subr.mxu0 0.0
    %5182 = vmatpush1.msra.mxu0 0.0
    %5183 = vmatprep.subr.mxu0 0.0
    %5184 = vmatpush1.msra.mxu0 0.0
    %5185 = vmatprep.mubr.f32.mxu0 0.0
    %5186 = vmatmul.mubr.f32.gmra.mrb[0].mxu0 %v5119
    %v5187 = vpop.f32.mrb[0].mxu0
    %v5188 = vadd.f32 0.0, %v5187
    %v5189 = vpop.f32.mrb[0].mxu0
    %5190 = vdwg.mxu0
    %s5191 = scalar_lea.vmem %s3, 128
    %v5192 = vld [vmem:[%s5191] sm:$0xff]
    %v5193 = vld [vmem:[%s5191 + $0x8] sm:$0xff]
    %v5194 = vld [vmem:[%s5191 + $0x10] sm:$0xff]
    %v5195 = vld [vmem:[%s5191 + $0x18] sm:$0xff]
    %v5196 = vld [vmem:[%s5191 + $0x20] sm:$0xff]
    %v5197 = vld [vmem:[%s5191 + $0x28] sm:$0xff]
    %v5198 = vld [vmem:[%s5191 + $0x30] sm:$0xff]
    %v5199 = vld [vmem:[%s5191 + $0x38] sm:$0xff]
    %v5200 = vld [vmem:[%s5191 + $0x40] sm:$0xff]
    %v5201 = vld [vmem:[%s5191 + $0x48] sm:$0xff]
    %v5202 = vld [vmem:[%s5191 + $0x50] sm:$0xff]
    %v5203 = vld [vmem:[%s5191 + $0x58] sm:$0xff]
    %v5204 = vld [vmem:[%s5191 + $0x60] sm:$0xff]
    %v5205 = vld [vmem:[%s5191 + $0x68] sm:$0xff]
    %v5206 = vld [vmem:[%s5191 + $0x70] sm:$0xff]
    %v5207 = vld [vmem:[%s5191 + $0x78] sm:$0xff]
    %v5209 = vsel %vm184, %v4677, 0
    %v5212 = vsel %vm184, %v4750, 0
    %5214 = vmatprep.subr.mxu0 0.0
    %5215 = vmatpush1.msra.mxu0 %v5192
    %5216 = vmatprep.subr.mxu0 0.0
    %5217 = vmatpush1.msra.mxu0 %v5193
    %5218 = vmatprep.subr.mxu0 0.0
    %5219 = vmatpush1.msra.mxu0 %v5194
    %5220 = vmatprep.subr.mxu0 0.0
    %5221 = vmatpush1.msra.mxu0 %v5195
    %5222 = vmatprep.subr.mxu0 0.0
    %5223 = vmatpush1.msra.mxu0 0.0
    %5224 = vmatprep.subr.mxu0 0.0
    %5225 = vmatpush1.msra.mxu0 0.0
    %5226 = vmatprep.subr.mxu0 0.0
    %5227 = vmatpush1.msra.mxu0 0.0
    %5228 = vmatprep.subr.mxu0 0.0
    %5229 = vmatpush1.msra.mxu0 0.0
    %5230 = vmatprep.subr.mxu0 0.0
    %5231 = vmatpush1.msra.mxu0 0.0
    %5232 = vmatprep.subr.mxu0 0.0
    %5233 = vmatpush1.msra.mxu0 0.0
    %5234 = vmatprep.subr.mxu0 0.0
    %5235 = vmatpush1.msra.mxu0 0.0
    %5236 = vmatprep.subr.mxu0 0.0
    %5237 = vmatpush1.msra.mxu0 0.0
    %5238 = vmatprep.subr.mxu0 0.0
    %5239 = vmatpush1.msra.mxu0 0.0
    %5240 = vmatprep.subr.mxu0 0.0
    %5241 = vmatpush1.msra.mxu0 0.0
    %5242 = vmatprep.subr.mxu0 0.0
    %5243 = vmatpush1.msra.mxu0 0.0
    %5244 = vmatprep.subr.mxu0 0.0
    %5245 = vmatpush1.msra.mxu0 0.0
    %5246 = vmatprep.subr.mxu0 0.0
    %5247 = vmatpush1.msra.mxu0 0.0
    %5248 = vmatprep.subr.mxu0 0.0
    %5249 = vmatpush1.msra.mxu0 0.0
    %5250 = vmatprep.subr.mxu0 0.0
    %5251 = vmatpush1.msra.mxu0 0.0
    %5252 = vmatprep.subr.mxu0 0.0
    %5253 = vmatpush1.msra.mxu0 0.0
    %5254 = vmatprep.subr.mxu0 0.0
    %5255 = vmatpush1.msra.mxu0 0.0
    %5256 = vmatprep.subr.mxu0 0.0
    %5257 = vmatpush1.msra.mxu0 0.0
    %5258 = vmatprep.subr.mxu0 0.0
    %5259 = vmatpush1.msra.mxu0 0.0
    %5260 = vmatprep.subr.mxu0 0.0
    %5261 = vmatpush1.msra.mxu0 0.0
    %5262 = vmatprep.subr.mxu0 0.0
    %5263 = vmatpush1.msra.mxu0 0.0
    %5264 = vmatprep.subr.mxu0 0.0
    %5265 = vmatpush1.msra.mxu0 0.0
    %5266 = vmatprep.subr.mxu0 0.0
    %5267 = vmatpush1.msra.mxu0 0.0
    %5268 = vmatprep.subr.mxu0 0.0
    %5269 = vmatpush1.msra.mxu0 0.0
    %5270 = vmatprep.subr.mxu0 0.0
    %5271 = vmatpush1.msra.mxu0 0.0
    %5272 = vmatprep.subr.mxu0 0.0
    %5273 = vmatpush1.msra.mxu0 0.0
    %5274 = vmatprep.subr.mxu0 0.0
    %5275 = vmatpush1.msra.mxu0 0.0
    %5276 = vmatprep.subr.mxu0 0.0
    %5277 = vmatpush1.msra.mxu0 0.0
    %5278 = vmatprep.mubr.f32.mxu0 0.0
    %5279 = vmatmul.mubr.f32.gmra.mrb[0].mxu0 %v5209
    %v5280 = vpop.f32.mrb[0].mxu0
    %v5281 = vadd.f32 0.0, %v5280
    %v5282 = vpop.f32.mrb[0].mxu0
    %5283 = vmatprep.mubr.f32.mxu0 0.0
    %5284 = vmatmul.mubr.f32.gmra.mrb[0].mxu0 %v5212
    %v5285 = vpop.f32.mrb[0].mxu0
    %v5286 = vadd.f32 0.0, %v5285
    %v5287 = vpop.f32.mrb[0].mxu0
    %5288 = vdwg.mxu0
    %v5290 = vsel %vm184, %v4823, 0
    %v5293 = vsel %vm184, %v4896, 0
    %5295 = vmatprep.subr.mxu0 0.0
    %5296 = vmatpush1.msra.mxu0 %v5196
    %5297 = vmatprep.subr.mxu0 0.0
    %5298 = vmatpush1.msra.mxu0 %v5197
    %5299 = vmatprep.subr.mxu0 0.0
    %5300 = vmatpush1.msra.mxu0 %v5198
    %5301 = vmatprep.subr.mxu0 0.0
    %5302 = vmatpush1.msra.mxu0 %v5199
    %5303 = vmatprep.subr.mxu0 0.0
    %5304 = vmatpush1.msra.mxu0 0.0
    %5305 = vmatprep.subr.mxu0 0.0
    %5306 = vmatpush1.msra.mxu0 0.0
    %5307 = vmatprep.subr.mxu0 0.0
    %5308 = vmatpush1.msra.mxu0 0.0
    %5309 = vmatprep.subr.mxu0 0.0
    %5310 = vmatpush1.msra.mxu0 0.0
    %5311 = vmatprep.subr.mxu0 0.0
    %5312 = vmatpush1.msra.mxu0 0.0
    %5313 = vmatprep.subr.mxu0 0.0
    %5314 = vmatpush1.msra.mxu0 0.0
    %5315 = vmatprep.subr.mxu0 0.0
    %5316 = vmatpush1.msra.mxu0 0.0
    %5317 = vmatprep.subr.mxu0 0.0
    %5318 = vmatpush1.msra.mxu0 0.0
    %5319 = vmatprep.subr.mxu0 0.0
    %5320 = vmatpush1.msra.mxu0 0.0
    %5321 = vmatprep.subr.mxu0 0.0
    %5322 = vmatpush1.msra.mxu0 0.0
    %5323 = vmatprep.subr.mxu0 0.0
    %5324 = vmatpush1.msra.mxu0 0.0
    %5325 = vmatprep.subr.mxu0 0.0
    %5326 = vmatpush1.msra.mxu0 0.0
    %5327 = vmatprep.subr.mxu0 0.0
    %5328 = vmatpush1.msra.mxu0 0.0
    %5329 = vmatprep.subr.mxu0 0.0
    %5330 = vmatpush1.msra.mxu0 0.0
    %5331 = vmatprep.subr.mxu0 0.0
    %5332 = vmatpush1.msra.mxu0 0.0
    %5333 = vmatprep.subr.mxu0 0.0
    %5334 = vmatpush1.msra.mxu0 0.0
    %5335 = vmatprep.subr.mxu0 0.0
    %5336 = vmatpush1.msra.mxu0 0.0
    %5337 = vmatprep.subr.mxu0 0.0
    %5338 = vmatpush1.msra.mxu0 0.0
    %5339 = vmatprep.subr.mxu0 0.0
    %5340 = vmatpush1.msra.mxu0 0.0
    %5341 = vmatprep.subr.mxu0 0.0
    %5342 = vmatpush1.msra.mxu0 0.0
    %5343 = vmatprep.subr.mxu0 0.0
    %5344 = vmatpush1.msra.mxu0 0.0
    %5345 = vmatprep.subr.mxu0 0.0
    %5346 = vmatpush1.msra.mxu0 0.0
    %5347 = vmatprep.subr.mxu0 0.0
    %5348 = vmatpush1.msra.mxu0 0.0
    %5349 = vmatprep.subr.mxu0 0.0
    %5350 = vmatpush1.msra.mxu0 0.0
    %5351 = vmatprep.subr.mxu0 0.0
    %5352 = vmatpush1.msra.mxu0 0.0
    %5353 = vmatprep.subr.mxu0 0.0
    %5354 = vmatpush1.msra.mxu0 0.0
    %5355 = vmatprep.subr.mxu0 0.0
    %5356 = vmatpush1.msra.mxu0 0.0
    %5357 = vmatprep.subr.mxu0 0.0
    %5358 = vmatpush1.msra.mxu0 0.0
    %5359 = vmatprep.mubr.f32.mxu0 0.0
    %5360 = vmatmul.mubr.f32.gmra.mrb[0].mxu0 %v5290
    %v5361 = vpop.f32.mrb[0].mxu0
    %v5362 = vadd.f32 0.0, %v5361
    %v5363 = vpop.f32.mrb[0].mxu0
    %5364 = vmatprep.mubr.f32.mxu0 0.0
    %5365 = vmatmul.mubr.f32.gmra.mrb[0].mxu0 %v5293
    %v5366 = vpop.f32.mrb[0].mxu0
    %v5367 = vadd.f32 0.0, %v5366
    %v5368 = vpop.f32.mrb[0].mxu0
    %5369 = vdwg.mxu0
    %v5371 = vsel %vm184, %v4969, 0
    %v5374 = vsel %vm184, %v5042, 0
    %5376 = vmatprep.subr.mxu0 0.0
    %5377 = vmatpush1.msra.mxu0 %v5200
    %5378 = vmatprep.subr.mxu0 0.0
    %5379 = vmatpush1.msra.mxu0 %v5201
    %5380 = vmatprep.subr.mxu0 0.0
    %5381 = vmatpush1.msra.mxu0 %v5202
    %5382 = vmatprep.subr.mxu0 0.0
    %5383 = vmatpush1.msra.mxu0 %v5203
    %5384 = vmatprep.subr.mxu0 0.0
    %5385 = vmatpush1.msra.mxu0 0.0
    %5386 = vmatprep.subr.mxu0 0.0
    %5387 = vmatpush1.msra.mxu0 0.0
    %5388 = vmatprep.subr.mxu0 0.0
    %5389 = vmatpush1.msra.mxu0 0.0
    %5390 = vmatprep.subr.mxu0 0.0
    %5391 = vmatpush1.msra.mxu0 0.0
    %5392 = vmatprep.subr.mxu0 0.0
    %5393 = vmatpush1.msra.mxu0 0.0
    %5394 = vmatprep.subr.mxu0 0.0
    %5395 = vmatpush1.msra.mxu0 0.0
    %5396 = vmatprep.subr.mxu0 0.0
    %5397 = vmatpush1.msra.mxu0 0.0
    %5398 = vmatprep.subr.mxu0 0.0
    %5399 = vmatpush1.msra.mxu0 0.0
    %5400 = vmatprep.subr.mxu0 0.0
    %5401 = vmatpush1.msra.mxu0 0.0
    %5402 = vmatprep.subr.mxu0 0.0
    %5403 = vmatpush1.msra.mxu0 0.0
    %5404 = vmatprep.subr.mxu0 0.0
    %5405 = vmatpush1.msra.mxu0 0.0
    %5406 = vmatprep.subr.mxu0 0.0
    %5407 = vmatpush1.msra.mxu0 0.0
    %5408 = vmatprep.subr.mxu0 0.0
    %5409 = vmatpush1.msra.mxu0 0.0
    %5410 = vmatprep.subr.mxu0 0.0
    %5411 = vmatpush1.msra.mxu0 0.0
    %5412 = vmatprep.subr.mxu0 0.0
    %5413 = vmatpush1.msra.mxu0 0.0
    %5414 = vmatprep.subr.mxu0 0.0
    %5415 = vmatpush1.msra.mxu0 0.0
    %5416 = vmatprep.subr.mxu0 0.0
    %5417 = vmatpush1.msra.mxu0 0.0
    %5418 = vmatprep.subr.mxu0 0.0
    %5419 = vmatpush1.msra.mxu0 0.0
    %5420 = vmatprep.subr.mxu0 0.0
    %5421 = vmatpush1.msra.mxu0 0.0
    %5422 = vmatprep.subr.mxu0 0.0
    %5423 = vmatpush1.msra.mxu0 0.0
    %5424 = vmatprep.subr.mxu0 0.0
    %5425 = vmatpush1.msra.mxu0 0.0
    %5426 = vmatprep.subr.mxu0 0.0
    %5427 = vmatpush1.msra.mxu0 0.0
    %5428 = vmatprep.subr.mxu0 0.0
    %5429 = vmatpush1.msra.mxu0 0.0
    %5430 = vmatprep.subr.mxu0 0.0
    %5431 = vmatpush1.msra.mxu0 0.0
    %5432 = vmatprep.subr.mxu0 0.0
    %5433 = vmatpush1.msra.mxu0 0.0
    %5434 = vmatprep.subr.mxu0 0.0
    %5435 = vmatpush1.msra.mxu0 0.0
    %5436 = vmatprep.subr.mxu0 0.0
    %5437 = vmatpush1.msra.mxu0 0.0
    %5438 = vmatprep.subr.mxu0 0.0
    %5439 = vmatpush1.msra.mxu0 0.0
    %5440 = vmatprep.mubr.f32.mxu0 0.0
    %5441 = vmatmul.mubr.f32.gmra.mrb[0].mxu0 %v5371
    %v5442 = vpop.f32.mrb[0].mxu0
    %v5443 = vadd.f32 0.0, %v5442
    %v5444 = vpop.f32.mrb[0].mxu0
    %5445 = vmatprep.mubr.f32.mxu0 0.0
    %5446 = vmatmul.mubr.f32.gmra.mrb[0].mxu0 %v5374
    %v5447 = vpop.f32.mrb[0].mxu0
    %v5448 = vadd.f32 0.0, %v5447
    %v5449 = vpop.f32.mrb[0].mxu0
    %5450 = vdwg.mxu0
    %v5452 = vsel %vm184, %v5115, 0
    %v5455 = vsel %vm184, %v5188, 0
    %5457 = vmatprep.subr.mxu0 0.0
    %5458 = vmatpush1.msra.mxu0 %v5204
    %5459 = vmatprep.subr.mxu0 0.0
    %5460 = vmatpush1.msra.mxu0 %v5205
    %5461 = vmatprep.subr.mxu0 0.0
    %5462 = vmatpush1.msra.mxu0 %v5206
    %5463 = vmatprep.subr.mxu0 0.0
    %5464 = vmatpush1.msra.mxu0 %v5207
    %5465 = vmatprep.subr.mxu0 0.0
    %5466 = vmatpush1.msra.mxu0 0.0
    %5467 = vmatprep.subr.mxu0 0.0
    %5468 = vmatpush1.msra.mxu0 0.0
    %5469 = vmatprep.subr.mxu0 0.0
    %5470 = vmatpush1.msra.mxu0 0.0
    %5471 = vmatprep.subr.mxu0 0.0
    %5472 = vmatpush1.msra.mxu0 0.0
    %5473 = vmatprep.subr.mxu0 0.0
    %5474 = vmatpush1.msra.mxu0 0.0
    %5475 = vmatprep.subr.mxu0 0.0
    %5476 = vmatpush1.msra.mxu0 0.0
    %5477 = vmatprep.subr.mxu0 0.0
    %5478 = vmatpush1.msra.mxu0 0.0
    %5479 = vmatprep.subr.mxu0 0.0
    %5480 = vmatpush1.msra.mxu0 0.0
    %5481 = vmatprep.subr.mxu0 0.0
    %5482 = vmatpush1.msra.mxu0 0.0
    %5483 = vmatprep.subr.mxu0 0.0
    %5484 = vmatpush1.msra.mxu0 0.0
    %5485 = vmatprep.subr.mxu0 0.0
    %5486 = vmatpush1.msra.mxu0 0.0
    %5487 = vmatprep.subr.mxu0 0.0
    %5488 = vmatpush1.msra.mxu0 0.0
    %5489 = vmatprep.subr.mxu0 0.0
    %5490 = vmatpush1.msra.mxu0 0.0
    %5491 = vmatprep.subr.mxu0 0.0
    %5492 = vmatpush1.msra.mxu0 0.0
    %5493 = vmatprep.subr.mxu0 0.0
    %5494 = vmatpush1.msra.mxu0 0.0
    %5495 = vmatprep.subr.mxu0 0.0
    %5496 = vmatpush1.msra.mxu0 0.0
    %5497 = vmatprep.subr.mxu0 0.0
    %5498 = vmatpush1.msra.mxu0 0.0
    %5499 = vmatprep.subr.mxu0 0.0
    %5500 = vmatpush1.msra.mxu0 0.0
    %5501 = vmatprep.subr.mxu0 0.0
    %5502 = vmatpush1.msra.mxu0 0.0
    %5503 = vmatprep.subr.mxu0 0.0
    %5504 = vmatpush1.msra.mxu0 0.0
    %5505 = vmatprep.subr.mxu0 0.0
    %5506 = vmatpush1.msra.mxu0 0.0
    %5507 = vmatprep.subr.mxu0 0.0
    %5508 = vmatpush1.msra.mxu0 0.0
    %5509 = vmatprep.subr.mxu0 0.0
    %5510 = vmatpush1.msra.mxu0 0.0
    %5511 = vmatprep.subr.mxu0 0.0
    %5512 = vmatpush1.msra.mxu0 0.0
    %5513 = vmatprep.subr.mxu0 0.0
    %5514 = vmatpush1.msra.mxu0 0.0
    %5515 = vmatprep.subr.mxu0 0.0
    %5516 = vmatpush1.msra.mxu0 0.0
    %5517 = vmatprep.subr.mxu0 0.0
    %5518 = vmatpush1.msra.mxu0 0.0
    %5519 = vmatprep.subr.mxu0 0.0
    %5520 = vmatpush1.msra.mxu0 0.0
    %5521 = vmatprep.mubr.f32.mxu0 0.0
    %5522 = vmatmul.mubr.f32.gmra.mrb[0].mxu0 %v5452
    %v5523 = vpop.f32.mrb[0].mxu0
    %v5524 = vadd.f32 0.0, %v5523
    %v5525 = vpop.f32.mrb[0].mxu0
    %5526 = vmatprep.mubr.f32.mxu0 0.0
    %5527 = vmatmul.mubr.f32.gmra.mrb[0].mxu0 %v5455
    %v5528 = vpop.f32.mrb[0].mxu0
    %v5529 = vadd.f32 0.0, %v5528
    %v5530 = vpop.f32.mrb[0].mxu0
    %5531 = vdwg.mxu0
    %v5532 = vsel %vm184, %v5281, 0.0
    %v5533 = vsel %vm184, %v5362, 0.0
    %v5534 = vadd.f32 %v5532, %v5533
    %v5535 = vsel %vm184, %v5443, 0.0
    %v5536 = vadd.f32 %v5534, %v5535
    %v5537 = vsel %vm184, %v5524, 0.0
    %v5538 = vadd.f32 %v5536, %v5537
    %v5539 = vsel %vm184, %v5286, 0.0
    %v5540 = vsel %vm184, %v5367, 0.0
    %v5541 = vadd.f32 %v5539, %v5540
    %v5542 = vsel %vm184, %v5448, 0.0
    %v5543 = vadd.f32 %v5541, %v5542
    %v5544 = vsel %vm184, %v5529, 0.0
    %v5545 = vadd.f32 %v5543, %v5544
    %s5546 = scalar_lea.vmem %s4, 1
    %v5547 = vld [vmem:[%s5546] sm:$0x1]
    %v5549 = vlaneseq
    %v5550 = vshrl.u32 %v5549, 7
    %v5551 = vsub.s32 0, %v5550
    %v5552 = vrot.slane %v5547, %v5551
    %v5554 = vadd.f32 %v5538, %v5552
    %v5555 = vadd.f32 %v5545, %v5552
    %v5556 = vadd.f32 %v2986, %v5554
    %v5557 = vadd.f32 %v2987, %v5555
    %s5558 = scalar_lea.vmem [#allocation8], 1
    %v5559 = vld [vmem:[%s5558] sm:$0x1]
    %s5560 = scalar_lea.vmem [#allocation10], 1
    %v5561 = vld [vmem:[%s5560] sm:$0x1]
    %v5562 = vsel %vm184, %v5556, 0.0
    %5563 = vadd.xlane.f32.xlu0 %v5562
    %v5564 = vpop.xlane.xlu0 %5563
    %v5565 = vsel %vm184, %v5557, 0.0
    %5566 = vadd.xlane.f32.xlu0 %v5565
    %v5567 = vpop.xlane.xlu0 %5566
    %v5568 = vmul.f32 %v5564, %v2713
    %v5569 = vmul.f32 %v5567, %v2713
    %v5570 = vsub.f32 %v5556, %v5568
    %v5571 = vsub.f32 %v5557, %v5569
    %v5572 = vmul.f32 %v5570, %v5570
    %v5573 = vmul.f32 %v5571, %v5571
    %v5574 = vsel %vm184, %v5572, 0.0
    %5575 = vadd.xlane.f32.xlu0 %v5574
    %v5576 = vpop.xlane.xlu0 %5575
    %v5577 = vsel %vm184, %v5573, 0.0
    %5578 = vadd.xlane.f32.xlu0 %v5577
    %v5579 = vpop.xlane.xlu0 %5578
    %v5580 = vmul.f32 %v5576, %v2713
    %v5581 = vmul.f32 %v5579, %v2713
    %v5582 = vadd.f32 %v5580, 1e-05
    %v5583 = vadd.f32 %v5581, 1e-05
    %v5584 = vrsqrt.pop %v5582
    %v5585 = vrsqrt.pop %v5583
    %v5586 = vmul.f32 %v5570, %v5584
    %v5587 = vmul.f32 %v5571, %v5585
    %v5589 = vlaneseq
    %v5590 = vshrl.u32 %v5589, 7
    %v5591 = vsub.s32 0, %v5590
    %v5592 = vrot.slane %v5559, %v5591
    %v5594 = vmul.f32 %v5586, %v5592
    %v5595 = vmul.f32 %v5587, %v5592
    %v5597 = vlaneseq
    %v5598 = vshrl.u32 %v5597, 7
    %v5599 = vsub.s32 0, %v5598
    %v5600 = vrot.slane %v5561, %v5599
    %v5602 = vadd.f32 %v5594, %v5600
    %v5603 = vadd.f32 %v5595, %v5600
    %s5604 = scalar_lea.vmem %s7, 32
    %v5605 = vld [vmem:[%s5604] sm:$0xff]
    %v5606 = vld [vmem:[%s5604 + $0x8] sm:$0xff]
    %v5607 = vld [vmem:[%s5604 + $0x10] sm:$0xff]
    %v5608 = vld [vmem:[%s5604 + $0x18] sm:$0xff]
    %s5609 = scalar_lea.vmem [#allocation11], 1
    %v5610 = vld [vmem:[%s5609] sm:$0x1]
    %v5612 = vlaneseq
    %v5613 = vshrl.u32 %v5612, 7
    %v5614 = vsub.s32 0, %v5613
    %v5615 = vrot.slane %v5610, %v5614
    %v5618 = vsel %vm184, %v5602, 0
    %v5621 = vsel %vm184, %v5603, 0
    %5623 = vmatprep.subr.mxu0 0.0
    %5624 = vmatpush1.msra.mxu0 %v5605
    %5625 = vmatprep.subr.mxu0 0.0
    %5626 = vmatpush1.msra.mxu0 %v5606
    %5627 = vmatprep.subr.mxu0 0.0
    %5628 = vmatpush1.msra.mxu0 %v5607
    %5629 = vmatprep.subr.mxu0 0.0
    %5630 = vmatpush1.msra.mxu0 %v5608
    %5631 = vmatprep.subr.mxu0 0.0
    %5632 = vmatpush1.msra.mxu0 0.0
    %5633 = vmatprep.subr.mxu0 0.0
    %5634 = vmatpush1.msra.mxu0 0.0
    %5635 = vmatprep.subr.mxu0 0.0
    %5636 = vmatpush1.msra.mxu0 0.0
    %5637 = vmatprep.subr.mxu0 0.0
    %5638 = vmatpush1.msra.mxu0 0.0
    %5639 = vmatprep.subr.mxu0 0.0
    %5640 = vmatpush1.msra.mxu0 0.0
    %5641 = vmatprep.subr.mxu0 0.0
    %5642 = vmatpush1.msra.mxu0 0.0
    %5643 = vmatprep.subr.mxu0 0.0
    %5644 = vmatpush1.msra.mxu0 0.0
    %5645 = vmatprep.subr.mxu0 0.0
    %5646 = vmatpush1.msra.mxu0 0.0
    %5647 = vmatprep.subr.mxu0 0.0
    %5648 = vmatpush1.msra.mxu0 0.0
    %5649 = vmatprep.subr.mxu0 0.0
    %5650 = vmatpush1.msra.mxu0 0.0
    %5651 = vmatprep.subr.mxu0 0.0
    %5652 = vmatpush1.msra.mxu0 0.0
    %5653 = vmatprep.subr.mxu0 0.0
    %5654 = vmatpush1.msra.mxu0 0.0
    %5655 = vmatprep.subr.mxu0 0.0
    %5656 = vmatpush1.msra.mxu0 0.0
    %5657 = vmatprep.subr.mxu0 0.0
    %5658 = vmatpush1.msra.mxu0 0.0
    %5659 = vmatprep.subr.mxu0 0.0
    %5660 = vmatpush1.msra.mxu0 0.0
    %5661 = vmatprep.subr.mxu0 0.0
    %5662 = vmatpush1.msra.mxu0 0.0
    %5663 = vmatprep.subr.mxu0 0.0
    %5664 = vmatpush1.msra.mxu0 0.0
    %5665 = vmatprep.subr.mxu0 0.0
    %5666 = vmatpush1.msra.mxu0 0.0
    %5667 = vmatprep.subr.mxu0 0.0
    %5668 = vmatpush1.msra.mxu0 0.0
    %5669 = vmatprep.subr.mxu0 0.0
    %5670 = vmatpush1.msra.mxu0 0.0
    %5671 = vmatprep.subr.mxu0 0.0
    %5672 = vmatpush1.msra.mxu0 0.0
    %5673 = vmatprep.subr.mxu0 0.0
    %5674 = vmatpush1.msra.mxu0 0.0
    %5675 = vmatprep.subr.mxu0 0.0
    %5676 = vmatpush1.msra.mxu0 0.0
    %5677 = vmatprep.subr.mxu0 0.0
    %5678 = vmatpush1.msra.mxu0 0.0
    %5679 = vmatprep.subr.mxu0 0.0
    %5680 = vmatpush1.msra.mxu0 0.0
    %5681 = vmatprep.subr.mxu0 0.0
    %5682 = vmatpush1.msra.mxu0 0.0
    %5683 = vmatprep.subr.mxu0 0.0
    %5684 = vmatpush1.msra.mxu0 0.0
    %5685 = vmatprep.subr.mxu0 0.0
    %5686 = vmatpush1.msra.mxu0 0.0
    %5687 = vmatprep.mubr.f32.mxu0 0.0
    %5688 = vmatmul.mubr.f32.gmra.mrb[0].mxu0 %v5618
    %v5689 = vpop.f32.mrb[0].mxu0
    %v5690 = vadd.f32 %v5615, %v5689
    %v5691 = vpop.f32.mrb[0].mxu0
    %5692 = vmatprep.mubr.f32.mxu0 0.0
    %5693 = vmatmul.mubr.f32.gmra.mrb[0].mxu0 %v5621
    %v5694 = vpop.f32.mrb[0].mxu0
    %v5695 = vadd.f32 %v5615, %v5694
    %v5696 = vpop.f32.mrb[0].mxu0
    %5697 = vdwg.mxu0
    %v5698 = vmax.f32 %v5690, 0.0
    %v5699 = vmax.f32 %v5695, 0.0
    %s5700 = scalar_lea.vmem %s9, 128
    %v5701 = vld [vmem:[%s5700] sm:$0xff]
    %v5702 = vld [vmem:[%s5700 + $0x8] sm:$0xff]
    %v5703 = vld [vmem:[%s5700 + $0x10] sm:$0xff]
    %v5704 = vld [vmem:[%s5700 + $0x18] sm:$0xff]
    %v5705 = vld [vmem:[%s5700 + $0x20] sm:$0xff]
    %v5706 = vld [vmem:[%s5700 + $0x28] sm:$0xff]
    %v5707 = vld [vmem:[%s5700 + $0x30] sm:$0xff]
    %v5708 = vld [vmem:[%s5700 + $0x38] sm:$0xff]
    %v5709 = vld [vmem:[%s5700 + $0x40] sm:$0xff]
    %v5710 = vld [vmem:[%s5700 + $0x48] sm:$0xff]
    %v5711 = vld [vmem:[%s5700 + $0x50] sm:$0xff]
    %v5712 = vld [vmem:[%s5700 + $0x58] sm:$0xff]
    %v5713 = vld [vmem:[%s5700 + $0x60] sm:$0xff]
    %v5714 = vld [vmem:[%s5700 + $0x68] sm:$0xff]
    %v5715 = vld [vmem:[%s5700 + $0x70] sm:$0xff]
    %v5716 = vld [vmem:[%s5700 + $0x78] sm:$0xff]
    %s5717 = scalar_lea.vmem %s10, 1
    %v5718 = vld [vmem:[%s5717] sm:$0x1]
    %v5720 = vlaneseq
    %v5721 = vshrl.u32 %v5720, 7
    %v5722 = vsub.s32 0, %v5721
    %v5723 = vrot.slane %v5718, %v5722
    %5725 = vmatprep.subr.mxu0 0.0
    %5726 = vmatpush1.msra.mxu0 %v5701
    %5727 = vmatprep.subr.mxu0 0.0
    %5728 = vmatpush1.msra.mxu0 %v5702
    %5729 = vmatprep.subr.mxu0 0.0
    %5730 = vmatpush1.msra.mxu0 %v5703
    %5731 = vmatprep.subr.mxu0 0.0
    %5732 = vmatpush1.msra.mxu0 %v5704
    %5733 = vmatprep.subr.mxu0 0.0
    %5734 = vmatpush1.msra.mxu0 %v5705
    %5735 = vmatprep.subr.mxu0 0.0
    %5736 = vmatpush1.msra.mxu0 %v5706
    %5737 = vmatprep.subr.mxu0 0.0
    %5738 = vmatpush1.msra.mxu0 %v5707
    %5739 = vmatprep.subr.mxu0 0.0
    %5740 = vmatpush1.msra.mxu0 %v5708
    %5741 = vmatprep.subr.mxu0 0.0
    %5742 = vmatpush1.msra.mxu0 %v5709
    %5743 = vmatprep.subr.mxu0 0.0
    %5744 = vmatpush1.msra.mxu0 %v5710
    %5745 = vmatprep.subr.mxu0 0.0
    %5746 = vmatpush1.msra.mxu0 %v5711
    %5747 = vmatprep.subr.mxu0 0.0
    %5748 = vmatpush1.msra.mxu0 %v5712
    %5749 = vmatprep.subr.mxu0 0.0
    %5750 = vmatpush1.msra.mxu0 %v5713
    %5751 = vmatprep.subr.mxu0 0.0
    %5752 = vmatpush1.msra.mxu0 %v5714
    %5753 = vmatprep.subr.mxu0 0.0
    %5754 = vmatpush1.msra.mxu0 %v5715
    %5755 = vmatprep.subr.mxu0 0.0
    %5756 = vmatpush1.msra.mxu0 %v5716
    %5757 = vmatprep.subr.mxu0 0.0
    %5758 = vmatpush1.msra.mxu0 0.0
    %5759 = vmatprep.subr.mxu0 0.0
    %5760 = vmatpush1.msra.mxu0 0.0
    %5761 = vmatprep.subr.mxu0 0.0
    %5762 = vmatpush1.msra.mxu0 0.0
    %5763 = vmatprep.subr.mxu0 0.0
    %5764 = vmatpush1.msra.mxu0 0.0
    %5765 = vmatprep.subr.mxu0 0.0
    %5766 = vmatpush1.msra.mxu0 0.0
    %5767 = vmatprep.subr.mxu0 0.0
    %5768 = vmatpush1.msra.mxu0 0.0
    %5769 = vmatprep.subr.mxu0 0.0
    %5770 = vmatpush1.msra.mxu0 0.0
    %5771 = vmatprep.subr.mxu0 0.0
    %5772 = vmatpush1.msra.mxu0 0.0
    %5773 = vmatprep.subr.mxu0 0.0
    %5774 = vmatpush1.msra.mxu0 0.0
    %5775 = vmatprep.subr.mxu0 0.0
    %5776 = vmatpush1.msra.mxu0 0.0
    %5777 = vmatprep.subr.mxu0 0.0
    %5778 = vmatpush1.msra.mxu0 0.0
    %5779 = vmatprep.subr.mxu0 0.0
    %5780 = vmatpush1.msra.mxu0 0.0
    %5781 = vmatprep.subr.mxu0 0.0
    %5782 = vmatpush1.msra.mxu0 0.0
    %5783 = vmatprep.subr.mxu0 0.0
    %5784 = vmatpush1.msra.mxu0 0.0
    %5785 = vmatprep.subr.mxu0 0.0
    %5786 = vmatpush1.msra.mxu0 0.0
    %5787 = vmatprep.subr.mxu0 0.0
    %5788 = vmatpush1.msra.mxu0 0.0
    %5789 = vmatprep.mubr.f32.mxu0 0.0
    %5790 = vmatmul.mubr.f32.gmra.mrb[0].mxu0 %v5698
    %v5791 = vpop.f32.mrb[0].mxu0
    %v5792 = vadd.f32 %v5723, %v5791
    %v5793 = vpop.f32.mrb[0].mxu0
    %5794 = vmatprep.mubr.f32.mxu0 0.0
    %5795 = vmatmul.mubr.f32.gmra.mrb[0].mxu0 %v5699
    %v5796 = vpop.f32.mrb[0].mxu0
    %v5797 = vadd.f32 %v5723, %v5796
    %v5798 = vpop.f32.mrb[0].mxu0
    %5799 = vdwg.mxu0
    %v5800 = vadd.f32 %v5602, %v5792
    %v5801 = vadd.f32 %v5603, %v5797
    %s5802 = scalar_lea.vmem %s11, 1
    %v5803 = vld [vmem:[%s5802] sm:$0x1]
    %s5804 = scalar_lea.vmem %s12, 1
    %v5805 = vld [vmem:[%s5804] sm:$0x1]
    %v5806 = vsel %vm184, %v5800, 0.0
    %5807 = vadd.xlane.f32.xlu0 %v5806
    %v5808 = vpop.xlane.xlu0 %5807
    %v5809 = vsel %vm184, %v5801, 0.0
    %5810 = vadd.xlane.f32.xlu0 %v5809
    %v5811 = vpop.xlane.xlu0 %5810
    %v5812 = vmul.f32 %v5808, %v2713
    %v5813 = vmul.f32 %v5811, %v2713
    %v5814 = vsub.f32 %v5800, %v5812
    %v5815 = vsub.f32 %v5801, %v5813
    %v5816 = vmul.f32 %v5814, %v5814
    %v5817 = vmul.f32 %v5815, %v5815
    %v5818 = vsel %vm184, %v5816, 0.0
    %5819 = vadd.xlane.f32.xlu0 %v5818
    %v5820 = vpop.xlane.xlu0 %5819
    %v5821 = vsel %vm184, %v5817, 0.0
    %5822 = vadd.xlane.f32.xlu0 %v5821
    %v5823 = vpop.xlane.xlu0 %5822
    %v5824 = vmul.f32 %v5820, %v2713
    %v5825 = vmul.f32 %v5823, %v2713
    %v5826 = vadd.f32 %v5824, 1e-05
    %v5827 = vadd.f32 %v5825, 1e-05
    %v5828 = vrsqrt.pop %v5826
    %v5829 = vrsqrt.pop %v5827
    %v5830 = vmul.f32 %v5814, %v5828
    %v5831 = vmul.f32 %v5815, %v5829
    %v5833 = vlaneseq
    %v5834 = vshrl.u32 %v5833, 7
    %v5835 = vsub.s32 0, %v5834
    %v5836 = vrot.slane %v5803, %v5835
    %v5838 = vmul.f32 %v5830, %v5836
    %v5839 = vmul.f32 %v5831, %v5836
    %v5841 = vlaneseq
    %v5842 = vshrl.u32 %v5841, 7
    %v5843 = vsub.s32 0, %v5842
    %v5844 = vrot.slane %v5805, %v5843
    %v5846 = vadd.f32 %v5838, %v5844
    %v5847 = vadd.f32 %v5839, %v5844
    %v5848 = vsel %vm184, %v5846, 0.0
    %v5849 = vrot.slane %v5848, 4
    %v5850 = vadd.f32 %v5848, %v5849
    %v5851 = vrot.slane %v5850, 2
    %v5852 = vadd.f32 %v5850, %v5851
    %v5853 = vrot.slane %v5852, 1
    %v5854 = vadd.f32 %v5852, %v5853
    %v5855 = vsel %vm184, %v5847, 0.0
    %v5856 = vrot.slane %v5855, 4
    %v5857 = vadd.f32 %v5855, %v5856
    %v5858 = vrot.slane %v5857, 2
    %v5859 = vadd.f32 %v5857, %v5858
    %v5860 = vrot.slane %v5859, 1
    %v5861 = vadd.f32 %v5859, %v5860
    %v5862 = vrcp.pop 8.0
    %v5863 = vmul.f32 %v5854, %v5862
    %v5864 = vmul.f32 %v5861, %v5862
    %v5865 = vld [vmem:[%s13] sm:$0xff]
    %v5866 = vld [vmem:[%s13 + $0x8] sm:$0xff]
    %v5867 = vld [vmem:[%s13 + $0x10] sm:$0xff]
    %v5868 = vld [vmem:[%s13 + $0x18] sm:$0xff]
    %v5869 = vld [vmem:[%s14] sm:$0x1]
    %v5871 = vlaneseq
    %v5872 = vshrl.u32 %v5871, 7
    %v5873 = vsub.s32 0, %v5872
    %v5874 = vrot.slane %v5869, %v5873
    %vm5878 = vcmask 1041409
    %v5879 = vsel %vm5878, %v5864, %v5863
    %v5880 = vsel %vm184, %v5879, 0
    %5882 = vmatprep.subr.mxu0 0.0
    %5883 = vmatpush1.msra.mxu0 %v5865
    %5884 = vmatprep.subr.mxu0 0.0
    %5885 = vmatpush1.msra.mxu0 %v5866
    %5886 = vmatprep.subr.mxu0 0.0
    %5887 = vmatpush1.msra.mxu0 %v5867
    %5888 = vmatprep.subr.mxu0 0.0
    %5889 = vmatpush1.msra.mxu0 %v5868
    %5890 = vmatprep.subr.mxu0 0.0
    %5891 = vmatpush1.msra.mxu0 0.0
    %5892 = vmatprep.subr.mxu0 0.0
    %5893 = vmatpush1.msra.mxu0 0.0
    %5894 = vmatprep.subr.mxu0 0.0
    %5895 = vmatpush1.msra.mxu0 0.0
    %5896 = vmatprep.subr.mxu0 0.0
    %5897 = vmatpush1.msra.mxu0 0.0
    %5898 = vmatprep.subr.mxu0 0.0
    %5899 = vmatpush1.msra.mxu0 0.0
    %5900 = vmatprep.subr.mxu0 0.0
    %5901 = vmatpush1.msra.mxu0 0.0
    %5902 = vmatprep.subr.mxu0 0.0
    %5903 = vmatpush1.msra.mxu0 0.0
    %5904 = vmatprep.subr.mxu0 0.0
    %5905 = vmatpush1.msra.mxu0 0.0
    %5906 = vmatprep.subr.mxu0 0.0
    %5907 = vmatpush1.msra.mxu0 0.0
    %5908 = vmatprep.subr.mxu0 0.0
    %5909 = vmatpush1.msra.mxu0 0.0
    %5910 = vmatprep.subr.mxu0 0.0
    %5911 = vmatpush1.msra.mxu0 0.0
    %5912 = vmatprep.subr.mxu0 0.0
    %5913 = vmatpush1.msra.mxu0 0.0
    %5914 = vmatprep.subr.mxu0 0.0
    %5915 = vmatpush1.msra.mxu0 0.0
    %5916 = vmatprep.subr.mxu0 0.0
    %5917 = vmatpush1.msra.mxu0 0.0
    %5918 = vmatprep.subr.mxu0 0.0
    %5919 = vmatpush1.msra.mxu0 0.0
    %5920 = vmatprep.subr.mxu0 0.0
    %5921 = vmatpush1.msra.mxu0 0.0
    %5922 = vmatprep.subr.mxu0 0.0
    %5923 = vmatpush1.msra.mxu0 0.0
    %5924 = vmatprep.subr.mxu0 0.0
    %5925 = vmatpush1.msra.mxu0 0.0
    %5926 = vmatprep.subr.mxu0 0.0
    %5927 = vmatpush1.msra.mxu0 0.0
    %5928 = vmatprep.subr.mxu0 0.0
    %5929 = vmatpush1.msra.mxu0 0.0
    %5930 = vmatprep.subr.mxu0 0.0
    %5931 = vmatpush1.msra.mxu0 0.0
    %5932 = vmatprep.subr.mxu0 0.0
    %5933 = vmatpush1.msra.mxu0 0.0
    %5934 = vmatprep.subr.mxu0 0.0
    %5935 = vmatpush1.msra.mxu0 0.0
    %5936 = vmatprep.subr.mxu0 0.0
    %5937 = vmatpush1.msra.mxu0 0.0
    %5938 = vmatprep.subr.mxu0 0.0
    %5939 = vmatpush1.msra.mxu0 0.0
    %5940 = vmatprep.subr.mxu0 0.0
    %5941 = vmatpush1.msra.mxu0 0.0
    %5942 = vmatprep.subr.mxu0 0.0
    %5943 = vmatpush1.msra.mxu0 0.0
    %5944 = vmatprep.subr.mxu0 0.0
    %5945 = vmatpush1.msra.mxu0 0.0
    %5946 = vmatprep.mubr.f32.mxu0 0.0
    %5947 = vmatmul.mubr.f32.gmra.mrb[0].mxu0 %v5880
    %v5948 = vpop.f32.mrb[0].mxu0
    %v5949 = vadd.f32 %v5874, %v5948
    %v5950 = vpop.f32.mrb[0].mxu0
    %5951 = vdwg.mxu0
    %5952 = vst [vmem:[#allocation13] sm:$0x3] %v5949
    // Predicated region
    $region86: #{tpu_custom_call.1} parent=1 // pred_check
      _
    $region87: #{tpu_custom_call.1} parent=1 // pred_check_branch
      %5954 = sbr.rel (0) target = $region89
    $region88: #{tpu_custom_call.1} parent=1 // pred_region
      %s5956 = ssub.s32 32, 32
      %5957 = vsyncadd [#allocation4], %s5956
      %s5959 = sshll.u32 [#allocation13], 4
      %s5960 = int_to_ptr.vmem [resolvable:$true] %s5959
      %5962 = dma.vmem_to_hbm [thread:$0]  %s5960, 32, %s15, [#allocation4]
    $region89: #{tpu_custom_call.1} parent=1 // pred_fallthru
      _
    // Predicated region
    $region90: #{tpu_custom_call.1} parent=1 // pred_check
      _
    $region91: #{tpu_custom_call.1} parent=1 // pred_check_branch
      %5964 = sbr.rel (0) target = $region93
    $region92: #{tpu_custom_call.1} parent=1 // pred_region
      %5965 = dma.done [#allocation4], 32
    $region93: #{tpu_custom_call.1} parent=1 // pred_fallthru
      _
    %5966 = vsyncpa [#allocation3], 1
    %5967 = vsyncpa [#allocation6], 1
    %5968 = vsyncpa [#allocation9], 1
    %5969 = vsyncpa [#allocation12], 1
    %5970 = vsyncpa [#allocation4], 1

</llo_original>
